<compile_context>
chip_gen: v7x
topology: tpu7x:2x2x1
jax: 0.10.0
libtpu: 0.0.40
codegen_flags: <defaults>
</compile_context>

<pallas_src>
import functools

import jax
import jax.numpy as jnp
from jax.experimental import pallas as pl
from jax.experimental.pallas import tpu as pltpu


def _choose_block_windows(B_, N, C, nH, x_itemsize, has_mask, nW,
                          budget_bytes=14 * 1024 * 1024, max_bw=None):
    """Pick windows-per-grid-step from a per-step VMEM live-set budget."""

    def live_bytes(bw):
        rows = bw * N
        io = 2 * 2 * rows * C * x_itemsize            # double-buffered x + out tiles
        qkv = rows * 3 * C * 4                        # fused qkv activations (f32)
        ctx = rows * C * (4 + 2)                      # ctx scratch (f32) + bf16 copy
        sp = 3 * bw * N * N * 4                       # scores / probs temporaries
        msk = (2 if has_mask else 0) * bw * N * N * 4
        w = (C * 3 * C + C * C) * 2 + nH * N * N * 4 + 4 * 4 * C  # resident weights
        return io + qkv + ctx + sp + msk + w

    cands = []
    for bw in range(1, B_ + 1):
        if B_ % bw:
            continue
        if has_mask and not (bw % nW == 0 or nW % bw == 0):
            continue
        if max_bw is not None and bw > max_bw:
            continue
        if bw > 1 and live_bytes(bw) > budget_bytes:
            continue
        cands.append(bw)
    if not cands:
        return 1
    # Prefer >=2 grid steps (pipelining overlap; v7x megacore sharding of the
    # "parallel" axis across 2 TensorCores).
    multi = [bw for bw in cands if B_ // bw >= 2]
    return max(multi) if multi else max(cands)


def _window_attn_kernel(x_ref, wqkv_ref, bqkv_ref, wp_ref, bp_ref, bias_ref,
                        *rest, scale, bw, n, num_heads, head_dim, has_mask):
    """One grid step = one block of `bw` windows; all heads handled in-kernel."""
    if has_mask:
        mask_ref, o_ref, ctx_ref = rest
    else:
        o_ref, ctx_ref = rest

    C = num_heads * head_dim

    # Fused QKV projection: lane-dense (bw*n, 3C) output, bf16 MXU, f32 accumulation.
    x = x_ref[...].reshape(bw * n, C).astype(jnp.bfloat16)
    qkv = jnp.dot(x, wqkv_ref[...], preferred_element_type=jnp.float32)
    qkv = qkv + bqkv_ref[...]                                       # (bw*n, 3C)

    if has_mask:
        mask = mask_ref[...]                                        # (bw, n, n)

    # Per-head attention (static unrolled loop; slices are static -> free views).
    for h in range(num_heads):
        lo = h * head_dim
        q = (qkv[:, lo:lo + head_dim] * scale).astype(jnp.bfloat16).reshape(bw, n, head_dim)
        k = qkv[:, C + lo:C + lo + head_dim].astype(jnp.bfloat16).reshape(bw, n, head_dim)
        v = qkv[:, 2 * C + lo:2 * C + lo + head_dim].astype(jnp.bfloat16).reshape(bw, n, head_dim)

        s = jnp.einsum('bqd,bkd->bqk', q, k,
                       preferred_element_type=jnp.float32)          # (bw, n, n)
        s = s + bias_ref[h][None, :, :]                             # rel-pos bias
        if has_mask:
            s = s + mask

        # Numerically stable softmax; 1/l folded into the context scale via EUP rcp.
        m = jnp.max(s, axis=-1, keepdims=True)
        p = jnp.exp(s - m)
        l = jnp.sum(p, axis=-1, keepdims=True)
        ctx = jnp.einsum('bqk,bkd->bqd', p.astype(jnp.bfloat16), v,
                         preferred_element_type=jnp.float32)        # (bw, n, hd)
        ctx = ctx * pl.reciprocal(l, approx=True)

        ctx_ref[:, lo:lo + head_dim] = ctx.reshape(bw * n, head_dim)

    # Full-width output projection (single lane-dense matmul over all heads).
    y = jnp.dot(ctx_ref[...].astype(jnp.bfloat16), wp_ref[...],
                preferred_element_type=jnp.float32) + bp_ref[...]   # (bw*n, C)
    o_ref[...] = y.reshape(bw, n, C).astype(o_ref.dtype)


def window_attention(x, params, window_size, num_heads, mask=None,
                     qk_scale=None, block_windows=None):
    """Pallas implementation of WindowAttention.forward.

    Args:
      x: (B_, N, C) windows, N == window_size[0] * window_size[1].
      params: dict with qkv_w (3C,C), qkv_b (3C,), proj_w (C,C), proj_b (C,),
              relative_position_bias_table ((2Wh-1)*(2Ww-1), nH),
              relative_position_index (N, N) int.
      mask: optional (nW, N, N) additive mask (0 / -100).
    Returns:
      (B_, N, C) array, same dtype as x.
    """
    B_, N, C = x.shape
    Wh, Ww = window_size
    nH = num_heads
    assert N == Wh * Ww and C % nH == 0
    hd = C // nH
    scale = float(qk_scale) if qk_scale is not None else hd ** (-0.5)

    # ---- parameter re-layout (tiny, done once outside the kernel) ----
    # Weights in bf16 for the MXU; biases / rel-pos bias stay f32.
    w_qkv = params['qkv_w'].T.astype(jnp.bfloat16)                   # (C, 3C)
    b_qkv = params['qkv_b'].astype(jnp.float32).reshape(1, 3 * C)    # (1, 3C)
    w_proj = params['proj_w'].T.astype(jnp.bfloat16)                 # (C, C)
    b_proj = params['proj_b'].astype(jnp.float32).reshape(1, C)      # (1, C)

    rpi = params['relative_position_index'].reshape(-1)
    bias = params['relative_position_bias_table'][rpi]
    bias = bias.reshape(N, N, nH).transpose(2, 0, 1).astype(jnp.float32)  # (nH, N, N)

    # ---- window blocking (VMEM-budget driven, decoupled from nW) ----
    has_mask = mask is not None
    nW = mask.shape[0] if has_mask else 1
    if has_mask:
        assert B_ % nW == 0
    bw = _choose_block_windows(B_, N, C, nH, x.dtype.itemsize, has_mask, nW,
                               max_bw=block_windows)
    assert B_ % bw == 0
    n_blocks = B_ // bw

    in_specs = [
        pl.BlockSpec((bw, N, C), lambda b: (b, 0, 0)),        # x (streamed)
        pl.BlockSpec((C, 3 * C), lambda b: (0, 0)),           # W_qkv   (resident)
        pl.BlockSpec((1, 3 * C), lambda b: (0, 0)),           # b_qkv   (resident)
        pl.BlockSpec((C, C), lambda b: (0, 0)),               # W_proj  (resident)
        pl.BlockSpec((1, C), lambda b: (0, 0)),               # b_proj  (resident)
        pl.BlockSpec((nH, N, N), lambda b: (0, 0, 0)),        # rel-pos bias (resident)
    ]
    args = [x, w_qkv, b_qkv, w_proj, b_proj, bias]

    if has_mask:
        mask_f32 = mask.astype(jnp.float32)
        if bw % nW == 0:
            # Block spans whole mask periods -> tile once, keep it VMEM-resident.
            mask_arr = jnp.tile(mask_f32, (bw // nW, 1, 1))
            mask_map = lambda b: (0, 0, 0)
        else:
            # nW % bw == 0 (guaranteed by _choose_block_windows) -> modulo-index.
            n_mask_blocks = nW // bw
            mask_arr = mask_f32
            mask_map = lambda b: (b % n_mask_blocks, 0, 0)
        in_specs.append(pl.BlockSpec((bw, N, N), mask_map))
        args.append(mask_arr)

    kernel = functools.partial(_window_attn_kernel, scale=scale, bw=bw, n=N,
                               num_heads=nH, head_dim=hd, has_mask=has_mask)

    itemsize = x.dtype.itemsize
    flops = int(2 * B_ * N * C * 3 * C          # fused qkv projection
                + 2 * B_ * nH * N * N * hd      # q @ k^T
                + 2 * B_ * nH * N * N * hd      # attn @ v
                + 2 * B_ * N * C * C)           # output projection
    bytes_accessed = int(itemsize * 2 * B_ * N * C
                         + 2 * (3 * C * C + C * C)
                         + 4 * (4 * C + nH * N * N
                                + (bw * N * N if has_mask else 0)))

    out = pl.pallas_call(
        kernel,
        out_shape=jax.ShapeDtypeStruct((B_, N, C), x.dtype),
        grid_spec=pltpu.PrefetchScalarGridSpec(
            num_scalar_prefetch=0,
            grid=(n_blocks,),
            in_specs=in_specs,
            out_specs=pl.BlockSpec((bw, N, C), lambda b: (b, 0, 0)),
            scratch_shapes=[pltpu.VMEM((bw * N, C), jnp.float32)],   # per-head contexts
        ),
        compiler_params=pltpu.CompilerParams(
            dimension_semantics=("parallel",),
            vmem_limit_bytes=48 * 1024 * 1024,   # above every gen's scoped default,
        ),                                       # below v7x's 64 MiB physical
        cost_estimate=pl.CostEstimate(
            flops=flops,
            transcendentals=int(B_ * nH * N * N),
            bytes_accessed=bytes_accessed,
        ),
    )(*args)

    return out


class WindowAttention:
    """JAX/Pallas mirror of the PyTorch WindowAttention module (eval mode)."""

    def __init__(self, dim, window_size, num_heads, qkv_bias=True, qk_scale=None,
                 attn_drop=0.0, proj_drop=0.0, *, key=None):
        self.dim = dim
        self.window_size = tuple(window_size)
        self.num_heads = num_heads
        self.qk_scale = qk_scale
        head_dim = dim // num_heads
        self.scale = qk_scale or head_dim ** (-0.5)

        Wh, Ww = self.window_size
        # relative_position_index (same construction as the torch module).
        coords = jnp.stack(jnp.meshgrid(jnp.arange(Wh), jnp.arange(Ww), indexing='ij'))
        coords_flatten = coords.reshape(2, -1)
        rel = coords_flatten[:, :, None] - coords_flatten[:, None, :]
        rel = rel.transpose(1, 2, 0)
        rel = rel.at[:, :, 0].add(Wh - 1)
        rel = rel.at[:, :, 1].add(Ww - 1)
        rel = rel.at[:, :, 0].multiply(2 * Ww - 1)
        relative_position_index = rel.sum(-1).astype(jnp.int32)

        if key is None:
            key = jax.random.PRNGKey(0)
        k1, k2, k3, k4, k5 = jax.random.split(key, 5)
        C = dim
        self.params = {
            'relative_position_bias_table':
                0.02 * jax.random.normal(k1, ((2 * Wh - 1) * (2 * Ww - 1), num_heads),
                                         jnp.float32),
            'relative_position_index': relative_position_index,
            'qkv_w': 0.05 * jax.random.normal(k2, (3 * C, C), jnp.float32),
            'qkv_b': (0.02 * jax.random.normal(k3, (3 * C,), jnp.float32)
                      if qkv_bias else jnp.zeros((3 * C,), jnp.float32)),
            'proj_w': 0.05 * jax.random.normal(k4, (C, C), jnp.float32),
            'proj_b': 0.02 * jax.random.normal(k5, (C,), jnp.float32),
        }

    def __call__(self, x, mask=None):
        return window_attention(x, self.params, self.window_size, self.num_heads,
                                mask=mask, qk_scale=self.qk_scale)


def window_attention_reference(x, params, window_size, num_heads, mask=None,
                               qk_scale=None):
    """Pure-JAX transliteration of the PyTorch forward (for verification)."""
    B_, N, C = x.shape
    nH = num_heads
    hd = C // nH
    scale = qk_scale or hd ** (-0.5)
    qkv = x @ params['qkv_w'].T + params['qkv_b']
    qkv = qkv.reshape(B_, N, 3, nH, hd).transpose(2, 0, 3, 1, 4)
    q, k, v = qkv[0] * scale, qkv[1], qkv[2]
    attn = q @ jnp.swapaxes(k, -2, -1)
    rpi = params['relative_position_index'].reshape(-1)
    bias = params['relative_position_bias_table'][rpi].reshape(N, N, nH).transpose(2, 0, 1)
    attn = attn + bias[None]
    if mask is not None:
        nW = mask.shape[0]
        attn = attn.reshape(B_ // nW, nW, nH, N, N) + mask[None, :, None]
        attn = attn.reshape(-1, nH, N, N)
    attn = jax.nn.softmax(attn, axis=-1)
    out = jnp.swapaxes(attn @ v, 1, 2).reshape(B_, N, C)
    return out @ params['proj_w'].T + params['proj_b']


if __name__ == "__main__":
    # Small deterministic example: 2 images, 4 windows each, 8x8 window (N=64),
    # dim=64, 2 heads (head_dim=32), with a Swin-style additive mask.
    B, Wh, Ww, C, nH = 2, 8, 8, 64, 2
    N = Wh * Ww
    nW = 4
    B_ = B * nW

    key = jax.random.PRNGKey(0)
    kx, km, kp = jax.random.split(key, 3)
    x = jax.random.normal(kx, (B_, N, C), jnp.float32)
    bits = jax.random.bernoulli(km, 0.5, (nW, N, N))
    mask = jnp.where(bits, 0.0, -100.0).astype(jnp.float32)

    attn_mod = WindowAttention(dim=C, window_size=(Wh, Ww), num_heads=nH, key=kp)

    y_masked = jax.block_until_ready(attn_mod(x, mask))
    y_plain = jax.block_until_ready(attn_mod(x, None))

    ref_masked = window_attention_reference(x, attn_mod.params, (Wh, Ww), nH, mask)
    ref_plain = window_attention_reference(x, attn_mod.params, (Wh, Ww), nH, None)

    assert y_masked.shape == (B_, N, C) and y_masked.dtype == x.dtype
    err_m = float(jnp.max(jnp.abs(y_masked - ref_masked)))
    err_p = float(jnp.max(jnp.abs(y_plain - ref_plain)))
    # bf16 MXU operands with f32 accumulation -> small rounding vs the f32 reference.
    assert jnp.allclose(y_masked, ref_masked, atol=2e-2, rtol=2e-2), err_m
    assert jnp.allclose(y_plain, ref_plain, atol=2e-2, rtol=2e-2), err_p

    print("KERNEL_OK")
</pallas_src>

<mosaic_0001>
module attributes {stable_mosaic.version = 11 : i64} {
  func.func @_window_attn_kernel(%arg0: i32, %arg1: memref<4x64x64xf32, #tpu.memory_space<vmem>>, %arg2: memref<64x192xbf16, #tpu.memory_space<vmem>>, %arg3: memref<1x192xf32, #tpu.memory_space<vmem>>, %arg4: memref<64x64xbf16, #tpu.memory_space<vmem>>, %arg5: memref<1x64xf32, #tpu.memory_space<vmem>>, %arg6: memref<2x64x64xf32, #tpu.memory_space<vmem>>, %arg7: memref<4x64x64xf32, #tpu.memory_space<vmem>>, %arg8: memref<4x64x64xf32, #tpu.memory_space<vmem>>, %arg9: memref<256x64xf32, #tpu.memory_space<vmem>>) attributes {dimension_semantics = [#tpu.dimension_semantics<parallel>], iteration_bounds = array<i64: 2>, scalar_prefetch = 0 : i64, scratch_operands = 1 : i64, tpu.core_type = #tpu.core_type<tc>, window_params = [{transform_indices = @transform_0, window_bounds = array<i64: 4, 64, 64>}, {pipeline_mode = #tpu.pipeline_mode<synchronous>, transform_indices = @transform_1, window_bounds = array<i64: 64, 192>}, {pipeline_mode = #tpu.pipeline_mode<synchronous>, transform_indices = @transform_2, window_bounds = array<i64: 1, 192>}, {pipeline_mode = #tpu.pipeline_mode<synchronous>, transform_indices = @transform_3, window_bounds = array<i64: 64, 64>}, {pipeline_mode = #tpu.pipeline_mode<synchronous>, transform_indices = @transform_4, window_bounds = array<i64: 1, 64>}, {pipeline_mode = #tpu.pipeline_mode<synchronous>, transform_indices = @transform_5, window_bounds = array<i64: 2, 64, 64>}, {pipeline_mode = #tpu.pipeline_mode<synchronous>, transform_indices = @transform_6, window_bounds = array<i64: 4, 64, 64>}, {transform_indices = @transform_7, window_bounds = array<i64: 4, 64, 64>}]} {
    %c0 = arith.constant 0 : index
    %c0_0 = arith.constant 0 : index
    %c0_1 = arith.constant 0 : index
    %0 = vector.load %arg1[%c0, %c0_0, %c0_1] : memref<4x64x64xf32, #tpu.memory_space<vmem>>, vector<4x64x64xf32>
    %1 = vector.shape_cast %0 : vector<4x64x64xf32> to vector<256x64xf32>
    %2 = arith.truncf %1 : vector<256x64xf32> to vector<256x64xbf16>
    %c0_2 = arith.constant 0 : index
    %c0_3 = arith.constant 0 : index
    %3 = vector.load %arg2[%c0_2, %c0_3] : memref<64x192xbf16, #tpu.memory_space<vmem>>, vector<64x192xbf16>
    %cst = arith.constant dense<0.000000e+00> : vector<256x192xf32>
    %4 = tpu.matmul %2, %3, %cst {dimension_numbers = #tpu.dot_dimension_numbers<[1], [0], [0], [1], [0, 0, 1, 1], [], []>} : vector<256x64xbf16>, vector<64x192xbf16>, vector<256x192xf32> -> vector<256x192xf32>
    %c0_4 = arith.constant 0 : index
    %c0_5 = arith.constant 0 : index
    %5 = vector.load %arg3[%c0_4, %c0_5] : memref<1x192xf32, #tpu.memory_space<vmem>>, vector<1x192xf32>
    %6 = vector.broadcast %5 : vector<1x192xf32> to vector<256x192xf32>
    %7 = arith.addf %4, %6 : vector<256x192xf32>
    %c0_6 = arith.constant 0 : index
    %c0_7 = arith.constant 0 : index
    %c0_8 = arith.constant 0 : index
    %8 = vector.load %arg7[%c0_6, %c0_7, %c0_8] : memref<4x64x64xf32, #tpu.memory_space<vmem>>, vector<4x64x64xf32>
    %9 = vector.extract_strided_slice %7 {offsets = [0, 0], sizes = [256, 32], strides = [1, 1]} : vector<256x192xf32> to vector<256x32xf32>
    %cst_9 = arith.constant 0.176776692 : f32
    %10 = vector.broadcast %cst_9 : f32 to vector<256x32xf32>
    %11 = arith.mulf %9, %10 : vector<256x32xf32>
    %12 = arith.truncf %11 : vector<256x32xf32> to vector<256x32xbf16>
    %13 = vector.shape_cast %12 : vector<256x32xbf16> to vector<4x64x32xbf16>
    %14 = vector.extract_strided_slice %7 {offsets = [0, 64], sizes = [256, 32], strides = [1, 1]} : vector<256x192xf32> to vector<256x32xf32>
    %15 = arith.truncf %14 : vector<256x32xf32> to vector<256x32xbf16>
    %16 = vector.shape_cast %15 : vector<256x32xbf16> to vector<4x64x32xbf16>
    %17 = vector.extract_strided_slice %7 {offsets = [0, 128], sizes = [256, 32], strides = [1, 1]} : vector<256x192xf32> to vector<256x32xf32>
    %18 = arith.truncf %17 : vector<256x32xf32> to vector<256x32xbf16>
    %19 = vector.shape_cast %18 : vector<256x32xbf16> to vector<4x64x32xbf16>
    "tpu.trace_start"() <{level = 10 : i32, message = "bqd,bkd->bqk"}> : () -> ()
    %cst_10 = arith.constant dense<0.000000e+00> : vector<4x64x64xf32>
    %20 = tpu.matmul %13, %16, %cst_10 {dimension_numbers = #tpu.dot_dimension_numbers<[2], [2], [1], [1], [0, 0, 0, 1, 1, 1], [0], [0]>} : vector<4x64x32xbf16>, vector<4x64x32xbf16>, vector<4x64x64xf32> -> vector<4x64x64xf32>
    "tpu.trace_stop"() : () -> ()
    %c0_11 = arith.constant 0 : index
    %c0_12 = arith.constant 0 : index
    %c0_13 = arith.constant 0 : index
    %21 = vector.load %arg6[%c0_11, %c0_12, %c0_13] : memref<2x64x64xf32, #tpu.memory_space<vmem>>, vector<1x64x64xf32>
    %22 = vector.shape_cast %21 : vector<1x64x64xf32> to vector<64x64xf32>
    %23 = vector.shape_cast %22 : vector<64x64xf32> to vector<1x64x64xf32>
    %24 = vector.broadcast %23 : vector<1x64x64xf32> to vector<4x64x64xf32>
    %25 = arith.addf %20, %24 : vector<4x64x64xf32>
    %26 = arith.addf %25, %8 : vector<4x64x64xf32>
    %cst_14 = arith.constant dense<0xFF800000> : vector<4x64xf32>
    %27 = vector.multi_reduction <maximumf>, %26, %cst_14 [2] : vector<4x64x64xf32> to vector<4x64xf32>
    %28 = vector.shape_cast %27 : vector<4x64xf32> to vector<4x64x1xf32>
    %29 = vector.broadcast %28 : vector<4x64x1xf32> to vector<4x64x64xf32>
    %30 = arith.subf %26, %29 : vector<4x64x64xf32>
    %31 = math.exp %30 : vector<4x64x64xf32>
    %cst_15 = arith.constant dense<0.000000e+00> : vector<4x64xf32>
    %32 = vector.multi_reduction <add>, %31, %cst_15 [2] : vector<4x64x64xf32> to vector<4x64xf32>
    %33 = vector.shape_cast %32 : vector<4x64xf32> to vector<4x64x1xf32>
    %34 = arith.truncf %31 : vector<4x64x64xf32> to vector<4x64x64xbf16>
    "tpu.trace_start"() <{level = 10 : i32, message = "bqk,bkd->bqd"}> : () -> ()
    %cst_16 = arith.constant dense<0.000000e+00> : vector<4x64x32xf32>
    %35 = tpu.matmul %34, %19, %cst_16 {dimension_numbers = #tpu.dot_dimension_numbers<[2], [1], [1], [2], [0, 0, 0, 1, 1, 2], [0], [0]>} : vector<4x64x64xbf16>, vector<4x64x32xbf16>, vector<4x64x32xf32> -> vector<4x64x32xf32>
    "tpu.trace_stop"() : () -> ()
    %36 = tpu.reciprocal %33 {approx = true} : vector<4x64x1xf32> -> vector<4x64x1xf32>
    %37 = vector.broadcast %36 : vector<4x64x1xf32> to vector<4x64x32xf32>
    %38 = arith.mulf %35, %37 : vector<4x64x32xf32>
    %39 = vector.shape_cast %38 : vector<4x64x32xf32> to vector<256x32xf32>
    %c0_17 = arith.constant 0 : index
    %c0_18 = arith.constant 0 : index
    %40 = vector.load %arg9[%c0_17, %c0_18] : memref<256x64xf32, #tpu.memory_space<vmem>>, vector<256x32xf32>
    tpu.vector_store %arg9[%c0_17, %c0_18], %39 {strides = array<i32>} : memref<256x64xf32, #tpu.memory_space<vmem>>, vector<256x32xf32>,
    %41 = vector.extract_strided_slice %7 {offsets = [0, 32], sizes = [256, 32], strides = [1, 1]} : vector<256x192xf32> to vector<256x32xf32>
    %cst_19 = arith.constant 0.176776692 : f32
    %42 = vector.broadcast %cst_19 : f32 to vector<256x32xf32>
    %43 = arith.mulf %41, %42 : vector<256x32xf32>
    %44 = arith.truncf %43 : vector<256x32xf32> to vector<256x32xbf16>
    %45 = vector.shape_cast %44 : vector<256x32xbf16> to vector<4x64x32xbf16>
    %46 = vector.extract_strided_slice %7 {offsets = [0, 96], sizes = [256, 32], strides = [1, 1]} : vector<256x192xf32> to vector<256x32xf32>
    %47 = arith.truncf %46 : vector<256x32xf32> to vector<256x32xbf16>
    %48 = vector.shape_cast %47 : vector<256x32xbf16> to vector<4x64x32xbf16>
    %49 = vector.extract_strided_slice %7 {offsets = [0, 160], sizes = [256, 32], strides = [1, 1]} : vector<256x192xf32> to vector<256x32xf32>
    %50 = arith.truncf %49 : vector<256x32xf32> to vector<256x32xbf16>
    %51 = vector.shape_cast %50 : vector<256x32xbf16> to vector<4x64x32xbf16>
    "tpu.trace_start"() <{level = 10 : i32, message = "bqd,bkd->bqk"}> : () -> ()
    %cst_20 = arith.constant dense<0.000000e+00> : vector<4x64x64xf32>
    %52 = tpu.matmul %45, %48, %cst_20 {dimension_numbers = #tpu.dot_dimension_numbers<[2], [2], [1], [1], [0, 0, 0, 1, 1, 1], [0], [0]>} : vector<4x64x32xbf16>, vector<4x64x32xbf16>, vector<4x64x64xf32> -> vector<4x64x64xf32>
    "tpu.trace_stop"() : () -> ()
    %c1 = arith.constant 1 : index
    %c0_21 = arith.constant 0 : index
    %c0_22 = arith.constant 0 : index
    %53 = vector.load %arg6[%c1, %c0_21, %c0_22] : memref<2x64x64xf32, #tpu.memory_space<vmem>>, vector<1x64x64xf32>
    %54 = vector.shape_cast %53 : vector<1x64x64xf32> to vector<64x64xf32>
    %55 = vector.shape_cast %54 : vector<64x64xf32> to vector<1x64x64xf32>
    %56 = vector.broadcast %55 : vector<1x64x64xf32> to vector<4x64x64xf32>
    %57 = arith.addf %52, %56 : vector<4x64x64xf32>
    %58 = arith.addf %57, %8 : vector<4x64x64xf32>
    %cst_23 = arith.constant dense<0xFF800000> : vector<4x64xf32>
    %59 = vector.multi_reduction <maximumf>, %58, %cst_23 [2] : vector<4x64x64xf32> to vector<4x64xf32>
    %60 = vector.shape_cast %59 : vector<4x64xf32> to vector<4x64x1xf32>
    %61 = vector.broadcast %60 : vector<4x64x1xf32> to vector<4x64x64xf32>
    %62 = arith.subf %58, %61 : vector<4x64x64xf32>
    %63 = math.exp %62 : vector<4x64x64xf32>
    %cst_24 = arith.constant dense<0.000000e+00> : vector<4x64xf32>
    %64 = vector.multi_reduction <add>, %63, %cst_24 [2] : vector<4x64x64xf32> to vector<4x64xf32>
    %65 = vector.shape_cast %64 : vector<4x64xf32> to vector<4x64x1xf32>
    %66 = arith.truncf %63 : vector<4x64x64xf32> to vector<4x64x64xbf16>
    "tpu.trace_start"() <{level = 10 : i32, message = "bqk,bkd->bqd"}> : () -> ()
    %cst_25 = arith.constant dense<0.000000e+00> : vector<4x64x32xf32>
    %67 = tpu.matmul %66, %51, %cst_25 {dimension_numbers = #tpu.dot_dimension_numbers<[2], [1], [1], [2], [0, 0, 0, 1, 1, 2], [0], [0]>} : vector<4x64x64xbf16>, vector<4x64x32xbf16>, vector<4x64x32xf32> -> vector<4x64x32xf32>
    "tpu.trace_stop"() : () -> ()
    %68 = tpu.reciprocal %65 {approx = true} : vector<4x64x1xf32> -> vector<4x64x1xf32>
    %69 = vector.broadcast %68 : vector<4x64x1xf32> to vector<4x64x32xf32>
    %70 = arith.mulf %67, %69 : vector<4x64x32xf32>
    %71 = vector.shape_cast %70 : vector<4x64x32xf32> to vector<256x32xf32>
    %c0_26 = arith.constant 0 : index
    %c32 = arith.constant 32 : index
    %72 = vector.load %arg9[%c0_26, %c32] : memref<256x64xf32, #tpu.memory_space<vmem>>, vector<256x32xf32>
    tpu.vector_store %arg9[%c0_26, %c32], %71 {strides = array<i32>} : memref<256x64xf32, #tpu.memory_space<vmem>>, vector<256x32xf32>,
    %c0_27 = arith.constant 0 : index
    %c0_28 = arith.constant 0 : index
    %73 = vector.load %arg9[%c0_27, %c0_28] : memref<256x64xf32, #tpu.memory_space<vmem>>, vector<256x64xf32>
    %74 = arith.truncf %73 : vector<256x64xf32> to vector<256x64xbf16>
    %c0_29 = arith.constant 0 : index
    %c0_30 = arith.constant 0 : index
    %75 = vector.load %arg4[%c0_29, %c0_30] : memref<64x64xbf16, #tpu.memory_space<vmem>>, vector<64x64xbf16>
    %cst_31 = arith.constant dense<0.000000e+00> : vector<256x64xf32>
    %76 = tpu.matmul %74, %75, %cst_31 {dimension_numbers = #tpu.dot_dimension_numbers<[1], [0], [0], [1], [0, 0, 1, 1], [], []>} : vector<256x64xbf16>, vector<64x64xbf16>, vector<256x64xf32> -> vector<256x64xf32>
    %c0_32 = arith.constant 0 : index
    %c0_33 = arith.constant 0 : index
    %77 = vector.load %arg5[%c0_32, %c0_33] : memref<1x64xf32, #tpu.memory_space<vmem>>, vector<1x64xf32>
    %78 = vector.broadcast %77 : vector<1x64xf32> to vector<256x64xf32>
    %79 = arith.addf %76, %78 : vector<256x64xf32>
    %80 = vector.shape_cast %79 : vector<256x64xf32> to vector<4x64x64xf32>
    %c0_34 = arith.constant 0 : index
    %c0_35 = arith.constant 0 : index
    %c0_36 = arith.constant 0 : index
    %81 = vector.load %arg8[%c0_34, %c0_35, %c0_36] : memref<4x64x64xf32, #tpu.memory_space<vmem>>, vector<4x64x64xf32>
    tpu.vector_store %arg8[%c0_34, %c0_35, %c0_36], %80 {strides = array<i32>} : memref<4x64x64xf32, #tpu.memory_space<vmem>>, vector<4x64x64xf32>,
    return
  }
  func.func @transform_0(%arg0: i32) -> (i32, i32, i32) {
    %c0_i32 = arith.constant 0 : i32
    %c0_i32_0 = arith.constant 0 : i32
    %c0_i32_1 = arith.constant 0 : i32
    return %arg0, %c0_i32, %c0_i32_0 : i32, i32, i32
  }
  func.func @transform_1(%arg0: i32) -> (i32, i32) {
    %c0_i32 = arith.constant 0 : i32
    %c0_i32_0 = arith.constant 0 : i32
    %c0_i32_1 = arith.constant 0 : i32
    return %c0_i32, %c0_i32_0 : i32, i32
  }
  func.func @transform_2(%arg0: i32) -> (i32, i32) {
    %c0_i32 = arith.constant 0 : i32
    %c0_i32_0 = arith.constant 0 : i32
    %c0_i32_1 = arith.constant 0 : i32
    return %c0_i32, %c0_i32_0 : i32, i32
  }
  func.func @transform_3(%arg0: i32) -> (i32, i32) {
    %c0_i32 = arith.constant 0 : i32
    %c0_i32_0 = arith.constant 0 : i32
    %c0_i32_1 = arith.constant 0 : i32
    return %c0_i32, %c0_i32_0 : i32, i32
  }
  func.func @transform_4(%arg0: i32) -> (i32, i32) {
    %c0_i32 = arith.constant 0 : i32
    %c0_i32_0 = arith.constant 0 : i32
    %c0_i32_1 = arith.constant 0 : i32
    return %c0_i32, %c0_i32_0 : i32, i32
  }
  func.func @transform_5(%arg0: i32) -> (i32, i32, i32) {
    %c0_i32 = arith.constant 0 : i32
    %c0_i32_0 = arith.constant 0 : i32
    %c0_i32_1 = arith.constant 0 : i32
    %c0_i32_2 = arith.constant 0 : i32
    return %c0_i32, %c0_i32_0, %c0_i32_1 : i32, i32, i32
  }
  func.func @transform_6(%arg0: i32) -> (i32, i32, i32) {
    %c0_i32 = arith.constant 0 : i32
    %c0_i32_0 = arith.constant 0 : i32
    %c0_i32_1 = arith.constant 0 : i32
    %c0_i32_2 = arith.constant 0 : i32
    return %c0_i32, %c0_i32_0, %c0_i32_1 : i32, i32, i32
  }
  func.func @transform_7(%arg0: i32) -> (i32, i32, i32) {
    %c0_i32 = arith.constant 0 : i32
    %c0_i32_0 = arith.constant 0 : i32
    %c0_i32_1 = arith.constant 0 : i32
    return %arg0, %c0_i32, %c0_i32_0 : i32, i32, i32
  }
}

</mosaic_0001>

<llo_original>
// kernel: tpu_custom_call.1
$region0: #{tpu_custom_call.1}
  #allocation0 [shape = 'u32[]', space=smem, size = 0x4, offset = 0x4, fixed_abs, tag = 'smem constant byte address 0x4 - core index']
  #allocation1 [shape = 'u32[144,128]{1,0:T(1,128)}', space=vmem, size = 0x12000, scoped, tag = 'internal scratch']
  #allocation2 [shape = 'f32[256,64]{1,0:T(8,128)}', space=vmem, size = 0x20000, scoped, tag = 'scratch operand']
  %s0 = inlined_call_operand.hbm [shape: f32[8,64,64], index: 0, kind: input, shape index: {}]
  %s1 = inlined_call_operand.hbm [shape: bf16[64,192], index: 1, kind: input, shape index: {}]
  %s2 = inlined_call_operand.vmem [shape: f32[1,192], index: 2, kind: input, shape index: {}]
  %s3 = inlined_call_operand.hbm [shape: bf16[64,64], index: 3, kind: input, shape index: {}]
  %s4 = inlined_call_operand.vmem [shape: f32[1,64], index: 4, kind: input, shape index: {}]
  %s5 = inlined_call_operand.hbm [shape: f32[2,64,64], index: 5, kind: input, shape index: {}]
  %s6 = inlined_call_operand.hbm [shape: f32[4,64,64], index: 6, kind: input, shape index: {}]
  %s7 = inlined_call_operand.hbm [shape: f32[8,64,64], index: 7, kind: output, shape index: {}]
  %s8 = sld [smem:[#allocation0]]
  $region81: #{tpu_custom_call.1} parent=0
    _
  %s10 = ssub.s32 1, %s8
  %s11 = scalar_select 0, %s10, %s8
  $region1: #{tpu_custom_call.1} parent=0
    #allocation3 [shape = 'u8[262144]{0}', space=vmem, size = 0x40000, scoped, tag = 'input window, operand 0']
    #allocation4 [shape = 's32[2]{0}', space=sflag, size = 0x8, scoped, tag = 'scoped memory for tpu_custom_call.1']
    #allocation5 [shape = 's32[2]{0}', space=sflag, size = 0x8, scoped, tag = 'scoped memory for tpu_custom_call.1']
    #allocation6 [shape = 'u8[32768]{0}', space=vmem, size = 0x8000, scoped, tag = 'input window, operand 1, single buffered']
    #allocation7 [shape = 's32[1]{0}', space=sflag, size = 0x4, scoped, tag = 'scoped memory for tpu_custom_call.1']
    #allocation8 [shape = 'u8[16384]{0}', space=vmem, size = 0x4000, scoped, tag = 'input window, operand 3, single buffered']
    #allocation9 [shape = 'u8[65536]{0}', space=vmem, size = 0x10000, scoped, tag = 'input window, operand 5, single buffered']
    #allocation10 [shape = 's32[1]{0}', space=sflag, size = 0x4, scoped, tag = 'scoped memory for tpu_custom_call.1']
    #allocation11 [shape = 'u8[131072]{0}', space=vmem, size = 0x20000, scoped, tag = 'input window, operand 6, single buffered']
    #allocation12 [shape = 'u8[262144]{0}', space=vmem, size = 0x40000, scoped, tag = 'output window, operand 0']
    %12 = vsyncpa [#allocation4], 0
    %s13 = scalar_lea.sflag [#allocation4], 1
    %14 = vsyncpa %s13, 0
    %15 = vsyncpa [#allocation7], 0
    %16 = vsyncpa [#allocation10], 0
    %17 = vsyncpa [#allocation5], 0
    %s18 = scalar_lea.sflag [#allocation5], 1
    %19 = vsyncpa %s18, 0
    loop: start=0, step=1, limit=4
    $region2: #{tpu_custom_call.1} parent=1 // loop_pre_header
      _
    $region3: #{tpu_custom_call.1} parent=1 // loop_header
      %s21 = sphi 0, %s25
      %p22 = scmp.ge.s32.totalorder %s21, 4
      %s31 = sphi 0, %s33
      %s34 = sphi 0, %s31
      %s35 = sphi 0, %s34
      %s51 = sphi 0, %s35
      %s55 = sphi 0, %s55
      %s57 = sphi 0, %s55
      %s58 = sphi 0, %s57
      %s72 = sphi 0, %s58
      %s76 = sphi 0, %s76
      %s78 = sphi 0, %s76
      %s79 = sphi 0, %s78
      %s93 = sphi 0, %s79
      %s97 = sphi 0, %s97
      %s99 = sphi 0, %s97
      %s100 = sphi 0, %s99
      %s114 = sphi 0, %s100
      %s118 = sphi 0, %s118
      %s120 = sphi 0, %s118
      %s121 = sphi 0, %s120
      %s135 = sphi 0, %s121
      %s139 = sphi 0, %s139
      %s141 = sphi 0, %s139
      %s142 = sphi 0, %s141
      %s156 = sphi 0, %s142
      %s160 = sphi 0, %s160
      %s162 = sphi 0, %s160
      %s163 = sphi 0, %s162
      %s177 = sphi 0, %s163
      %s183 = sphi 0, %s185
      %s186 = sphi 0, %s183
      %s187 = sphi 0, %s186
      %s203 = sphi 0, %s187
    $region4: #{tpu_custom_call.1} parent=1 // loop_header_branch
      %24 = sbr.rel (%p22) target = $region8
    $region5: #{tpu_custom_call.1} parent=1 // loop_body
      %s26 = ssub.s32 %s21, 1
      %s27 = ssub.s32 %s21, 2
      %s28 = sadd.s32 %s21, 1
      %s29 = ssub.s32 %s21, %s28
      %p30 = scmp.eq.s32.totalorder %s29, 0
      %s32 = sadd.s32 %s31, 1
      %s33 = scalar_select %p30, %s31, %s32
      %p36 = pneg %p30
      %p37 = scmp.eq.s32.totalorder %s21, 1
      %p38 = por %p36, %p37
      %p39 = scmp.ne.s32.totalorder %s31, %s34
      %p40 = scmp.eq.s32.totalorder %s21, 0
      %p41 = por %p39, %p40
      %p42 = scmp.ne.s32.totalorder %s31, %s34
      %p43 = scmp.eq.s32.totalorder %s26, 1
      %p44 = por %p42, %p43
      %p45 = scmp.ne.s32.totalorder %s34, %s35
      %p46 = scmp.eq.s32.totalorder %s26, 0
      %p47 = por %p45, %p46
      %p48 = scmp.ne.s32.totalorder %s34, %s35
      %p49 = scmp.eq.s32.totalorder %s27, 1
      %p50 = por %p48, %p49
      %p52 = scmp.ne.s32.totalorder %s35, %s51
      %p53 = scmp.eq.s32.totalorder %s27, 0
      %p54 = por %p52, %p53
      %s56 = sadd.s32 %s55, 1
      %p59 = scmp.eq.s32.totalorder %s21, 1
      %p60 = scmp.ne.s32.totalorder %s55, %s57
      %p61 = scmp.eq.s32.totalorder %s21, 0
      %p62 = por %p60, %p61
      %p63 = scmp.ne.s32.totalorder %s55, %s57
      %p64 = scmp.eq.s32.totalorder %s26, 1
      %p65 = por %p63, %p64
      %p66 = scmp.ne.s32.totalorder %s57, %s58
      %p67 = scmp.eq.s32.totalorder %s26, 0
      %p68 = por %p66, %p67
      %p69 = scmp.ne.s32.totalorder %s57, %s58
      %p70 = scmp.eq.s32.totalorder %s27, 1
      %p71 = por %p69, %p70
      %p73 = scmp.ne.s32.totalorder %s58, %s72
      %p74 = scmp.eq.s32.totalorder %s27, 0
      %p75 = por %p73, %p74
      %s77 = sadd.s32 %s76, 1
      %p80 = scmp.eq.s32.totalorder %s21, 1
      %p81 = scmp.ne.s32.totalorder %s76, %s78
      %p82 = scmp.eq.s32.totalorder %s21, 0
      %p83 = por %p81, %p82
      %p84 = scmp.ne.s32.totalorder %s76, %s78
      %p85 = scmp.eq.s32.totalorder %s26, 1
      %p86 = por %p84, %p85
      %p87 = scmp.ne.s32.totalorder %s78, %s79
      %p88 = scmp.eq.s32.totalorder %s26, 0
      %p89 = por %p87, %p88
      %p90 = scmp.ne.s32.totalorder %s78, %s79
      %p91 = scmp.eq.s32.totalorder %s27, 1
      %p92 = por %p90, %p91
      %p94 = scmp.ne.s32.totalorder %s79, %s93
      %p95 = scmp.eq.s32.totalorder %s27, 0
      %p96 = por %p94, %p95
      %s98 = sadd.s32 %s97, 1
      %p101 = scmp.eq.s32.totalorder %s21, 1
      %p102 = scmp.ne.s32.totalorder %s97, %s99
      %p103 = scmp.eq.s32.totalorder %s21, 0
      %p104 = por %p102, %p103
      %p105 = scmp.ne.s32.totalorder %s97, %s99
      %p106 = scmp.eq.s32.totalorder %s26, 1
      %p107 = por %p105, %p106
      %p108 = scmp.ne.s32.totalorder %s99, %s100
      %p109 = scmp.eq.s32.totalorder %s26, 0
      %p110 = por %p108, %p109
      %p111 = scmp.ne.s32.totalorder %s99, %s100
      %p112 = scmp.eq.s32.totalorder %s27, 1
      %p113 = por %p111, %p112
      %p115 = scmp.ne.s32.totalorder %s100, %s114
      %p116 = scmp.eq.s32.totalorder %s27, 0
      %p117 = por %p115, %p116
      %s119 = sadd.s32 %s118, 1
      %p122 = scmp.eq.s32.totalorder %s21, 1
      %p123 = scmp.ne.s32.totalorder %s118, %s120
      %p124 = scmp.eq.s32.totalorder %s21, 0
      %p125 = por %p123, %p124
      %p126 = scmp.ne.s32.totalorder %s118, %s120
      %p127 = scmp.eq.s32.totalorder %s26, 1
      %p128 = por %p126, %p127
      %p129 = scmp.ne.s32.totalorder %s120, %s121
      %p130 = scmp.eq.s32.totalorder %s26, 0
      %p131 = por %p129, %p130
      %p132 = scmp.ne.s32.totalorder %s120, %s121
      %p133 = scmp.eq.s32.totalorder %s27, 1
      %p134 = por %p132, %p133
      %p136 = scmp.ne.s32.totalorder %s121, %s135
      %p137 = scmp.eq.s32.totalorder %s27, 0
      %p138 = por %p136, %p137
      %s140 = sadd.s32 %s139, 1
      %p143 = scmp.eq.s32.totalorder %s21, 1
      %p144 = scmp.ne.s32.totalorder %s139, %s141
      %p145 = scmp.eq.s32.totalorder %s21, 0
      %p146 = por %p144, %p145
      %p147 = scmp.ne.s32.totalorder %s139, %s141
      %p148 = scmp.eq.s32.totalorder %s26, 1
      %p149 = por %p147, %p148
      %p150 = scmp.ne.s32.totalorder %s141, %s142
      %p151 = scmp.eq.s32.totalorder %s26, 0
      %p152 = por %p150, %p151
      %p153 = scmp.ne.s32.totalorder %s141, %s142
      %p154 = scmp.eq.s32.totalorder %s27, 1
      %p155 = por %p153, %p154
      %p157 = scmp.ne.s32.totalorder %s142, %s156
      %p158 = scmp.eq.s32.totalorder %s27, 0
      %p159 = por %p157, %p158
      %s161 = sadd.s32 %s160, 1
      %p164 = scmp.eq.s32.totalorder %s21, 1
      %p165 = scmp.ne.s32.totalorder %s160, %s162
      %p166 = scmp.eq.s32.totalorder %s21, 0
      %p167 = por %p165, %p166
      %p168 = scmp.ne.s32.totalorder %s160, %s162
      %p169 = scmp.eq.s32.totalorder %s26, 1
      %p170 = por %p168, %p169
      %p171 = scmp.ne.s32.totalorder %s162, %s163
      %p172 = scmp.eq.s32.totalorder %s26, 0
      %p173 = por %p171, %p172
      %p174 = scmp.ne.s32.totalorder %s162, %s163
      %p175 = scmp.eq.s32.totalorder %s27, 1
      %p176 = por %p174, %p175
      %p178 = scmp.ne.s32.totalorder %s163, %s177
      %p179 = scmp.eq.s32.totalorder %s27, 0
      %p180 = por %p178, %p179
      %s181 = ssub.s32 %s21, %s28
      %p182 = scmp.eq.s32.totalorder %s181, 0
      %s184 = sadd.s32 %s183, 1
      %s185 = scalar_select %p182, %s183, %s184
      %p188 = pneg %p182
      %p189 = scmp.eq.s32.totalorder %s21, 1
      %p190 = por %p188, %p189
      %p191 = scmp.ne.s32.totalorder %s183, %s186
      %p192 = scmp.eq.s32.totalorder %s21, 0
      %p193 = por %p191, %p192
      %p194 = scmp.ne.s32.totalorder %s183, %s186
      %p195 = scmp.eq.s32.totalorder %s26, 1
      %p196 = por %p194, %p195
      %p197 = scmp.ne.s32.totalorder %s186, %s187
      %p198 = scmp.eq.s32.totalorder %s26, 0
      %p199 = por %p197, %p198
      %p200 = scmp.ne.s32.totalorder %s186, %s187
      %p201 = scmp.eq.s32.totalorder %s27, 1
      %p202 = por %p200, %p201
      %p204 = scmp.ne.s32.totalorder %s187, %s203
      %p205 = scmp.eq.s32.totalorder %s27, 0
      %p206 = por %p204, %p205
      %p207 = scmp.le.s32.totalorder 1, %s21
      %p208 = scmp.lt.s32.totalorder %s21, 3
      %p209 = pnand %p207, %p208
      %p210 = pneg %p209
      // Predicated region
      $region9: #{tpu_custom_call.1} parent=5 // pred_check
        _
      $region10: #{tpu_custom_call.1} parent=5 // pred_check_branch
        %212 = sbr.rel (%p209) target = $region12
      $region11: #{tpu_custom_call.1} parent=5 // pred_region
        %s213 = ssub.s32 %s21, 1
        // Predicated region
        $region13: #{tpu_custom_call.1} parent=11 // pred_check
          %p214 = pneg %p68
        $region14: #{tpu_custom_call.1} parent=11 // pred_check_branch
          %216 = sbr.rel (%p214) target = $region16
        $region15: #{tpu_custom_call.1} parent=11 // pred_region
          %s218 = ssub.s32 1024, 1024
          %219 = vsyncadd [#allocation7], %s218
          %s220 = sshll.u32 [#allocation6], 4
          %s221 = int_to_ptr.vmem [resolvable:$true] %s220
          %226 = dma.hbm_to_vmem [thread:$0]  %s1, 1024, %s221, [#allocation7], 128, 128, 8
        $region16: #{tpu_custom_call.1} parent=11 // pred_fallthru
          _
        // Predicated region
        $region17: #{tpu_custom_call.1} parent=11 // pred_check
          %p227 = pneg %p89
        $region18: #{tpu_custom_call.1} parent=11 // pred_check_branch
          %229 = sbr.rel (%p227) target = $region20
        $region19: #{tpu_custom_call.1} parent=11 // pred_region
          _
        $region20: #{tpu_custom_call.1} parent=11 // pred_fallthru
          _
        // Predicated region
        $region21: #{tpu_custom_call.1} parent=11 // pred_check
          %p230 = pneg %p110
        $region22: #{tpu_custom_call.1} parent=11 // pred_check_branch
          %232 = sbr.rel (%p230) target = $region24
        $region23: #{tpu_custom_call.1} parent=11 // pred_region
          %s234 = ssub.s32 512, 512
          %235 = vsyncadd [#allocation7], %s234
          %s236 = sshll.u32 [#allocation8], 4
          %s237 = int_to_ptr.vmem [resolvable:$true] %s236
          %242 = dma.hbm_to_vmem [thread:$0]  %s3, 512, %s237, [#allocation7], 64, 64, 4
        $region24: #{tpu_custom_call.1} parent=11 // pred_fallthru
          _
        // Predicated region
        $region25: #{tpu_custom_call.1} parent=11 // pred_check
          %p243 = pneg %p131
        $region26: #{tpu_custom_call.1} parent=11 // pred_check_branch
          %245 = sbr.rel (%p243) target = $region28
        $region27: #{tpu_custom_call.1} parent=11 // pred_region
          _
        $region28: #{tpu_custom_call.1} parent=11 // pred_fallthru
          _
        // Predicated region
        $region29: #{tpu_custom_call.1} parent=11 // pred_check
          %p246 = pneg %p152
        $region30: #{tpu_custom_call.1} parent=11 // pred_check_branch
          %248 = sbr.rel (%p246) target = $region32
        $region31: #{tpu_custom_call.1} parent=11 // pred_region
          %s250 = ssub.s32 2048, 2048
          %251 = vsyncadd [#allocation10], %s250
          %s252 = sshll.u32 [#allocation9], 4
          %s253 = int_to_ptr.vmem [resolvable:$true] %s252
          %258 = dma.hbm_to_vmem [thread:$0]  %s5, 2048, %s253, [#allocation10], 128, 128, 8
        $region32: #{tpu_custom_call.1} parent=11 // pred_fallthru
          _
        // Predicated region
        $region33: #{tpu_custom_call.1} parent=11 // pred_check
          %p259 = pneg %p173
        $region34: #{tpu_custom_call.1} parent=11 // pred_check_branch
          %261 = sbr.rel (%p259) target = $region36
        $region35: #{tpu_custom_call.1} parent=11 // pred_region
          %s263 = ssub.s32 4096, 4096
          %264 = vsyncadd [#allocation10], %s263
          %s265 = sshll.u32 [#allocation11], 4
          %s266 = int_to_ptr.vmem [resolvable:$true] %s265
          %271 = dma.hbm_to_vmem [thread:$0]  %s6, 4096, %s266, [#allocation10], 128, 128, 8
        $region36: #{tpu_custom_call.1} parent=11 // pred_fallthru
          _
      $region12: #{tpu_custom_call.1} parent=5 // pred_fallthru
        _
      %p272 = scmp.lt.s32.totalorder %s21, 2
      // Predicated region
      $region37: #{tpu_custom_call.1} parent=5 // pred_check
        %p273 = pneg %p272
      $region38: #{tpu_custom_call.1} parent=5 // pred_check_branch
        %275 = sbr.rel (%p273) target = $region40
      $region39: #{tpu_custom_call.1} parent=5 // pred_region
        // Predicated region
        $region41: #{tpu_custom_call.1} parent=39 // pred_check
          %p276 = pneg %p41
        $region42: #{tpu_custom_call.1} parent=39 // pred_check_branch
          %278 = sbr.rel (%p276) target = $region44
        $region43: #{tpu_custom_call.1} parent=39 // pred_region
          %s279 = sand.u32 %s31, 1
          %s280 = scalar_lea.sflag [#allocation4], %s279
          %s281 = sand.u32 %s31, 1
          %s282 = smul.addr %s281, 256
          %s283 = scalar_lea.vmem [#allocation3], %s282
          %s284 = smul.u32 4, %s21
          %s286 = ssub.s32 4096, 4096
          %287 = vsyncadd %s280, %s286
          %s288 = smul.addr %s284, 8
          %s289 = smul.addr %s288, 128
          %s290 = scalar_lea.hbm %s0, %s289
          %s291 = sshll.u32 %s283, 4
          %s292 = int_to_ptr.vmem [resolvable:$true] %s291
          %297 = dma.hbm_to_vmem [thread:$0]  %s290, 4096, %s292, %s280, 128, 128, 8
        $region44: #{tpu_custom_call.1} parent=39 // pred_fallthru
          _
      $region40: #{tpu_custom_call.1} parent=5 // pred_fallthru
        _
      %p298 = scmp.le.s32.totalorder 1, %s21
      %p299 = scmp.lt.s32.totalorder %s21, 3
      %p300 = pnand %p298, %p299
      %p301 = pneg %p300
      // Predicated region
      $region45: #{tpu_custom_call.1} parent=5 // pred_check
        _
      $region46: #{tpu_custom_call.1} parent=5 // pred_check_branch
        %303 = sbr.rel (%p300) target = $region48
      $region47: #{tpu_custom_call.1} parent=5 // pred_region
        %s304 = ssub.s32 %s21, 1
        %s305 = sand.u32 %s34, 1
        %s306 = scalar_lea.sflag [#allocation4], %s305
        %s307 = sand.u32 %s34, 1
        %s308 = smul.addr %s307, 256
        %s309 = scalar_lea.vmem [#allocation3], %s308
        // Predicated region
        $region49: #{tpu_custom_call.1} parent=47 // pred_check
          %p310 = pneg %p47
        $region50: #{tpu_custom_call.1} parent=47 // pred_check_branch
          %312 = sbr.rel (%p310) target = $region52
        $region51: #{tpu_custom_call.1} parent=47 // pred_region
          %313 = dma.done %s306, 4096
        $region52: #{tpu_custom_call.1} parent=47 // pred_fallthru
          _
        // Predicated region
        $region53: #{tpu_custom_call.1} parent=47 // pred_check
          %p314 = pneg %p68
        $region54: #{tpu_custom_call.1} parent=47 // pred_check_branch
          %316 = sbr.rel (%p314) target = $region56
        $region55: #{tpu_custom_call.1} parent=47 // pred_region
          %317 = dma.done [#allocation7], 1024
        $region56: #{tpu_custom_call.1} parent=47 // pred_fallthru
          _
        // Predicated region
        $region57: #{tpu_custom_call.1} parent=47 // pred_check
          %p318 = pneg %p110
        $region58: #{tpu_custom_call.1} parent=47 // pred_check_branch
          %320 = sbr.rel (%p318) target = $region60
        $region59: #{tpu_custom_call.1} parent=47 // pred_region
          %321 = dma.done [#allocation7], 512
        $region60: #{tpu_custom_call.1} parent=47 // pred_fallthru
          _
        // Predicated region
        $region61: #{tpu_custom_call.1} parent=47 // pred_check
          %p322 = pneg %p152
        $region62: #{tpu_custom_call.1} parent=47 // pred_check_branch
          %324 = sbr.rel (%p322) target = $region64
        $region63: #{tpu_custom_call.1} parent=47 // pred_region
          %325 = dma.done [#allocation10], 2048
        $region64: #{tpu_custom_call.1} parent=47 // pred_fallthru
          _
        // Predicated region
        $region65: #{tpu_custom_call.1} parent=47 // pred_check
          %p326 = pneg %p173
        $region66: #{tpu_custom_call.1} parent=47 // pred_check_branch
          %328 = sbr.rel (%p326) target = $region68
        $region67: #{tpu_custom_call.1} parent=47 // pred_region
          %329 = dma.done [#allocation10], 4096
        $region68: #{tpu_custom_call.1} parent=47 // pred_fallthru
          _
        %s330 = sand.u32 %s34, 1
        %s331 = scalar_lea.sflag [#allocation4], %s330
        %s332 = sand.u32 %s34, 1
        %s333 = smul.addr %s332, 256
        %s334 = scalar_lea.vmem [#allocation3], %s333
        %p335 = pneg %p47
        %p336 = pneg %p44
        %p337 = pneg %p68
        %p338 = pneg %p65
        %p339 = pneg %p89
        %p340 = pneg %p86
        %p341 = pneg %p110
        %p342 = pneg %p107
        %p343 = pneg %p131
        %p344 = pneg %p128
        %p345 = pneg %p152
        %p346 = pneg %p149
        %p347 = pneg %p173
        %p348 = pneg %p170
        %p349 = pneg %p199
        %p350 = pneg %p196
        %s351 = sand.u32 %s186, 1
        %s352 = scalar_lea.sflag [#allocation5], %s351
        %s353 = sand.u32 %s186, 1
        %s354 = smul.addr %s353, 256
        %s355 = scalar_lea.vmem [#allocation12], %s354
        %s356 = smul.u32 4, %s26
        %s357 = smul.u32 4, %s26
        %v359 = vld [vmem:[%s309] sm:$0xff]
        %v360 = vld [vmem:[%s309 + $0x8] sm:$0xff]
        %v361 = vld [vmem:[%s309 + $0x10] sm:$0xff]
        %v362 = vld [vmem:[%s309 + $0x18] sm:$0xff]
        %v363 = vld [vmem:[%s309 + $0x20] sm:$0xff]
        %v364 = vld [vmem:[%s309 + $0x28] sm:$0xff]
        %v365 = vld [vmem:[%s309 + $0x30] sm:$0xff]
        %v366 = vld [vmem:[%s309 + $0x38] sm:$0xff]
        %v367 = vld [vmem:[%s309 + $0x40] sm:$0xff]
        %v368 = vld [vmem:[%s309 + $0x48] sm:$0xff]
        %v369 = vld [vmem:[%s309 + $0x50] sm:$0xff]
        %v370 = vld [vmem:[%s309 + $0x58] sm:$0xff]
        %v371 = vld [vmem:[%s309 + $0x60] sm:$0xff]
        %v372 = vld [vmem:[%s309 + $0x68] sm:$0xff]
        %v373 = vld [vmem:[%s309 + $0x70] sm:$0xff]
        %v374 = vld [vmem:[%s309 + $0x78] sm:$0xff]
        %v375 = vld [vmem:[%s309 + $0x80] sm:$0xff]
        %v376 = vld [vmem:[%s309 + $0x88] sm:$0xff]
        %v377 = vld [vmem:[%s309 + $0x90] sm:$0xff]
        %v378 = vld [vmem:[%s309 + $0x98] sm:$0xff]
        %v379 = vld [vmem:[%s309 + $0xa0] sm:$0xff]
        %v380 = vld [vmem:[%s309 + $0xa8] sm:$0xff]
        %v381 = vld [vmem:[%s309 + $0xb0] sm:$0xff]
        %v382 = vld [vmem:[%s309 + $0xb8] sm:$0xff]
        %v383 = vld [vmem:[%s309 + $0xc0] sm:$0xff]
        %v384 = vld [vmem:[%s309 + $0xc8] sm:$0xff]
        %v385 = vld [vmem:[%s309 + $0xd0] sm:$0xff]
        %v386 = vld [vmem:[%s309 + $0xd8] sm:$0xff]
        %v387 = vld [vmem:[%s309 + $0xe0] sm:$0xff]
        %v388 = vld [vmem:[%s309 + $0xe8] sm:$0xff]
        %v389 = vld [vmem:[%s309 + $0xf0] sm:$0xff]
        %v390 = vld [vmem:[%s309 + $0xf8] sm:$0xff]
        %v391 = vpack.c.bf16 %v360, %v359
        %v392 = vpack.c.bf16 %v362, %v361
        %v393 = vpack.c.bf16 %v364, %v363
        %v394 = vpack.c.bf16 %v366, %v365
        %v395 = vpack.c.bf16 %v368, %v367
        %v396 = vpack.c.bf16 %v370, %v369
        %v397 = vpack.c.bf16 %v372, %v371
        %v398 = vpack.c.bf16 %v374, %v373
        %v399 = vpack.c.bf16 %v376, %v375
        %v400 = vpack.c.bf16 %v378, %v377
        %v401 = vpack.c.bf16 %v380, %v379
        %v402 = vpack.c.bf16 %v382, %v381
        %v403 = vpack.c.bf16 %v384, %v383
        %v404 = vpack.c.bf16 %v386, %v385
        %v405 = vpack.c.bf16 %v388, %v387
        %v406 = vpack.c.bf16 %v390, %v389
        %v407 = vld [vmem:[#allocation6] sm:$0xff]
        %v408 = vld [vmem:[#allocation6 + $0x8] sm:$0xff]
        %v409 = vld [vmem:[#allocation6 + $0x10] sm:$0xff]
        %v410 = vld [vmem:[#allocation6 + $0x18] sm:$0xff]
        %v411 = vld [vmem:[#allocation6 + $0x20] sm:$0xff]
        %v412 = vld [vmem:[#allocation6 + $0x28] sm:$0xff]
        %v413 = vld [vmem:[#allocation6 + $0x30] sm:$0xff]
        %v414 = vld [vmem:[#allocation6 + $0x38] sm:$0xff]
        %v415 = vld [vmem:[%s2] sm:$0x3]
        %v417 = vlaneseq
        %v418 = vshrl.u32 %v417, 7
        %v419 = vsub.s32 0, %v418
        %v420 = vrot.slane %v415, %v419
        %v421 = vlaneseq
        %v422 = vshrl.u32 %v421, 7
        %v423 = vsub.s32 1, %v422
        %v424 = vrot.slane %v415, %v423
        %v435 = vunpack.c.l.b16 %v407
        %v436 = vunpack.c.h.b16 %v407
        %v437 = vunpack.c.l.b16 %v408
        %v438 = vunpack.c.h.b16 %v408
        %v439 = vunpack.c.l.b16 %v409
        %v440 = vunpack.c.h.b16 %v409
        %v441 = vunpack.c.l.b16 %v410
        %v442 = vunpack.c.h.b16 %v410
        %v443 = vunpack.c.l.b16 %v411
        %v444 = vunpack.c.h.b16 %v411
        %v445 = vunpack.c.l.b16 %v412
        %v446 = vunpack.c.h.b16 %v412
        %v447 = vunpack.c.l.b16 %v413
        %v448 = vunpack.c.h.b16 %v413
        %v449 = vunpack.c.l.b16 %v414
        %v450 = vunpack.c.h.b16 %v414
        %v451 = vpack.c.b16 %v437, %v435
        %v452 = vpack.c.b16 %v438, %v436
        %v453 = vpack.c.b16 %v441, %v439
        %v454 = vpack.c.b16 %v442, %v440
        %v455 = vpack.c.b16 %v445, %v443
        %v456 = vpack.c.b16 %v446, %v444
        %v457 = vpack.c.b16 %v449, %v447
        %v458 = vpack.c.b16 %v450, %v448
        %vm467 = vcmask 523264
        %v469 = vsel %vm467, %v391, 0
        %v472 = vsel %vm467, %v392, 0
        %v475 = vsel %vm467, %v393, 0
        %v478 = vsel %vm467, %v394, 0
        %v481 = vsel %vm467, %v395, 0
        %v484 = vsel %vm467, %v396, 0
        %v487 = vsel %vm467, %v397, 0
        %v490 = vsel %vm467, %v398, 0
        %v493 = vsel %vm467, %v399, 0
        %v496 = vsel %vm467, %v400, 0
        %v499 = vsel %vm467, %v401, 0
        %v502 = vsel %vm467, %v402, 0
        %v505 = vsel %vm467, %v403, 0
        %v508 = vsel %vm467, %v404, 0
        %v511 = vsel %vm467, %v405, 0
        %v514 = vsel %vm467, %v406, 0
        %516 = vmatprep.subr.bf16.mxu0 %v452
        %517 = vmatpush1.bf16.msra.mxu0 %v451
        %518 = vmatprep.subr.bf16.mxu0 %v454
        %519 = vmatpush1.bf16.msra.mxu0 %v453
        %520 = vmatprep.subr.bf16.mxu0 %v456
        %521 = vmatpush1.bf16.msra.mxu0 %v455
        %522 = vmatprep.subr.bf16.mxu0 %v458
        %523 = vmatpush1.bf16.msra.mxu0 %v457
        %524 = vmatprep.subr.bf16.mxu0 0
        %525 = vmatpush1.bf16.msra.mxu0 0
        %526 = vmatprep.subr.bf16.mxu0 0
        %527 = vmatpush1.bf16.msra.mxu0 0
        %528 = vmatprep.subr.bf16.mxu0 0
        %529 = vmatpush1.bf16.msra.mxu0 0
        %530 = vmatprep.subr.bf16.mxu0 0
        %531 = vmatpush1.bf16.msra.mxu0 0
        %532 = vmatprep.subr.bf16.mxu0 0
        %533 = vmatpush1.bf16.msra.mxu0 0
        %534 = vmatprep.subr.bf16.mxu0 0
        %535 = vmatpush1.bf16.msra.mxu0 0
        %536 = vmatprep.subr.bf16.mxu0 0
        %537 = vmatpush1.bf16.msra.mxu0 0
        %538 = vmatprep.subr.bf16.mxu0 0
        %539 = vmatpush1.bf16.msra.mxu0 0
        %540 = vmatprep.subr.bf16.mxu0 0
        %541 = vmatpush1.bf16.msra.mxu0 0
        %542 = vmatprep.subr.bf16.mxu0 0
        %543 = vmatpush1.bf16.msra.mxu0 0
        %544 = vmatprep.subr.bf16.mxu0 0
        %545 = vmatpush1.bf16.msra.mxu0 0
        %546 = vmatprep.subr.bf16.mxu0 0
        %547 = vmatpush1.bf16.msra.mxu0 0
        %548 = vmatprep.mubr.bf16.mxu0 0
        %549 = vmatmul.mubr.bf16.gmra.mrb[0].mxu0 %v469
        %v550 = vpop.f32.mrb[0].mxu0
        %v551 = vadd.f32 %v420, %v550
        %v552 = vpop.f32.mrb[0].mxu0
        %v553 = vadd.f32 %v424, %v552
        %v554 = vpop.f32.mrb[0].mxu0
        %v555 = vadd.f32 %v420, %v554
        %v556 = vpop.f32.mrb[0].mxu0
        %v557 = vadd.f32 %v424, %v556
        %558 = vmatprep.mubr.bf16.mxu0 0
        %559 = vmatmul.mubr.bf16.gmra.mrb[0].mxu0 %v472
        %v560 = vpop.f32.mrb[0].mxu0
        %v561 = vadd.f32 %v420, %v560
        %v562 = vpop.f32.mrb[0].mxu0
        %v563 = vadd.f32 %v424, %v562
        %v564 = vpop.f32.mrb[0].mxu0
        %v565 = vadd.f32 %v420, %v564
        %v566 = vpop.f32.mrb[0].mxu0
        %v567 = vadd.f32 %v424, %v566
        %568 = vmatprep.mubr.bf16.mxu0 0
        %569 = vmatmul.mubr.bf16.gmra.mrb[0].mxu0 %v475
        %v570 = vpop.f32.mrb[0].mxu0
        %v571 = vadd.f32 %v420, %v570
        %v572 = vpop.f32.mrb[0].mxu0
        %v573 = vadd.f32 %v424, %v572
        %v574 = vpop.f32.mrb[0].mxu0
        %v575 = vadd.f32 %v420, %v574
        %v576 = vpop.f32.mrb[0].mxu0
        %v577 = vadd.f32 %v424, %v576
        %578 = vmatprep.mubr.bf16.mxu0 0
        %579 = vmatmul.mubr.bf16.gmra.mrb[0].mxu0 %v478
        %v580 = vpop.f32.mrb[0].mxu0
        %v581 = vadd.f32 %v420, %v580
        %v582 = vpop.f32.mrb[0].mxu0
        %v583 = vadd.f32 %v424, %v582
        %v584 = vpop.f32.mrb[0].mxu0
        %v585 = vadd.f32 %v420, %v584
        %v586 = vpop.f32.mrb[0].mxu0
        %v587 = vadd.f32 %v424, %v586
        %588 = vmatprep.mubr.bf16.mxu0 0
        %589 = vmatmul.mubr.bf16.gmra.mrb[0].mxu0 %v481
        %v590 = vpop.f32.mrb[0].mxu0
        %v591 = vadd.f32 %v420, %v590
        %v592 = vpop.f32.mrb[0].mxu0
        %v593 = vadd.f32 %v424, %v592
        %v594 = vpop.f32.mrb[0].mxu0
        %v595 = vadd.f32 %v420, %v594
        %v596 = vpop.f32.mrb[0].mxu0
        %v597 = vadd.f32 %v424, %v596
        %598 = vmatprep.mubr.bf16.mxu0 0
        %599 = vmatmul.mubr.bf16.gmra.mrb[0].mxu0 %v484
        %v600 = vpop.f32.mrb[0].mxu0
        %v601 = vadd.f32 %v420, %v600
        %v602 = vpop.f32.mrb[0].mxu0
        %v603 = vadd.f32 %v424, %v602
        %v604 = vpop.f32.mrb[0].mxu0
        %v605 = vadd.f32 %v420, %v604
        %v606 = vpop.f32.mrb[0].mxu0
        %v607 = vadd.f32 %v424, %v606
        %608 = vmatprep.mubr.bf16.mxu0 0
        %609 = vmatmul.mubr.bf16.gmra.mrb[0].mxu0 %v487
        %v610 = vpop.f32.mrb[0].mxu0
        %v611 = vadd.f32 %v420, %v610
        %v612 = vpop.f32.mrb[0].mxu0
        %v613 = vadd.f32 %v424, %v612
        %v614 = vpop.f32.mrb[0].mxu0
        %v615 = vadd.f32 %v420, %v614
        %v616 = vpop.f32.mrb[0].mxu0
        %v617 = vadd.f32 %v424, %v616
        %618 = vmatprep.mubr.bf16.mxu0 0
        %619 = vmatmul.mubr.bf16.gmra.mrb[0].mxu0 %v490
        %v620 = vpop.f32.mrb[0].mxu0
        %v621 = vadd.f32 %v420, %v620
        %v622 = vpop.f32.mrb[0].mxu0
        %v623 = vadd.f32 %v424, %v622
        %v624 = vpop.f32.mrb[0].mxu0
        %v625 = vadd.f32 %v420, %v624
        %v626 = vpop.f32.mrb[0].mxu0
        %v627 = vadd.f32 %v424, %v626
        %628 = vmatprep.mubr.bf16.mxu0 0
        %629 = vmatmul.mubr.bf16.gmra.mrb[0].mxu0 %v493
        %v630 = vpop.f32.mrb[0].mxu0
        %v631 = vadd.f32 %v420, %v630
        %v632 = vpop.f32.mrb[0].mxu0
        %v633 = vadd.f32 %v424, %v632
        %v634 = vpop.f32.mrb[0].mxu0
        %v635 = vadd.f32 %v420, %v634
        %v636 = vpop.f32.mrb[0].mxu0
        %v637 = vadd.f32 %v424, %v636
        %638 = vmatprep.mubr.bf16.mxu0 0
        %639 = vmatmul.mubr.bf16.gmra.mrb[0].mxu0 %v496
        %v640 = vpop.f32.mrb[0].mxu0
        %v641 = vadd.f32 %v420, %v640
        %v642 = vpop.f32.mrb[0].mxu0
        %v643 = vadd.f32 %v424, %v642
        %v644 = vpop.f32.mrb[0].mxu0
        %v645 = vadd.f32 %v420, %v644
        %v646 = vpop.f32.mrb[0].mxu0
        %v647 = vadd.f32 %v424, %v646
        %648 = vmatprep.mubr.bf16.mxu0 0
        %649 = vmatmul.mubr.bf16.gmra.mrb[0].mxu0 %v499
        %v650 = vpop.f32.mrb[0].mxu0
        %v651 = vadd.f32 %v420, %v650
        %v652 = vpop.f32.mrb[0].mxu0
        %v653 = vadd.f32 %v424, %v652
        %v654 = vpop.f32.mrb[0].mxu0
        %v655 = vadd.f32 %v420, %v654
        %v656 = vpop.f32.mrb[0].mxu0
        %v657 = vadd.f32 %v424, %v656
        %658 = vmatprep.mubr.bf16.mxu0 0
        %659 = vmatmul.mubr.bf16.gmra.mrb[0].mxu0 %v502
        %v660 = vpop.f32.mrb[0].mxu0
        %v661 = vadd.f32 %v420, %v660
        %v662 = vpop.f32.mrb[0].mxu0
        %v663 = vadd.f32 %v424, %v662
        %v664 = vpop.f32.mrb[0].mxu0
        %v665 = vadd.f32 %v420, %v664
        %v666 = vpop.f32.mrb[0].mxu0
        %v667 = vadd.f32 %v424, %v666
        %668 = vmatprep.mubr.bf16.mxu0 0
        %669 = vmatmul.mubr.bf16.gmra.mrb[0].mxu0 %v505
        %v670 = vpop.f32.mrb[0].mxu0
        %v671 = vadd.f32 %v420, %v670
        %v672 = vpop.f32.mrb[0].mxu0
        %v673 = vadd.f32 %v424, %v672
        %v674 = vpop.f32.mrb[0].mxu0
        %v675 = vadd.f32 %v420, %v674
        %v676 = vpop.f32.mrb[0].mxu0
        %v677 = vadd.f32 %v424, %v676
        %678 = vmatprep.mubr.bf16.mxu0 0
        %679 = vmatmul.mubr.bf16.gmra.mrb[0].mxu0 %v508
        %v680 = vpop.f32.mrb[0].mxu0
        %v681 = vadd.f32 %v420, %v680
        %v682 = vpop.f32.mrb[0].mxu0
        %v683 = vadd.f32 %v424, %v682
        %v684 = vpop.f32.mrb[0].mxu0
        %v685 = vadd.f32 %v420, %v684
        %v686 = vpop.f32.mrb[0].mxu0
        %v687 = vadd.f32 %v424, %v686
        %688 = vmatprep.mubr.bf16.mxu0 0
        %689 = vmatmul.mubr.bf16.gmra.mrb[0].mxu0 %v511
        %v690 = vpop.f32.mrb[0].mxu0
        %v691 = vadd.f32 %v420, %v690
        %v692 = vpop.f32.mrb[0].mxu0
        %v693 = vadd.f32 %v424, %v692
        %v694 = vpop.f32.mrb[0].mxu0
        %v695 = vadd.f32 %v420, %v694
        %v696 = vpop.f32.mrb[0].mxu0
        %v697 = vadd.f32 %v424, %v696
        %698 = vmatprep.mubr.bf16.mxu0 0
        %699 = vmatmul.mubr.bf16.gmra.mrb[0].mxu0 %v514
        %v700 = vpop.f32.mrb[0].mxu0
        %v701 = vadd.f32 %v420, %v700
        %v702 = vpop.f32.mrb[0].mxu0
        %v703 = vadd.f32 %v424, %v702
        %v704 = vpop.f32.mrb[0].mxu0
        %v705 = vadd.f32 %v420, %v704
        %v706 = vpop.f32.mrb[0].mxu0
        %v707 = vadd.f32 %v424, %v706
        %708 = vdwg.mxu0
        %v709 = vld [vmem:[#allocation11] sm:$0xff]
        %v710 = vld [vmem:[#allocation11 + $0x8] sm:$0xff]
        %v711 = vld [vmem:[#allocation11 + $0x10] sm:$0xff]
        %v712 = vld [vmem:[#allocation11 + $0x18] sm:$0xff]
        %v713 = vld [vmem:[#allocation11 + $0x20] sm:$0xff]
        %v714 = vld [vmem:[#allocation11 + $0x28] sm:$0xff]
        %v715 = vld [vmem:[#allocation11 + $0x30] sm:$0xff]
        %v716 = vld [vmem:[#allocation11 + $0x38] sm:$0xff]
        %v717 = vld [vmem:[#allocation11 + $0x40] sm:$0xff]
        %v718 = vld [vmem:[#allocation11 + $0x48] sm:$0xff]
        %v719 = vld [vmem:[#allocation11 + $0x50] sm:$0xff]
        %v720 = vld [vmem:[#allocation11 + $0x58] sm:$0xff]
        %v721 = vld [vmem:[#allocation11 + $0x60] sm:$0xff]
        %v722 = vld [vmem:[#allocation11 + $0x68] sm:$0xff]
        %v723 = vld [vmem:[#allocation11 + $0x70] sm:$0xff]
        %v724 = vld [vmem:[#allocation11 + $0x78] sm:$0xff]
        %v725 = vld [vmem:[#allocation11 + $0x80] sm:$0xff]
        %v726 = vld [vmem:[#allocation11 + $0x88] sm:$0xff]
        %v727 = vld [vmem:[#allocation11 + $0x90] sm:$0xff]
        %v728 = vld [vmem:[#allocation11 + $0x98] sm:$0xff]
        %v729 = vld [vmem:[#allocation11 + $0xa0] sm:$0xff]
        %v730 = vld [vmem:[#allocation11 + $0xa8] sm:$0xff]
        %v731 = vld [vmem:[#allocation11 + $0xb0] sm:$0xff]
        %v732 = vld [vmem:[#allocation11 + $0xb8] sm:$0xff]
        %v733 = vld [vmem:[#allocation11 + $0xc0] sm:$0xff]
        %v734 = vld [vmem:[#allocation11 + $0xc8] sm:$0xff]
        %v735 = vld [vmem:[#allocation11 + $0xd0] sm:$0xff]
        %v736 = vld [vmem:[#allocation11 + $0xd8] sm:$0xff]
        %v737 = vld [vmem:[#allocation11 + $0xe0] sm:$0xff]
        %v738 = vld [vmem:[#allocation11 + $0xe8] sm:$0xff]
        %v739 = vld [vmem:[#allocation11 + $0xf0] sm:$0xff]
        %v740 = vld [vmem:[#allocation11 + $0xf8] sm:$0xff]
        %v741 = vmul.f32 %v551, 0.17677669
        %v742 = vmul.f32 %v555, 0.17677669
        %v743 = vmul.f32 %v561, 0.17677669
        %v744 = vmul.f32 %v565, 0.17677669
        %v745 = vmul.f32 %v571, 0.17677669
        %v746 = vmul.f32 %v575, 0.17677669
        %v747 = vmul.f32 %v581, 0.17677669
        %v748 = vmul.f32 %v585, 0.17677669
        %v749 = vmul.f32 %v591, 0.17677669
        %v750 = vmul.f32 %v595, 0.17677669
        %v751 = vmul.f32 %v601, 0.17677669
        %v752 = vmul.f32 %v605, 0.17677669
        %v753 = vmul.f32 %v611, 0.17677669
        %v754 = vmul.f32 %v615, 0.17677669
        %v755 = vmul.f32 %v621, 0.17677669
        %v756 = vmul.f32 %v625, 0.17677669
        %v757 = vmul.f32 %v631, 0.17677669
        %v758 = vmul.f32 %v635, 0.17677669
        %v759 = vmul.f32 %v641, 0.17677669
        %v760 = vmul.f32 %v645, 0.17677669
        %v761 = vmul.f32 %v651, 0.17677669
        %v762 = vmul.f32 %v655, 0.17677669
        %v763 = vmul.f32 %v661, 0.17677669
        %v764 = vmul.f32 %v665, 0.17677669
        %v765 = vmul.f32 %v671, 0.17677669
        %v766 = vmul.f32 %v675, 0.17677669
        %v767 = vmul.f32 %v681, 0.17677669
        %v768 = vmul.f32 %v685, 0.17677669
        %v769 = vmul.f32 %v691, 0.17677669
        %v770 = vmul.f32 %v695, 0.17677669
        %v771 = vmul.f32 %v701, 0.17677669
        %v772 = vmul.f32 %v705, 0.17677669
        %v773 = vpack.c.bf16 %v742, %v741
        %v774 = vpack.c.bf16 %v744, %v743
        %v775 = vpack.c.bf16 %v746, %v745
        %v776 = vpack.c.bf16 %v748, %v747
        %v777 = vpack.c.bf16 %v750, %v749
        %v778 = vpack.c.bf16 %v752, %v751
        %v779 = vpack.c.bf16 %v754, %v753
        %v780 = vpack.c.bf16 %v756, %v755
        %v781 = vpack.c.bf16 %v758, %v757
        %v782 = vpack.c.bf16 %v760, %v759
        %v783 = vpack.c.bf16 %v762, %v761
        %v784 = vpack.c.bf16 %v764, %v763
        %v785 = vpack.c.bf16 %v766, %v765
        %v786 = vpack.c.bf16 %v768, %v767
        %v787 = vpack.c.bf16 %v770, %v769
        %v788 = vpack.c.bf16 %v772, %v771
        %v789 = vpack.c.bf16 %v555, %v551
        %v790 = vpack.c.bf16 %v565, %v561
        %v791 = vpack.c.bf16 %v575, %v571
        %v792 = vpack.c.bf16 %v585, %v581
        %v793 = vpack.c.bf16 %v595, %v591
        %v794 = vpack.c.bf16 %v605, %v601
        %v795 = vpack.c.bf16 %v615, %v611
        %v796 = vpack.c.bf16 %v625, %v621
        %v797 = vpack.c.bf16 %v635, %v631
        %v798 = vpack.c.bf16 %v645, %v641
        %v799 = vpack.c.bf16 %v655, %v651
        %v800 = vpack.c.bf16 %v665, %v661
        %v801 = vpack.c.bf16 %v675, %v671
        %v802 = vpack.c.bf16 %v685, %v681
        %v803 = vpack.c.bf16 %v695, %v691
        %v804 = vpack.c.bf16 %v705, %v701
        %v805 = vpack.c.bf16 %v557, %v553
        %v806 = vpack.c.bf16 %v567, %v563
        %v807 = vpack.c.bf16 %v577, %v573
        %v808 = vpack.c.bf16 %v587, %v583
        %v809 = vpack.c.bf16 %v597, %v593
        %v810 = vpack.c.bf16 %v607, %v603
        %v811 = vpack.c.bf16 %v617, %v613
        %v812 = vpack.c.bf16 %v627, %v623
        %v813 = vpack.c.bf16 %v637, %v633
        %v814 = vpack.c.bf16 %v647, %v643
        %v815 = vpack.c.bf16 %v657, %v653
        %v816 = vpack.c.bf16 %v667, %v663
        %v817 = vpack.c.bf16 %v677, %v673
        %v818 = vpack.c.bf16 %v687, %v683
        %v819 = vpack.c.bf16 %v697, %v693
        %v820 = vpack.c.bf16 %v707, %v703
        %v821 = vld [vmem:[#allocation9] sm:$0xff]
        %v822 = vld [vmem:[#allocation9 + $0x8] sm:$0xff]
        %v823 = vld [vmem:[#allocation9 + $0x10] sm:$0xff]
        %v824 = vld [vmem:[#allocation9 + $0x18] sm:$0xff]
        %v825 = vld [vmem:[#allocation9 + $0x20] sm:$0xff]
        %v826 = vld [vmem:[#allocation9 + $0x28] sm:$0xff]
        %v827 = vld [vmem:[#allocation9 + $0x30] sm:$0xff]
        %v828 = vld [vmem:[#allocation9 + $0x38] sm:$0xff]
        %833 = vrot.lane.b32.xlu0 %v789, 64
        %v834 = vpop.permute.xlu0 %833
        %835 = vrot.lane.b32.xlu0 %v790, 64
        %v836 = vpop.permute.xlu0 %835
        %837 = vrot.lane.b32.xlu0 %v791, 64
        %v838 = vpop.permute.xlu0 %837
        %839 = vrot.lane.b32.xlu0 %v792, 64
        %v840 = vpop.permute.xlu0 %839
        %vm841 = vcmask 261120
        %v843 = vsel %vm841, %v773, 0
        %v846 = vsel %vm841, %v774, 0
        %v849 = vsel %vm841, %v775, 0
        %v852 = vsel %vm841, %v776, 0
        %v855 = vsel %vm841, %v834, 0
        %v858 = vsel %vm841, %v836, 0
        %v861 = vsel %vm841, %v838, 0
        %v864 = vsel %vm841, %v840, 0
        %866 = vmatprep.subr.bf16.mxu0 0
        %867 = vmatpush1.bf16.xpose.msra.mxu0 %v855
        %868 = vmatprep.subr.bf16.mxu0 0
        %869 = vmatpush1.bf16.xpose.msra.mxu0 %v858
        %870 = vmatprep.subr.bf16.mxu0 0
        %871 = vmatpush1.bf16.xpose.msra.mxu0 %v861
        %872 = vmatprep.subr.bf16.mxu0 0
        %873 = vmatpush1.bf16.xpose.msra.mxu0 %v864
        %874 = vmatprep.subr.bf16.mxu0 0
        %875 = vmatpush1.bf16.xpose.msra.mxu0 0
        %876 = vmatprep.subr.bf16.mxu0 0
        %877 = vmatpush1.bf16.xpose.msra.mxu0 0
        %878 = vmatprep.subr.bf16.mxu0 0
        %879 = vmatpush1.bf16.xpose.msra.mxu0 0
        %880 = vmatprep.subr.bf16.mxu0 0
        %881 = vmatpush1.bf16.xpose.msra.mxu0 0
        %882 = vmatprep.subr.bf16.mxu0 0
        %883 = vmatpush1.bf16.xpose.msra.mxu0 0
        %884 = vmatprep.subr.bf16.mxu0 0
        %885 = vmatpush1.bf16.xpose.msra.mxu0 0
        %886 = vmatprep.subr.bf16.mxu0 0
        %887 = vmatpush1.bf16.xpose.msra.mxu0 0
        %888 = vmatprep.subr.bf16.mxu0 0
        %889 = vmatpush1.bf16.xpose.msra.mxu0 0
        %890 = vmatprep.subr.bf16.mxu0 0
        %891 = vmatpush1.bf16.xpose.msra.mxu0 0
        %892 = vmatprep.subr.bf16.mxu0 0
        %893 = vmatpush1.bf16.xpose.msra.mxu0 0
        %894 = vmatprep.subr.bf16.mxu0 0
        %895 = vmatpush1.bf16.xpose.msra.mxu0 0
        %896 = vmatprep.subr.bf16.mxu0 0
        %897 = vmatpush1.bf16.xpose.msra.mxu0 0
        %898 = vmatprep.mubr.bf16.mxu0 0
        %899 = vmatmul.mubr.bf16.gmra.mrb[0].mxu0 %v843
        %v900 = vpop.f32.mrb[0].mxu0
        %v901 = vadd.f32 %v821, %v900
        %v902 = vpop.f32.mrb[0].mxu0
        %v903 = vpop.f32.mrb[0].mxu0
        %v904 = vadd.f32 %v822, %v903
        %v905 = vpop.f32.mrb[0].mxu0
        %906 = vmatprep.mubr.bf16.mxu0 0
        %907 = vmatmul.mubr.bf16.gmra.mrb[0].mxu0 %v846
        %v908 = vpop.f32.mrb[0].mxu0
        %v909 = vadd.f32 %v823, %v908
        %v910 = vpop.f32.mrb[0].mxu0
        %v911 = vpop.f32.mrb[0].mxu0
        %v912 = vadd.f32 %v824, %v911
        %v913 = vpop.f32.mrb[0].mxu0
        %914 = vmatprep.mubr.bf16.mxu0 0
        %915 = vmatmul.mubr.bf16.gmra.mrb[0].mxu0 %v849
        %v916 = vpop.f32.mrb[0].mxu0
        %v917 = vadd.f32 %v825, %v916
        %v918 = vpop.f32.mrb[0].mxu0
        %v919 = vpop.f32.mrb[0].mxu0
        %v920 = vadd.f32 %v826, %v919
        %v921 = vpop.f32.mrb[0].mxu0
        %922 = vmatprep.mubr.bf16.mxu0 0
        %923 = vmatmul.mubr.bf16.gmra.mrb[0].mxu0 %v852
        %v924 = vpop.f32.mrb[0].mxu0
        %v925 = vadd.f32 %v827, %v924
        %v926 = vpop.f32.mrb[0].mxu0
        %v927 = vpop.f32.mrb[0].mxu0
        %v928 = vadd.f32 %v828, %v927
        %v929 = vpop.f32.mrb[0].mxu0
        %930 = vdwg.mxu0
        %935 = vrot.lane.b32.xlu0 %v793, 64
        %v936 = vpop.permute.xlu0 %935
        %937 = vrot.lane.b32.xlu0 %v794, 64
        %v938 = vpop.permute.xlu0 %937
        %939 = vrot.lane.b32.xlu0 %v795, 64
        %v940 = vpop.permute.xlu0 %939
        %941 = vrot.lane.b32.xlu0 %v796, 64
        %v942 = vpop.permute.xlu0 %941
        %v944 = vsel %vm841, %v777, 0
        %v947 = vsel %vm841, %v778, 0
        %v950 = vsel %vm841, %v779, 0
        %v953 = vsel %vm841, %v780, 0
        %v956 = vsel %vm841, %v936, 0
        %v959 = vsel %vm841, %v938, 0
        %v962 = vsel %vm841, %v940, 0
        %v965 = vsel %vm841, %v942, 0
        %967 = vmatprep.subr.bf16.mxu0 0
        %968 = vmatpush1.bf16.xpose.msra.mxu0 %v956
        %969 = vmatprep.subr.bf16.mxu0 0
        %970 = vmatpush1.bf16.xpose.msra.mxu0 %v959
        %971 = vmatprep.subr.bf16.mxu0 0
        %972 = vmatpush1.bf16.xpose.msra.mxu0 %v962
        %973 = vmatprep.subr.bf16.mxu0 0
        %974 = vmatpush1.bf16.xpose.msra.mxu0 %v965
        %975 = vmatprep.subr.bf16.mxu0 0
        %976 = vmatpush1.bf16.xpose.msra.mxu0 0
        %977 = vmatprep.subr.bf16.mxu0 0
        %978 = vmatpush1.bf16.xpose.msra.mxu0 0
        %979 = vmatprep.subr.bf16.mxu0 0
        %980 = vmatpush1.bf16.xpose.msra.mxu0 0
        %981 = vmatprep.subr.bf16.mxu0 0
        %982 = vmatpush1.bf16.xpose.msra.mxu0 0
        %983 = vmatprep.subr.bf16.mxu0 0
        %984 = vmatpush1.bf16.xpose.msra.mxu0 0
        %985 = vmatprep.subr.bf16.mxu0 0
        %986 = vmatpush1.bf16.xpose.msra.mxu0 0
        %987 = vmatprep.subr.bf16.mxu0 0
        %988 = vmatpush1.bf16.xpose.msra.mxu0 0
        %989 = vmatprep.subr.bf16.mxu0 0
        %990 = vmatpush1.bf16.xpose.msra.mxu0 0
        %991 = vmatprep.subr.bf16.mxu0 0
        %992 = vmatpush1.bf16.xpose.msra.mxu0 0
        %993 = vmatprep.subr.bf16.mxu0 0
        %994 = vmatpush1.bf16.xpose.msra.mxu0 0
        %995 = vmatprep.subr.bf16.mxu0 0
        %996 = vmatpush1.bf16.xpose.msra.mxu0 0
        %997 = vmatprep.subr.bf16.mxu0 0
        %998 = vmatpush1.bf16.xpose.msra.mxu0 0
        %999 = vmatprep.mubr.bf16.mxu0 0
        %1000 = vmatmul.mubr.bf16.gmra.mrb[0].mxu0 %v944
        %v1001 = vpop.f32.mrb[0].mxu0
        %v1002 = vadd.f32 %v821, %v1001
        %v1003 = vpop.f32.mrb[0].mxu0
        %v1004 = vpop.f32.mrb[0].mxu0
        %v1005 = vadd.f32 %v822, %v1004
        %v1006 = vpop.f32.mrb[0].mxu0
        %1007 = vmatprep.mubr.bf16.mxu0 0
        %1008 = vmatmul.mubr.bf16.gmra.mrb[0].mxu0 %v947
        %v1009 = vpop.f32.mrb[0].mxu0
        %v1010 = vadd.f32 %v823, %v1009
        %v1011 = vpop.f32.mrb[0].mxu0
        %v1012 = vpop.f32.mrb[0].mxu0
        %v1013 = vadd.f32 %v824, %v1012
        %v1014 = vpop.f32.mrb[0].mxu0
        %1015 = vmatprep.mubr.bf16.mxu0 0
        %1016 = vmatmul.mubr.bf16.gmra.mrb[0].mxu0 %v950
        %v1017 = vpop.f32.mrb[0].mxu0
        %v1018 = vadd.f32 %v825, %v1017
        %v1019 = vpop.f32.mrb[0].mxu0
        %v1020 = vpop.f32.mrb[0].mxu0
        %v1021 = vadd.f32 %v826, %v1020
        %v1022 = vpop.f32.mrb[0].mxu0
        %1023 = vmatprep.mubr.bf16.mxu0 0
        %1024 = vmatmul.mubr.bf16.gmra.mrb[0].mxu0 %v953
        %v1025 = vpop.f32.mrb[0].mxu0
        %v1026 = vadd.f32 %v827, %v1025
        %v1027 = vpop.f32.mrb[0].mxu0
        %v1028 = vpop.f32.mrb[0].mxu0
        %v1029 = vadd.f32 %v828, %v1028
        %v1030 = vpop.f32.mrb[0].mxu0
        %1031 = vdwg.mxu0
        %1036 = vrot.lane.b32.xlu0 %v797, 64
        %v1037 = vpop.permute.xlu0 %1036
        %1038 = vrot.lane.b32.xlu0 %v798, 64
        %v1039 = vpop.permute.xlu0 %1038
        %1040 = vrot.lane.b32.xlu0 %v799, 64
        %v1041 = vpop.permute.xlu0 %1040
        %1042 = vrot.lane.b32.xlu0 %v800, 64
        %v1043 = vpop.permute.xlu0 %1042
        %v1045 = vsel %vm841, %v781, 0
        %v1048 = vsel %vm841, %v782, 0
        %v1051 = vsel %vm841, %v783, 0
        %v1054 = vsel %vm841, %v784, 0
        %v1057 = vsel %vm841, %v1037, 0
        %v1060 = vsel %vm841, %v1039, 0
        %v1063 = vsel %vm841, %v1041, 0
        %v1066 = vsel %vm841, %v1043, 0
        %1068 = vmatprep.subr.bf16.mxu0 0
        %1069 = vmatpush1.bf16.xpose.msra.mxu0 %v1057
        %1070 = vmatprep.subr.bf16.mxu0 0
        %1071 = vmatpush1.bf16.xpose.msra.mxu0 %v1060
        %1072 = vmatprep.subr.bf16.mxu0 0
        %1073 = vmatpush1.bf16.xpose.msra.mxu0 %v1063
        %1074 = vmatprep.subr.bf16.mxu0 0
        %1075 = vmatpush1.bf16.xpose.msra.mxu0 %v1066
        %1076 = vmatprep.subr.bf16.mxu0 0
        %1077 = vmatpush1.bf16.xpose.msra.mxu0 0
        %1078 = vmatprep.subr.bf16.mxu0 0
        %1079 = vmatpush1.bf16.xpose.msra.mxu0 0
        %1080 = vmatprep.subr.bf16.mxu0 0
        %1081 = vmatpush1.bf16.xpose.msra.mxu0 0
        %1082 = vmatprep.subr.bf16.mxu0 0
        %1083 = vmatpush1.bf16.xpose.msra.mxu0 0
        %1084 = vmatprep.subr.bf16.mxu0 0
        %1085 = vmatpush1.bf16.xpose.msra.mxu0 0
        %1086 = vmatprep.subr.bf16.mxu0 0
        %1087 = vmatpush1.bf16.xpose.msra.mxu0 0
        %1088 = vmatprep.subr.bf16.mxu0 0
        %1089 = vmatpush1.bf16.xpose.msra.mxu0 0
        %1090 = vmatprep.subr.bf16.mxu0 0
        %1091 = vmatpush1.bf16.xpose.msra.mxu0 0
        %1092 = vmatprep.subr.bf16.mxu0 0
        %1093 = vmatpush1.bf16.xpose.msra.mxu0 0
        %1094 = vmatprep.subr.bf16.mxu0 0
        %1095 = vmatpush1.bf16.xpose.msra.mxu0 0
        %1096 = vmatprep.subr.bf16.mxu0 0
        %1097 = vmatpush1.bf16.xpose.msra.mxu0 0
        %1098 = vmatprep.subr.bf16.mxu0 0
        %1099 = vmatpush1.bf16.xpose.msra.mxu0 0
        %1100 = vmatprep.mubr.bf16.mxu0 0
        %1101 = vmatmul.mubr.bf16.gmra.mrb[0].mxu0 %v1045
        %v1102 = vpop.f32.mrb[0].mxu0
        %v1103 = vadd.f32 %v821, %v1102
        %v1104 = vpop.f32.mrb[0].mxu0
        %v1105 = vpop.f32.mrb[0].mxu0
        %v1106 = vadd.f32 %v822, %v1105
        %v1107 = vpop.f32.mrb[0].mxu0
        %1108 = vmatprep.mubr.bf16.mxu0 0
        %1109 = vmatmul.mubr.bf16.gmra.mrb[0].mxu0 %v1048
        %v1110 = vpop.f32.mrb[0].mxu0
        %v1111 = vadd.f32 %v823, %v1110
        %v1112 = vpop.f32.mrb[0].mxu0
        %v1113 = vpop.f32.mrb[0].mxu0
        %v1114 = vadd.f32 %v824, %v1113
        %v1115 = vpop.f32.mrb[0].mxu0
        %1116 = vmatprep.mubr.bf16.mxu0 0
        %1117 = vmatmul.mubr.bf16.gmra.mrb[0].mxu0 %v1051
        %v1118 = vpop.f32.mrb[0].mxu0
        %v1119 = vadd.f32 %v825, %v1118
        %v1120 = vpop.f32.mrb[0].mxu0
        %v1121 = vpop.f32.mrb[0].mxu0
        %v1122 = vadd.f32 %v826, %v1121
        %v1123 = vpop.f32.mrb[0].mxu0
        %1124 = vmatprep.mubr.bf16.mxu0 0
        %1125 = vmatmul.mubr.bf16.gmra.mrb[0].mxu0 %v1054
        %v1126 = vpop.f32.mrb[0].mxu0
        %v1127 = vadd.f32 %v827, %v1126
        %v1128 = vpop.f32.mrb[0].mxu0
        %v1129 = vpop.f32.mrb[0].mxu0
        %v1130 = vadd.f32 %v828, %v1129
        %v1131 = vpop.f32.mrb[0].mxu0
        %1132 = vdwg.mxu0
        %1137 = vrot.lane.b32.xlu0 %v801, 64
        %v1138 = vpop.permute.xlu0 %1137
        %1139 = vrot.lane.b32.xlu0 %v802, 64
        %v1140 = vpop.permute.xlu0 %1139
        %1141 = vrot.lane.b32.xlu0 %v803, 64
        %v1142 = vpop.permute.xlu0 %1141
        %1143 = vrot.lane.b32.xlu0 %v804, 64
        %v1144 = vpop.permute.xlu0 %1143
        %v1146 = vsel %vm841, %v785, 0
        %v1149 = vsel %vm841, %v786, 0
        %v1152 = vsel %vm841, %v787, 0
        %v1155 = vsel %vm841, %v788, 0
        %v1158 = vsel %vm841, %v1138, 0
        %v1161 = vsel %vm841, %v1140, 0
        %v1164 = vsel %vm841, %v1142, 0
        %v1167 = vsel %vm841, %v1144, 0
        %1169 = vmatprep.subr.bf16.mxu0 0
        %1170 = vmatpush1.bf16.xpose.msra.mxu0 %v1158
        %1171 = vmatprep.subr.bf16.mxu0 0
        %1172 = vmatpush1.bf16.xpose.msra.mxu0 %v1161
        %1173 = vmatprep.subr.bf16.mxu0 0
        %1174 = vmatpush1.bf16.xpose.msra.mxu0 %v1164
        %1175 = vmatprep.subr.bf16.mxu0 0
        %1176 = vmatpush1.bf16.xpose.msra.mxu0 %v1167
        %1177 = vmatprep.subr.bf16.mxu0 0
        %1178 = vmatpush1.bf16.xpose.msra.mxu0 0
        %1179 = vmatprep.subr.bf16.mxu0 0
        %1180 = vmatpush1.bf16.xpose.msra.mxu0 0
        %1181 = vmatprep.subr.bf16.mxu0 0
        %1182 = vmatpush1.bf16.xpose.msra.mxu0 0
        %1183 = vmatprep.subr.bf16.mxu0 0
        %1184 = vmatpush1.bf16.xpose.msra.mxu0 0
        %1185 = vmatprep.subr.bf16.mxu0 0
        %1186 = vmatpush1.bf16.xpose.msra.mxu0 0
        %1187 = vmatprep.subr.bf16.mxu0 0
        %1188 = vmatpush1.bf16.xpose.msra.mxu0 0
        %1189 = vmatprep.subr.bf16.mxu0 0
        %1190 = vmatpush1.bf16.xpose.msra.mxu0 0
        %1191 = vmatprep.subr.bf16.mxu0 0
        %1192 = vmatpush1.bf16.xpose.msra.mxu0 0
        %1193 = vmatprep.subr.bf16.mxu0 0
        %1194 = vmatpush1.bf16.xpose.msra.mxu0 0
        %1195 = vmatprep.subr.bf16.mxu0 0
        %1196 = vmatpush1.bf16.xpose.msra.mxu0 0
        %1197 = vmatprep.subr.bf16.mxu0 0
        %1198 = vmatpush1.bf16.xpose.msra.mxu0 0
        %1199 = vmatprep.subr.bf16.mxu0 0
        %1200 = vmatpush1.bf16.xpose.msra.mxu0 0
        %1201 = vmatprep.mubr.bf16.mxu0 0
        %1202 = vmatmul.mubr.bf16.gmra.mrb[0].mxu0 %v1146
        %v1203 = vpop.f32.mrb[0].mxu0
        %v1204 = vadd.f32 %v821, %v1203
        %v1205 = vpop.f32.mrb[0].mxu0
        %v1206 = vpop.f32.mrb[0].mxu0
        %v1207 = vadd.f32 %v822, %v1206
        %v1208 = vpop.f32.mrb[0].mxu0
        %1209 = vmatprep.mubr.bf16.mxu0 0
        %1210 = vmatmul.mubr.bf16.gmra.mrb[0].mxu0 %v1149
        %v1211 = vpop.f32.mrb[0].mxu0
        %v1212 = vadd.f32 %v823, %v1211
        %v1213 = vpop.f32.mrb[0].mxu0
        %v1214 = vpop.f32.mrb[0].mxu0
        %v1215 = vadd.f32 %v824, %v1214
        %v1216 = vpop.f32.mrb[0].mxu0
        %1217 = vmatprep.mubr.bf16.mxu0 0
        %1218 = vmatmul.mubr.bf16.gmra.mrb[0].mxu0 %v1152
        %v1219 = vpop.f32.mrb[0].mxu0
        %v1220 = vadd.f32 %v825, %v1219
        %v1221 = vpop.f32.mrb[0].mxu0
        %v1222 = vpop.f32.mrb[0].mxu0
        %v1223 = vadd.f32 %v826, %v1222
        %v1224 = vpop.f32.mrb[0].mxu0
        %1225 = vmatprep.mubr.bf16.mxu0 0
        %1226 = vmatmul.mubr.bf16.gmra.mrb[0].mxu0 %v1155
        %v1227 = vpop.f32.mrb[0].mxu0
        %v1228 = vadd.f32 %v827, %v1227
        %v1229 = vpop.f32.mrb[0].mxu0
        %v1230 = vpop.f32.mrb[0].mxu0
        %v1231 = vadd.f32 %v828, %v1230
        %v1232 = vpop.f32.mrb[0].mxu0
        %1233 = vdwg.mxu0
        %v1234 = vadd.f32 %v901, %v709
        %v1235 = vadd.f32 %v904, %v710
        %v1236 = vadd.f32 %v909, %v711
        %v1237 = vadd.f32 %v912, %v712
        %v1238 = vadd.f32 %v917, %v713
        %v1239 = vadd.f32 %v920, %v714
        %v1240 = vadd.f32 %v925, %v715
        %v1241 = vadd.f32 %v928, %v716
        %v1242 = vadd.f32 %v1002, %v717
        %v1243 = vadd.f32 %v1005, %v718
        %v1244 = vadd.f32 %v1010, %v719
        %v1245 = vadd.f32 %v1013, %v720
        %v1246 = vadd.f32 %v1018, %v721
        %v1247 = vadd.f32 %v1021, %v722
        %v1248 = vadd.f32 %v1026, %v723
        %v1249 = vadd.f32 %v1029, %v724
        %v1250 = vadd.f32 %v1103, %v725
        %v1251 = vadd.f32 %v1106, %v726
        %v1252 = vadd.f32 %v1111, %v727
        %v1253 = vadd.f32 %v1114, %v728
        %v1254 = vadd.f32 %v1119, %v729
        %v1255 = vadd.f32 %v1122, %v730
        %v1256 = vadd.f32 %v1127, %v731
        %v1257 = vadd.f32 %v1130, %v732
        %v1258 = vadd.f32 %v1204, %v733
        %v1259 = vadd.f32 %v1207, %v734
        %v1260 = vadd.f32 %v1212, %v735
        %v1261 = vadd.f32 %v1215, %v736
        %v1262 = vadd.f32 %v1220, %v737
        %v1263 = vadd.f32 %v1223, %v738
        %v1264 = vadd.f32 %v1228, %v739
        %v1265 = vadd.f32 %v1231, %v740
        %v1266 = vsel %vm467, %v1234, -inf
        %1267 = vmax.xlane.f32.xlu0 %v1266
        %v1268 = vpop.xlane.xlu0 %1267
        %v1269 = vsel %vm467, %v1235, -inf
        %1270 = vmax.xlane.f32.xlu0 %v1269
        %v1271 = vpop.xlane.xlu0 %1270
        %v1272 = vsel %vm467, %v1236, -inf
        %1273 = vmax.xlane.f32.xlu0 %v1272
        %v1274 = vpop.xlane.xlu0 %1273
        %v1275 = vsel %vm467, %v1237, -inf
        %1276 = vmax.xlane.f32.xlu0 %v1275
        %v1277 = vpop.xlane.xlu0 %1276
        %v1278 = vsel %vm467, %v1238, -inf
        %1279 = vmax.xlane.f32.xlu0 %v1278
        %v1280 = vpop.xlane.xlu0 %1279
        %v1281 = vsel %vm467, %v1239, -inf
        %1282 = vmax.xlane.f32.xlu0 %v1281
        %v1283 = vpop.xlane.xlu0 %1282
        %v1284 = vsel %vm467, %v1240, -inf
        %1285 = vmax.xlane.f32.xlu0 %v1284
        %v1286 = vpop.xlane.xlu0 %1285
        %v1287 = vsel %vm467, %v1241, -inf
        %1288 = vmax.xlane.f32.xlu0 %v1287
        %v1289 = vpop.xlane.xlu0 %1288
        %v1290 = vsel %vm467, %v1242, -inf
        %1291 = vmax.xlane.f32.xlu0 %v1290
        %v1292 = vpop.xlane.xlu0 %1291
        %v1293 = vsel %vm467, %v1243, -inf
        %1294 = vmax.xlane.f32.xlu0 %v1293
        %v1295 = vpop.xlane.xlu0 %1294
        %v1296 = vsel %vm467, %v1244, -inf
        %1297 = vmax.xlane.f32.xlu0 %v1296
        %v1298 = vpop.xlane.xlu0 %1297
        %v1299 = vsel %vm467, %v1245, -inf
        %1300 = vmax.xlane.f32.xlu0 %v1299
        %v1301 = vpop.xlane.xlu0 %1300
        %v1302 = vsel %vm467, %v1246, -inf
        %1303 = vmax.xlane.f32.xlu0 %v1302
        %v1304 = vpop.xlane.xlu0 %1303
        %v1305 = vsel %vm467, %v1247, -inf
        %1306 = vmax.xlane.f32.xlu0 %v1305
        %v1307 = vpop.xlane.xlu0 %1306
        %v1308 = vsel %vm467, %v1248, -inf
        %1309 = vmax.xlane.f32.xlu0 %v1308
        %v1310 = vpop.xlane.xlu0 %1309
        %v1311 = vsel %vm467, %v1249, -inf
        %1312 = vmax.xlane.f32.xlu0 %v1311
        %v1313 = vpop.xlane.xlu0 %1312
        %v1314 = vsel %vm467, %v1250, -inf
        %1315 = vmax.xlane.f32.xlu0 %v1314
        %v1316 = vpop.xlane.xlu0 %1315
        %v1317 = vsel %vm467, %v1251, -inf
        %1318 = vmax.xlane.f32.xlu0 %v1317
        %v1319 = vpop.xlane.xlu0 %1318
        %v1320 = vsel %vm467, %v1252, -inf
        %1321 = vmax.xlane.f32.xlu0 %v1320
        %v1322 = vpop.xlane.xlu0 %1321
        %v1323 = vsel %vm467, %v1253, -inf
        %1324 = vmax.xlane.f32.xlu0 %v1323
        %v1325 = vpop.xlane.xlu0 %1324
        %v1326 = vsel %vm467, %v1254, -inf
        %1327 = vmax.xlane.f32.xlu0 %v1326
        %v1328 = vpop.xlane.xlu0 %1327
        %v1329 = vsel %vm467, %v1255, -inf
        %1330 = vmax.xlane.f32.xlu0 %v1329
        %v1331 = vpop.xlane.xlu0 %1330
        %v1332 = vsel %vm467, %v1256, -inf
        %1333 = vmax.xlane.f32.xlu0 %v1332
        %v1334 = vpop.xlane.xlu0 %1333
        %v1335 = vsel %vm467, %v1257, -inf
        %1336 = vmax.xlane.f32.xlu0 %v1335
        %v1337 = vpop.xlane.xlu0 %1336
        %v1338 = vsel %vm467, %v1258, -inf
        %1339 = vmax.xlane.f32.xlu0 %v1338
        %v1340 = vpop.xlane.xlu0 %1339
        %v1341 = vsel %vm467, %v1259, -inf
        %1342 = vmax.xlane.f32.xlu0 %v1341
        %v1343 = vpop.xlane.xlu0 %1342
        %v1344 = vsel %vm467, %v1260, -inf
        %1345 = vmax.xlane.f32.xlu0 %v1344
        %v1346 = vpop.xlane.xlu0 %1345
        %v1347 = vsel %vm467, %v1261, -inf
        %1348 = vmax.xlane.f32.xlu0 %v1347
        %v1349 = vpop.xlane.xlu0 %1348
        %v1350 = vsel %vm467, %v1262, -inf
        %1351 = vmax.xlane.f32.xlu0 %v1350
        %v1352 = vpop.xlane.xlu0 %1351
        %v1353 = vsel %vm467, %v1263, -inf
        %1354 = vmax.xlane.f32.xlu0 %v1353
        %v1355 = vpop.xlane.xlu0 %1354
        %v1356 = vsel %vm467, %v1264, -inf
        %1357 = vmax.xlane.f32.xlu0 %v1356
        %v1358 = vpop.xlane.xlu0 %1357
        %v1359 = vsel %vm467, %v1265, -inf
        %1360 = vmax.xlane.f32.xlu0 %v1359
        %v1361 = vpop.xlane.xlu0 %1360
        %v1362 = vsub.f32 %v1234, %v1268
        %v1363 = vsub.f32 %v1235, %v1271
        %v1364 = vsub.f32 %v1236, %v1274
        %v1365 = vsub.f32 %v1237, %v1277
        %v1366 = vsub.f32 %v1238, %v1280
        %v1367 = vsub.f32 %v1239, %v1283
        %v1368 = vsub.f32 %v1240, %v1286
        %v1369 = vsub.f32 %v1241, %v1289
        %v1370 = vsub.f32 %v1242, %v1292
        %v1371 = vsub.f32 %v1243, %v1295
        %v1372 = vsub.f32 %v1244, %v1298
        %v1373 = vsub.f32 %v1245, %v1301
        %v1374 = vsub.f32 %v1246, %v1304
        %v1375 = vsub.f32 %v1247, %v1307
        %v1376 = vsub.f32 %v1248, %v1310
        %v1377 = vsub.f32 %v1249, %v1313
        %v1378 = vsub.f32 %v1250, %v1316
        %v1379 = vsub.f32 %v1251, %v1319
        %v1380 = vsub.f32 %v1252, %v1322
        %v1381 = vsub.f32 %v1253, %v1325
        %v1382 = vsub.f32 %v1254, %v1328
        %v1383 = vsub.f32 %v1255, %v1331
        %v1384 = vsub.f32 %v1256, %v1334
        %v1385 = vsub.f32 %v1257, %v1337
        %v1386 = vsub.f32 %v1258, %v1340
        %v1387 = vsub.f32 %v1259, %v1343
        %v1388 = vsub.f32 %v1260, %v1346
        %v1389 = vsub.f32 %v1261, %v1349
        %v1390 = vsub.f32 %v1262, %v1352
        %v1391 = vsub.f32 %v1263, %v1355
        %v1392 = vsub.f32 %v1264, %v1358
        %v1393 = vsub.f32 %v1265, %v1361
        %v1394 = vmul.f32 %v1362, 1.442695
        %v1395 = vpow.pop %v1394
        %v1396 = vmul.f32 %v1363, 1.442695
        %v1397 = vpow.pop %v1396
        %v1398 = vmul.f32 %v1364, 1.442695
        %v1399 = vpow.pop %v1398
        %v1400 = vmul.f32 %v1365, 1.442695
        %v1401 = vpow.pop %v1400
        %v1402 = vmul.f32 %v1366, 1.442695
        %v1403 = vpow.pop %v1402
        %v1404 = vmul.f32 %v1367, 1.442695
        %v1405 = vpow.pop %v1404
        %v1406 = vmul.f32 %v1368, 1.442695
        %v1407 = vpow.pop %v1406
        %v1408 = vmul.f32 %v1369, 1.442695
        %v1409 = vpow.pop %v1408
        %v1410 = vmul.f32 %v1370, 1.442695
        %v1411 = vpow.pop %v1410
        %v1412 = vmul.f32 %v1371, 1.442695
        %v1413 = vpow.pop %v1412
        %v1414 = vmul.f32 %v1372, 1.442695
        %v1415 = vpow.pop %v1414
        %v1416 = vmul.f32 %v1373, 1.442695
        %v1417 = vpow.pop %v1416
        %v1418 = vmul.f32 %v1374, 1.442695
        %v1419 = vpow.pop %v1418
        %v1420 = vmul.f32 %v1375, 1.442695
        %v1421 = vpow.pop %v1420
        %v1422 = vmul.f32 %v1376, 1.442695
        %v1423 = vpow.pop %v1422
        %v1424 = vmul.f32 %v1377, 1.442695
        %v1425 = vpow.pop %v1424
        %v1426 = vmul.f32 %v1378, 1.442695
        %v1427 = vpow.pop %v1426
        %v1428 = vmul.f32 %v1379, 1.442695
        %v1429 = vpow.pop %v1428
        %v1430 = vmul.f32 %v1380, 1.442695
        %v1431 = vpow.pop %v1430
        %v1432 = vmul.f32 %v1381, 1.442695
        %v1433 = vpow.pop %v1432
        %v1434 = vmul.f32 %v1382, 1.442695
        %v1435 = vpow.pop %v1434
        %v1436 = vmul.f32 %v1383, 1.442695
        %v1437 = vpow.pop %v1436
        %v1438 = vmul.f32 %v1384, 1.442695
        %v1439 = vpow.pop %v1438
        %v1440 = vmul.f32 %v1385, 1.442695
        %v1441 = vpow.pop %v1440
        %v1442 = vmul.f32 %v1386, 1.442695
        %v1443 = vpow.pop %v1442
        %v1444 = vmul.f32 %v1387, 1.442695
        %v1445 = vpow.pop %v1444
        %v1446 = vmul.f32 %v1388, 1.442695
        %v1447 = vpow.pop %v1446
        %v1448 = vmul.f32 %v1389, 1.442695
        %v1449 = vpow.pop %v1448
        %v1450 = vmul.f32 %v1390, 1.442695
        %v1451 = vpow.pop %v1450
        %v1452 = vmul.f32 %v1391, 1.442695
        %v1453 = vpow.pop %v1452
        %v1454 = vmul.f32 %v1392, 1.442695
        %v1455 = vpow.pop %v1454
        %v1456 = vmul.f32 %v1393, 1.442695
        %v1457 = vpow.pop %v1456
        %v1458 = vsel %vm467, %v1395, 0.0
        %1459 = vadd.xlane.f32.xlu0 %v1458
        %v1460 = vpop.xlane.xlu0 %1459
        %v1461 = vsel %vm467, %v1397, 0.0
        %1462 = vadd.xlane.f32.xlu0 %v1461
        %v1463 = vpop.xlane.xlu0 %1462
        %v1464 = vsel %vm467, %v1399, 0.0
        %1465 = vadd.xlane.f32.xlu0 %v1464
        %v1466 = vpop.xlane.xlu0 %1465
        %v1467 = vsel %vm467, %v1401, 0.0
        %1468 = vadd.xlane.f32.xlu0 %v1467
        %v1469 = vpop.xlane.xlu0 %1468
        %v1470 = vsel %vm467, %v1403, 0.0
        %1471 = vadd.xlane.f32.xlu0 %v1470
        %v1472 = vpop.xlane.xlu0 %1471
        %v1473 = vsel %vm467, %v1405, 0.0
        %1474 = vadd.xlane.f32.xlu0 %v1473
        %v1475 = vpop.xlane.xlu0 %1474
        %v1476 = vsel %vm467, %v1407, 0.0
        %1477 = vadd.xlane.f32.xlu0 %v1476
        %v1478 = vpop.xlane.xlu0 %1477
        %v1479 = vsel %vm467, %v1409, 0.0
        %1480 = vadd.xlane.f32.xlu0 %v1479
        %v1481 = vpop.xlane.xlu0 %1480
        %v1482 = vsel %vm467, %v1411, 0.0
        %1483 = vadd.xlane.f32.xlu0 %v1482
        %v1484 = vpop.xlane.xlu0 %1483
        %v1485 = vsel %vm467, %v1413, 0.0
        %1486 = vadd.xlane.f32.xlu0 %v1485
        %v1487 = vpop.xlane.xlu0 %1486
        %v1488 = vsel %vm467, %v1415, 0.0
        %1489 = vadd.xlane.f32.xlu0 %v1488
        %v1490 = vpop.xlane.xlu0 %1489
        %v1491 = vsel %vm467, %v1417, 0.0
        %1492 = vadd.xlane.f32.xlu0 %v1491
        %v1493 = vpop.xlane.xlu0 %1492
        %v1494 = vsel %vm467, %v1419, 0.0
        %1495 = vadd.xlane.f32.xlu0 %v1494
        %v1496 = vpop.xlane.xlu0 %1495
        %v1497 = vsel %vm467, %v1421, 0.0
        %1498 = vadd.xlane.f32.xlu0 %v1497
        %v1499 = vpop.xlane.xlu0 %1498
        %v1500 = vsel %vm467, %v1423, 0.0
        %1501 = vadd.xlane.f32.xlu0 %v1500
        %v1502 = vpop.xlane.xlu0 %1501
        %v1503 = vsel %vm467, %v1425, 0.0
        %1504 = vadd.xlane.f32.xlu0 %v1503
        %v1505 = vpop.xlane.xlu0 %1504
        %v1506 = vsel %vm467, %v1427, 0.0
        %1507 = vadd.xlane.f32.xlu0 %v1506
        %v1508 = vpop.xlane.xlu0 %1507
        %v1509 = vsel %vm467, %v1429, 0.0
        %1510 = vadd.xlane.f32.xlu0 %v1509
        %v1511 = vpop.xlane.xlu0 %1510
        %v1512 = vsel %vm467, %v1431, 0.0
        %1513 = vadd.xlane.f32.xlu0 %v1512
        %v1514 = vpop.xlane.xlu0 %1513
        %v1515 = vsel %vm467, %v1433, 0.0
        %1516 = vadd.xlane.f32.xlu0 %v1515
        %v1517 = vpop.xlane.xlu0 %1516
        %v1518 = vsel %vm467, %v1435, 0.0
        %1519 = vadd.xlane.f32.xlu0 %v1518
        %v1520 = vpop.xlane.xlu0 %1519
        %v1521 = vsel %vm467, %v1437, 0.0
        %1522 = vadd.xlane.f32.xlu0 %v1521
        %v1523 = vpop.xlane.xlu0 %1522
        %v1524 = vsel %vm467, %v1439, 0.0
        %1525 = vadd.xlane.f32.xlu0 %v1524
        %v1526 = vpop.xlane.xlu0 %1525
        %v1527 = vsel %vm467, %v1441, 0.0
        %1528 = vadd.xlane.f32.xlu0 %v1527
        %v1529 = vpop.xlane.xlu0 %1528
        %v1530 = vsel %vm467, %v1443, 0.0
        %1531 = vadd.xlane.f32.xlu0 %v1530
        %v1532 = vpop.xlane.xlu0 %1531
        %v1533 = vsel %vm467, %v1445, 0.0
        %1534 = vadd.xlane.f32.xlu0 %v1533
        %v1535 = vpop.xlane.xlu0 %1534
        %v1536 = vsel %vm467, %v1447, 0.0
        %1537 = vadd.xlane.f32.xlu0 %v1536
        %v1538 = vpop.xlane.xlu0 %1537
        %v1539 = vsel %vm467, %v1449, 0.0
        %1540 = vadd.xlane.f32.xlu0 %v1539
        %v1541 = vpop.xlane.xlu0 %1540
        %v1542 = vsel %vm467, %v1451, 0.0
        %1543 = vadd.xlane.f32.xlu0 %v1542
        %v1544 = vpop.xlane.xlu0 %1543
        %v1545 = vsel %vm467, %v1453, 0.0
        %1546 = vadd.xlane.f32.xlu0 %v1545
        %v1547 = vpop.xlane.xlu0 %1546
        %v1548 = vsel %vm467, %v1455, 0.0
        %1549 = vadd.xlane.f32.xlu0 %v1548
        %v1550 = vpop.xlane.xlu0 %1549
        %v1551 = vsel %vm467, %v1457, 0.0
        %1552 = vadd.xlane.f32.xlu0 %v1551
        %v1553 = vpop.xlane.xlu0 %1552
        %v1554 = vpack.c.bf16 %v1397, %v1395
        %v1555 = vpack.c.bf16 %v1401, %v1399
        %v1556 = vpack.c.bf16 %v1405, %v1403
        %v1557 = vpack.c.bf16 %v1409, %v1407
        %v1558 = vpack.c.bf16 %v1413, %v1411
        %v1559 = vpack.c.bf16 %v1417, %v1415
        %v1560 = vpack.c.bf16 %v1421, %v1419
        %v1561 = vpack.c.bf16 %v1425, %v1423
        %v1562 = vpack.c.bf16 %v1429, %v1427
        %v1563 = vpack.c.bf16 %v1433, %v1431
        %v1564 = vpack.c.bf16 %v1437, %v1435
        %v1565 = vpack.c.bf16 %v1441, %v1439
        %v1566 = vpack.c.bf16 %v1445, %v1443
        %v1567 = vpack.c.bf16 %v1449, %v1447
        %v1568 = vpack.c.bf16 %v1453, %v1451
        %v1569 = vpack.c.bf16 %v1457, %v1455
        %v1571 = vsel %vm467, %v1554, 0
        %v1574 = vsel %vm467, %v1555, 0
        %v1577 = vsel %vm467, %v1556, 0
        %v1580 = vsel %vm467, %v1557, 0
        %1582 = vmatprep.subr.bf16.mxu0 0
        %1583 = vmatpush1.bf16.msra.mxu0 %v805
        %1584 = vmatprep.subr.bf16.mxu0 0
        %1585 = vmatpush1.bf16.msra.mxu0 %v806
        %1586 = vmatprep.subr.bf16.mxu0 0
        %1587 = vmatpush1.bf16.msra.mxu0 %v807
        %1588 = vmatprep.subr.bf16.mxu0 0
        %1589 = vmatpush1.bf16.msra.mxu0 %v808
        %1590 = vmatprep.subr.bf16.mxu0 0
        %1591 = vmatpush1.bf16.msra.mxu0 0
        %1592 = vmatprep.subr.bf16.mxu0 0
        %1593 = vmatpush1.bf16.msra.mxu0 0
        %1594 = vmatprep.subr.bf16.mxu0 0
        %1595 = vmatpush1.bf16.msra.mxu0 0
        %1596 = vmatprep.subr.bf16.mxu0 0
        %1597 = vmatpush1.bf16.msra.mxu0 0
        %1598 = vmatprep.subr.bf16.mxu0 0
        %1599 = vmatpush1.bf16.msra.mxu0 0
        %1600 = vmatprep.subr.bf16.mxu0 0
        %1601 = vmatpush1.bf16.msra.mxu0 0
        %1602 = vmatprep.subr.bf16.mxu0 0
        %1603 = vmatpush1.bf16.msra.mxu0 0
        %1604 = vmatprep.subr.bf16.mxu0 0
        %1605 = vmatpush1.bf16.msra.mxu0 0
        %1606 = vmatprep.subr.bf16.mxu0 0
        %1607 = vmatpush1.bf16.msra.mxu0 0
        %1608 = vmatprep.subr.bf16.mxu0 0
        %1609 = vmatpush1.bf16.msra.mxu0 0
        %1610 = vmatprep.subr.bf16.mxu0 0
        %1611 = vmatpush1.bf16.msra.mxu0 0
        %1612 = vmatprep.subr.bf16.mxu0 0
        %1613 = vmatpush1.bf16.msra.mxu0 0
        %1614 = vmatprep.mubr.bf16.mxu0 0
        %1615 = vmatmul.mubr.bf16.gmra.mrb[0].mxu0 %v1571
        %v1616 = vpop.f32.mrb[0].mxu0
        %v1617 = vadd.f32 0.0, %v1616
        %v1618 = vpop.f32.mrb[0].mxu0
        %v1619 = vpop.f32.mrb[0].mxu0
        %v1620 = vadd.f32 0.0, %v1619
        %v1621 = vpop.f32.mrb[0].mxu0
        %1622 = vmatprep.mubr.bf16.mxu0 0
        %1623 = vmatmul.mubr.bf16.gmra.mrb[0].mxu0 %v1574
        %v1624 = vpop.f32.mrb[0].mxu0
        %v1625 = vadd.f32 0.0, %v1624
        %v1626 = vpop.f32.mrb[0].mxu0
        %v1627 = vpop.f32.mrb[0].mxu0
        %v1628 = vadd.f32 0.0, %v1627
        %v1629 = vpop.f32.mrb[0].mxu0
        %1630 = vmatprep.mubr.bf16.mxu0 0
        %1631 = vmatmul.mubr.bf16.gmra.mrb[0].mxu0 %v1577
        %v1632 = vpop.f32.mrb[0].mxu0
        %v1633 = vadd.f32 0.0, %v1632
        %v1634 = vpop.f32.mrb[0].mxu0
        %v1635 = vpop.f32.mrb[0].mxu0
        %v1636 = vadd.f32 0.0, %v1635
        %v1637 = vpop.f32.mrb[0].mxu0
        %1638 = vmatprep.mubr.bf16.mxu0 0
        %1639 = vmatmul.mubr.bf16.gmra.mrb[0].mxu0 %v1580
        %v1640 = vpop.f32.mrb[0].mxu0
        %v1641 = vadd.f32 0.0, %v1640
        %v1642 = vpop.f32.mrb[0].mxu0
        %v1643 = vpop.f32.mrb[0].mxu0
        %v1644 = vadd.f32 0.0, %v1643
        %v1645 = vpop.f32.mrb[0].mxu0
        %1646 = vdwg.mxu0
        %v1648 = vsel %vm467, %v1558, 0
        %v1651 = vsel %vm467, %v1559, 0
        %v1654 = vsel %vm467, %v1560, 0
        %v1657 = vsel %vm467, %v1561, 0
        %1659 = vmatprep.subr.bf16.mxu0 0
        %1660 = vmatpush1.bf16.msra.mxu0 %v809
        %1661 = vmatprep.subr.bf16.mxu0 0
        %1662 = vmatpush1.bf16.msra.mxu0 %v810
        %1663 = vmatprep.subr.bf16.mxu0 0
        %1664 = vmatpush1.bf16.msra.mxu0 %v811
        %1665 = vmatprep.subr.bf16.mxu0 0
        %1666 = vmatpush1.bf16.msra.mxu0 %v812
        %1667 = vmatprep.subr.bf16.mxu0 0
        %1668 = vmatpush1.bf16.msra.mxu0 0
        %1669 = vmatprep.subr.bf16.mxu0 0
        %1670 = vmatpush1.bf16.msra.mxu0 0
        %1671 = vmatprep.subr.bf16.mxu0 0
        %1672 = vmatpush1.bf16.msra.mxu0 0
        %1673 = vmatprep.subr.bf16.mxu0 0
        %1674 = vmatpush1.bf16.msra.mxu0 0
        %1675 = vmatprep.subr.bf16.mxu0 0
        %1676 = vmatpush1.bf16.msra.mxu0 0
        %1677 = vmatprep.subr.bf16.mxu0 0
        %1678 = vmatpush1.bf16.msra.mxu0 0
        %1679 = vmatprep.subr.bf16.mxu0 0
        %1680 = vmatpush1.bf16.msra.mxu0 0
        %1681 = vmatprep.subr.bf16.mxu0 0
        %1682 = vmatpush1.bf16.msra.mxu0 0
        %1683 = vmatprep.subr.bf16.mxu0 0
        %1684 = vmatpush1.bf16.msra.mxu0 0
        %1685 = vmatprep.subr.bf16.mxu0 0
        %1686 = vmatpush1.bf16.msra.mxu0 0
        %1687 = vmatprep.subr.bf16.mxu0 0
        %1688 = vmatpush1.bf16.msra.mxu0 0
        %1689 = vmatprep.subr.bf16.mxu0 0
        %1690 = vmatpush1.bf16.msra.mxu0 0
        %1691 = vmatprep.mubr.bf16.mxu0 0
        %1692 = vmatmul.mubr.bf16.gmra.mrb[0].mxu0 %v1648
        %v1693 = vpop.f32.mrb[0].mxu0
        %v1694 = vadd.f32 0.0, %v1693
        %v1695 = vpop.f32.mrb[0].mxu0
        %v1696 = vpop.f32.mrb[0].mxu0
        %v1697 = vadd.f32 0.0, %v1696
        %v1698 = vpop.f32.mrb[0].mxu0
        %1699 = vmatprep.mubr.bf16.mxu0 0
        %1700 = vmatmul.mubr.bf16.gmra.mrb[0].mxu0 %v1651
        %v1701 = vpop.f32.mrb[0].mxu0
        %v1702 = vadd.f32 0.0, %v1701
        %v1703 = vpop.f32.mrb[0].mxu0
        %v1704 = vpop.f32.mrb[0].mxu0
        %v1705 = vadd.f32 0.0, %v1704
        %v1706 = vpop.f32.mrb[0].mxu0
        %1707 = vmatprep.mubr.bf16.mxu0 0
        %1708 = vmatmul.mubr.bf16.gmra.mrb[0].mxu0 %v1654
        %v1709 = vpop.f32.mrb[0].mxu0
        %v1710 = vadd.f32 0.0, %v1709
        %v1711 = vpop.f32.mrb[0].mxu0
        %v1712 = vpop.f32.mrb[0].mxu0
        %v1713 = vadd.f32 0.0, %v1712
        %v1714 = vpop.f32.mrb[0].mxu0
        %1715 = vmatprep.mubr.bf16.mxu0 0
        %1716 = vmatmul.mubr.bf16.gmra.mrb[0].mxu0 %v1657
        %v1717 = vpop.f32.mrb[0].mxu0
        %v1718 = vadd.f32 0.0, %v1717
        %v1719 = vpop.f32.mrb[0].mxu0
        %v1720 = vpop.f32.mrb[0].mxu0
        %v1721 = vadd.f32 0.0, %v1720
        %v1722 = vpop.f32.mrb[0].mxu0
        %1723 = vdwg.mxu0
        %v1725 = vsel %vm467, %v1562, 0
        %v1728 = vsel %vm467, %v1563, 0
        %v1731 = vsel %vm467, %v1564, 0
        %v1734 = vsel %vm467, %v1565, 0
        %1736 = vmatprep.subr.bf16.mxu0 0
        %1737 = vmatpush1.bf16.msra.mxu0 %v813
        %1738 = vmatprep.subr.bf16.mxu0 0
        %1739 = vmatpush1.bf16.msra.mxu0 %v814
        %1740 = vmatprep.subr.bf16.mxu0 0
        %1741 = vmatpush1.bf16.msra.mxu0 %v815
        %1742 = vmatprep.subr.bf16.mxu0 0
        %1743 = vmatpush1.bf16.msra.mxu0 %v816
        %1744 = vmatprep.subr.bf16.mxu0 0
        %1745 = vmatpush1.bf16.msra.mxu0 0
        %1746 = vmatprep.subr.bf16.mxu0 0
        %1747 = vmatpush1.bf16.msra.mxu0 0
        %1748 = vmatprep.subr.bf16.mxu0 0
        %1749 = vmatpush1.bf16.msra.mxu0 0
        %1750 = vmatprep.subr.bf16.mxu0 0
        %1751 = vmatpush1.bf16.msra.mxu0 0
        %1752 = vmatprep.subr.bf16.mxu0 0
        %1753 = vmatpush1.bf16.msra.mxu0 0
        %1754 = vmatprep.subr.bf16.mxu0 0
        %1755 = vmatpush1.bf16.msra.mxu0 0
        %1756 = vmatprep.subr.bf16.mxu0 0
        %1757 = vmatpush1.bf16.msra.mxu0 0
        %1758 = vmatprep.subr.bf16.mxu0 0
        %1759 = vmatpush1.bf16.msra.mxu0 0
        %1760 = vmatprep.subr.bf16.mxu0 0
        %1761 = vmatpush1.bf16.msra.mxu0 0
        %1762 = vmatprep.subr.bf16.mxu0 0
        %1763 = vmatpush1.bf16.msra.mxu0 0
        %1764 = vmatprep.subr.bf16.mxu0 0
        %1765 = vmatpush1.bf16.msra.mxu0 0
        %1766 = vmatprep.subr.bf16.mxu0 0
        %1767 = vmatpush1.bf16.msra.mxu0 0
        %1768 = vmatprep.mubr.bf16.mxu0 0
        %1769 = vmatmul.mubr.bf16.gmra.mrb[0].mxu0 %v1725
        %v1770 = vpop.f32.mrb[0].mxu0
        %v1771 = vadd.f32 0.0, %v1770
        %v1772 = vpop.f32.mrb[0].mxu0
        %v1773 = vpop.f32.mrb[0].mxu0
        %v1774 = vadd.f32 0.0, %v1773
        %v1775 = vpop.f32.mrb[0].mxu0
        %1776 = vmatprep.mubr.bf16.mxu0 0
        %1777 = vmatmul.mubr.bf16.gmra.mrb[0].mxu0 %v1728
        %v1778 = vpop.f32.mrb[0].mxu0
        %v1779 = vadd.f32 0.0, %v1778
        %v1780 = vpop.f32.mrb[0].mxu0
        %v1781 = vpop.f32.mrb[0].mxu0
        %v1782 = vadd.f32 0.0, %v1781
        %v1783 = vpop.f32.mrb[0].mxu0
        %1784 = vmatprep.mubr.bf16.mxu0 0
        %1785 = vmatmul.mubr.bf16.gmra.mrb[0].mxu0 %v1731
        %v1786 = vpop.f32.mrb[0].mxu0
        %v1787 = vadd.f32 0.0, %v1786
        %v1788 = vpop.f32.mrb[0].mxu0
        %v1789 = vpop.f32.mrb[0].mxu0
        %v1790 = vadd.f32 0.0, %v1789
        %v1791 = vpop.f32.mrb[0].mxu0
        %1792 = vmatprep.mubr.bf16.mxu0 0
        %1793 = vmatmul.mubr.bf16.gmra.mrb[0].mxu0 %v1734
        %v1794 = vpop.f32.mrb[0].mxu0
        %v1795 = vadd.f32 0.0, %v1794
        %v1796 = vpop.f32.mrb[0].mxu0
        %v1797 = vpop.f32.mrb[0].mxu0
        %v1798 = vadd.f32 0.0, %v1797
        %v1799 = vpop.f32.mrb[0].mxu0
        %1800 = vdwg.mxu0
        %v1802 = vsel %vm467, %v1566, 0
        %v1805 = vsel %vm467, %v1567, 0
        %v1808 = vsel %vm467, %v1568, 0
        %v1811 = vsel %vm467, %v1569, 0
        %1813 = vmatprep.subr.bf16.mxu0 0
        %1814 = vmatpush1.bf16.msra.mxu0 %v817
        %1815 = vmatprep.subr.bf16.mxu0 0
        %1816 = vmatpush1.bf16.msra.mxu0 %v818
        %1817 = vmatprep.subr.bf16.mxu0 0
        %1818 = vmatpush1.bf16.msra.mxu0 %v819
        %1819 = vmatprep.subr.bf16.mxu0 0
        %1820 = vmatpush1.bf16.msra.mxu0 %v820
        %1821 = vmatprep.subr.bf16.mxu0 0
        %1822 = vmatpush1.bf16.msra.mxu0 0
        %1823 = vmatprep.subr.bf16.mxu0 0
        %1824 = vmatpush1.bf16.msra.mxu0 0
        %1825 = vmatprep.subr.bf16.mxu0 0
        %1826 = vmatpush1.bf16.msra.mxu0 0
        %1827 = vmatprep.subr.bf16.mxu0 0
        %1828 = vmatpush1.bf16.msra.mxu0 0
        %1829 = vmatprep.subr.bf16.mxu0 0
        %1830 = vmatpush1.bf16.msra.mxu0 0
        %1831 = vmatprep.subr.bf16.mxu0 0
        %1832 = vmatpush1.bf16.msra.mxu0 0
        %1833 = vmatprep.subr.bf16.mxu0 0
        %1834 = vmatpush1.bf16.msra.mxu0 0
        %1835 = vmatprep.subr.bf16.mxu0 0
        %1836 = vmatpush1.bf16.msra.mxu0 0
        %1837 = vmatprep.subr.bf16.mxu0 0
        %1838 = vmatpush1.bf16.msra.mxu0 0
        %1839 = vmatprep.subr.bf16.mxu0 0
        %1840 = vmatpush1.bf16.msra.mxu0 0
        %1841 = vmatprep.subr.bf16.mxu0 0
        %1842 = vmatpush1.bf16.msra.mxu0 0
        %1843 = vmatprep.subr.bf16.mxu0 0
        %1844 = vmatpush1.bf16.msra.mxu0 0
        %1845 = vmatprep.mubr.bf16.mxu0 0
        %1846 = vmatmul.mubr.bf16.gmra.mrb[0].mxu0 %v1802
        %v1847 = vpop.f32.mrb[0].mxu0
        %v1848 = vadd.f32 0.0, %v1847
        %v1849 = vpop.f32.mrb[0].mxu0
        %v1850 = vpop.f32.mrb[0].mxu0
        %v1851 = vadd.f32 0.0, %v1850
        %v1852 = vpop.f32.mrb[0].mxu0
        %1853 = vmatprep.mubr.bf16.mxu0 0
        %1854 = vmatmul.mubr.bf16.gmra.mrb[0].mxu0 %v1805
        %v1855 = vpop.f32.mrb[0].mxu0
        %v1856 = vadd.f32 0.0, %v1855
        %v1857 = vpop.f32.mrb[0].mxu0
        %v1858 = vpop.f32.mrb[0].mxu0
        %v1859 = vadd.f32 0.0, %v1858
        %v1860 = vpop.f32.mrb[0].mxu0
        %1861 = vmatprep.mubr.bf16.mxu0 0
        %1862 = vmatmul.mubr.bf16.gmra.mrb[0].mxu0 %v1808
        %v1863 = vpop.f32.mrb[0].mxu0
        %v1864 = vadd.f32 0.0, %v1863
        %v1865 = vpop.f32.mrb[0].mxu0
        %v1866 = vpop.f32.mrb[0].mxu0
        %v1867 = vadd.f32 0.0, %v1866
        %v1868 = vpop.f32.mrb[0].mxu0
        %1869 = vmatprep.mubr.bf16.mxu0 0
        %1870 = vmatmul.mubr.bf16.gmra.mrb[0].mxu0 %v1811
        %v1871 = vpop.f32.mrb[0].mxu0
        %v1872 = vadd.f32 0.0, %v1871
        %v1873 = vpop.f32.mrb[0].mxu0
        %v1874 = vpop.f32.mrb[0].mxu0
        %v1875 = vadd.f32 0.0, %v1874
        %v1876 = vpop.f32.mrb[0].mxu0
        %1877 = vdwg.mxu0
        %v1878 = vrcp.pop %v1460
        %v1879 = vrcp.pop %v1463
        %v1880 = vrcp.pop %v1466
        %v1881 = vrcp.pop %v1469
        %v1882 = vrcp.pop %v1472
        %v1883 = vrcp.pop %v1475
        %v1884 = vrcp.pop %v1478
        %v1885 = vrcp.pop %v1481
        %v1886 = vrcp.pop %v1484
        %v1887 = vrcp.pop %v1487
        %v1888 = vrcp.pop %v1490
        %v1889 = vrcp.pop %v1493
        %v1890 = vrcp.pop %v1496
        %v1891 = vrcp.pop %v1499
        %v1892 = vrcp.pop %v1502
        %v1893 = vrcp.pop %v1505
        %v1894 = vrcp.pop %v1508
        %v1895 = vrcp.pop %v1511
        %v1896 = vrcp.pop %v1514
        %v1897 = vrcp.pop %v1517
        %v1898 = vrcp.pop %v1520
        %v1899 = vrcp.pop %v1523
        %v1900 = vrcp.pop %v1526
        %v1901 = vrcp.pop %v1529
        %v1902 = vrcp.pop %v1532
        %v1903 = vrcp.pop %v1535
        %v1904 = vrcp.pop %v1538
        %v1905 = vrcp.pop %v1541
        %v1906 = vrcp.pop %v1544
        %v1907 = vrcp.pop %v1547
        %v1908 = vrcp.pop %v1550
        %v1909 = vrcp.pop %v1553
        %v1910 = vmul.f32 %v1617, %v1878
        %v1911 = vmul.f32 %v1620, %v1879
        %v1912 = vmul.f32 %v1625, %v1880
        %v1913 = vmul.f32 %v1628, %v1881
        %v1914 = vmul.f32 %v1633, %v1882
        %v1915 = vmul.f32 %v1636, %v1883
        %v1916 = vmul.f32 %v1641, %v1884
        %v1917 = vmul.f32 %v1644, %v1885
        %v1918 = vmul.f32 %v1694, %v1886
        %v1919 = vmul.f32 %v1697, %v1887
        %v1920 = vmul.f32 %v1702, %v1888
        %v1921 = vmul.f32 %v1705, %v1889
        %v1922 = vmul.f32 %v1710, %v1890
        %v1923 = vmul.f32 %v1713, %v1891
        %v1924 = vmul.f32 %v1718, %v1892
        %v1925 = vmul.f32 %v1721, %v1893
        %v1926 = vmul.f32 %v1771, %v1894
        %v1927 = vmul.f32 %v1774, %v1895
        %v1928 = vmul.f32 %v1779, %v1896
        %v1929 = vmul.f32 %v1782, %v1897
        %v1930 = vmul.f32 %v1787, %v1898
        %v1931 = vmul.f32 %v1790, %v1899
        %v1932 = vmul.f32 %v1795, %v1900
        %v1933 = vmul.f32 %v1798, %v1901
        %v1934 = vmul.f32 %v1848, %v1902
        %v1935 = vmul.f32 %v1851, %v1903
        %v1936 = vmul.f32 %v1856, %v1904
        %v1937 = vmul.f32 %v1859, %v1905
        %v1938 = vmul.f32 %v1864, %v1906
        %v1939 = vmul.f32 %v1867, %v1907
        %v1940 = vmul.f32 %v1872, %v1908
        %v1941 = vmul.f32 %v1875, %v1909
        %1942 = vst.msk [vmem:[#allocation2] sm:$0xff] %vm841, %v1910
        %1943 = vst.msk [vmem:[#allocation2 + $0x8] sm:$0xff] %vm841, %v1911
        %1944 = vst.msk [vmem:[#allocation2 + $0x10] sm:$0xff] %vm841, %v1912
        %1945 = vst.msk [vmem:[#allocation2 + $0x18] sm:$0xff] %vm841, %v1913
        %1946 = vst.msk [vmem:[#allocation2 + $0x20] sm:$0xff] %vm841, %v1914
        %1947 = vst.msk [vmem:[#allocation2 + $0x28] sm:$0xff] %vm841, %v1915
        %1948 = vst.msk [vmem:[#allocation2 + $0x30] sm:$0xff] %vm841, %v1916
        %1949 = vst.msk [vmem:[#allocation2 + $0x38] sm:$0xff] %vm841, %v1917
        %1950 = vst.msk [vmem:[#allocation2 + $0x40] sm:$0xff] %vm841, %v1918
        %1951 = vst.msk [vmem:[#allocation2 + $0x48] sm:$0xff] %vm841, %v1919
        %1952 = vst.msk [vmem:[#allocation2 + $0x50] sm:$0xff] %vm841, %v1920
        %1953 = vst.msk [vmem:[#allocation2 + $0x58] sm:$0xff] %vm841, %v1921
        %1954 = vst.msk [vmem:[#allocation2 + $0x60] sm:$0xff] %vm841, %v1922
        %1955 = vst.msk [vmem:[#allocation2 + $0x68] sm:$0xff] %vm841, %v1923
        %1956 = vst.msk [vmem:[#allocation2 + $0x70] sm:$0xff] %vm841, %v1924
        %1957 = vst.msk [vmem:[#allocation2 + $0x78] sm:$0xff] %vm841, %v1925
        %1958 = vst.msk [vmem:[#allocation2 + $0x80] sm:$0xff] %vm841, %v1926
        %1959 = vst.msk [vmem:[#allocation2 + $0x88] sm:$0xff] %vm841, %v1927
        %1960 = vst.msk [vmem:[#allocation2 + $0x90] sm:$0xff] %vm841, %v1928
        %1961 = vst.msk [vmem:[#allocation2 + $0x98] sm:$0xff] %vm841, %v1929
        %1962 = vst.msk [vmem:[#allocation2 + $0xa0] sm:$0xff] %vm841, %v1930
        %1963 = vst.msk [vmem:[#allocation2 + $0xa8] sm:$0xff] %vm841, %v1931
        %1964 = vst.msk [vmem:[#allocation2 + $0xb0] sm:$0xff] %vm841, %v1932
        %1965 = vst.msk [vmem:[#allocation2 + $0xb8] sm:$0xff] %vm841, %v1933
        %1966 = vst.msk [vmem:[#allocation2 + $0xc0] sm:$0xff] %vm841, %v1934
        %1967 = vst.msk [vmem:[#allocation2 + $0xc8] sm:$0xff] %vm841, %v1935
        %1968 = vst.msk [vmem:[#allocation2 + $0xd0] sm:$0xff] %vm841, %v1936
        %1969 = vst.msk [vmem:[#allocation2 + $0xd8] sm:$0xff] %vm841, %v1937
        %1970 = vst.msk [vmem:[#allocation2 + $0xe0] sm:$0xff] %vm841, %v1938
        %1971 = vst.msk [vmem:[#allocation2 + $0xe8] sm:$0xff] %vm841, %v1939
        %1972 = vst.msk [vmem:[#allocation2 + $0xf0] sm:$0xff] %vm841, %v1940
        %1973 = vst.msk [vmem:[#allocation2 + $0xf8] sm:$0xff] %vm841, %v1941
        %s1974 = scalar_lea.vmem [#allocation9], 64
        %v1975 = vld [vmem:[%s1974] sm:$0xff]
        %v1976 = vld [vmem:[%s1974 + $0x8] sm:$0xff]
        %v1977 = vld [vmem:[%s1974 + $0x10] sm:$0xff]
        %v1978 = vld [vmem:[%s1974 + $0x18] sm:$0xff]
        %v1979 = vld [vmem:[%s1974 + $0x20] sm:$0xff]
        %v1980 = vld [vmem:[%s1974 + $0x28] sm:$0xff]
        %v1981 = vld [vmem:[%s1974 + $0x30] sm:$0xff]
        %v1982 = vld [vmem:[%s1974 + $0x38] sm:$0xff]
        %1987 = vrot.lane.b32.xlu0 %v773, 96
        %v1988 = vpop.permute.xlu0 %1987
        %1989 = vrot.lane.b32.xlu0 %v774, 96
        %v1990 = vpop.permute.xlu0 %1989
        %1991 = vrot.lane.b32.xlu0 %v775, 96
        %v1992 = vpop.permute.xlu0 %1991
        %1993 = vrot.lane.b32.xlu0 %v776, 96
        %v1994 = vpop.permute.xlu0 %1993
        %1995 = vrot.lane.b32.xlu0 %v789, 32
        %v1996 = vpop.permute.xlu0 %1995
        %1997 = vrot.lane.b32.xlu0 %v790, 32
        %v1998 = vpop.permute.xlu0 %1997
        %1999 = vrot.lane.b32.xlu0 %v791, 32
        %v2000 = vpop.permute.xlu0 %1999
        %2001 = vrot.lane.b32.xlu0 %v792, 32
        %v2002 = vpop.permute.xlu0 %2001
        %v2004 = vsel %vm841, %v1988, 0
        %v2007 = vsel %vm841, %v1990, 0
        %v2010 = vsel %vm841, %v1992, 0
        %v2013 = vsel %vm841, %v1994, 0
        %v2016 = vsel %vm841, %v1996, 0
        %v2019 = vsel %vm841, %v1998, 0
        %v2022 = vsel %vm841, %v2000, 0
        %v2025 = vsel %vm841, %v2002, 0
        %2027 = vmatprep.subr.bf16.mxu0 0
        %2028 = vmatpush1.bf16.xpose.msra.mxu0 %v2016
        %2029 = vmatprep.subr.bf16.mxu0 0
        %2030 = vmatpush1.bf16.xpose.msra.mxu0 %v2019
        %2031 = vmatprep.subr.bf16.mxu0 0
        %2032 = vmatpush1.bf16.xpose.msra.mxu0 %v2022
        %2033 = vmatprep.subr.bf16.mxu0 0
        %2034 = vmatpush1.bf16.xpose.msra.mxu0 %v2025
        %2035 = vmatprep.subr.bf16.mxu0 0
        %2036 = vmatpush1.bf16.xpose.msra.mxu0 0
        %2037 = vmatprep.subr.bf16.mxu0 0
        %2038 = vmatpush1.bf16.xpose.msra.mxu0 0
        %2039 = vmatprep.subr.bf16.mxu0 0
        %2040 = vmatpush1.bf16.xpose.msra.mxu0 0
        %2041 = vmatprep.subr.bf16.mxu0 0
        %2042 = vmatpush1.bf16.xpose.msra.mxu0 0
        %2043 = vmatprep.subr.bf16.mxu0 0
        %2044 = vmatpush1.bf16.xpose.msra.mxu0 0
        %2045 = vmatprep.subr.bf16.mxu0 0
        %2046 = vmatpush1.bf16.xpose.msra.mxu0 0
        %2047 = vmatprep.subr.bf16.mxu0 0
        %2048 = vmatpush1.bf16.xpose.msra.mxu0 0
        %2049 = vmatprep.subr.bf16.mxu0 0
        %2050 = vmatpush1.bf16.xpose.msra.mxu0 0
        %2051 = vmatprep.subr.bf16.mxu0 0
        %2052 = vmatpush1.bf16.xpose.msra.mxu0 0
        %2053 = vmatprep.subr.bf16.mxu0 0
        %2054 = vmatpush1.bf16.xpose.msra.mxu0 0
        %2055 = vmatprep.subr.bf16.mxu0 0
        %2056 = vmatpush1.bf16.xpose.msra.mxu0 0
        %2057 = vmatprep.subr.bf16.mxu0 0
        %2058 = vmatpush1.bf16.xpose.msra.mxu0 0
        %2059 = vmatprep.mubr.bf16.mxu0 0
        %2060 = vmatmul.mubr.bf16.gmra.mrb[0].mxu0 %v2004
        %v2061 = vpop.f32.mrb[0].mxu0
        %v2062 = vadd.f32 %v1975, %v2061
        %v2063 = vpop.f32.mrb[0].mxu0
        %v2064 = vpop.f32.mrb[0].mxu0
        %v2065 = vadd.f32 %v1976, %v2064
        %v2066 = vpop.f32.mrb[0].mxu0
        %2067 = vmatprep.mubr.bf16.mxu0 0
        %2068 = vmatmul.mubr.bf16.gmra.mrb[0].mxu0 %v2007
        %v2069 = vpop.f32.mrb[0].mxu0
        %v2070 = vadd.f32 %v1977, %v2069
        %v2071 = vpop.f32.mrb[0].mxu0
        %v2072 = vpop.f32.mrb[0].mxu0
        %v2073 = vadd.f32 %v1978, %v2072
        %v2074 = vpop.f32.mrb[0].mxu0
        %2075 = vmatprep.mubr.bf16.mxu0 0
        %2076 = vmatmul.mubr.bf16.gmra.mrb[0].mxu0 %v2010
        %v2077 = vpop.f32.mrb[0].mxu0
        %v2078 = vadd.f32 %v1979, %v2077
        %v2079 = vpop.f32.mrb[0].mxu0
        %v2080 = vpop.f32.mrb[0].mxu0
        %v2081 = vadd.f32 %v1980, %v2080
        %v2082 = vpop.f32.mrb[0].mxu0
        %2083 = vmatprep.mubr.bf16.mxu0 0
        %2084 = vmatmul.mubr.bf16.gmra.mrb[0].mxu0 %v2013
        %v2085 = vpop.f32.mrb[0].mxu0
        %v2086 = vadd.f32 %v1981, %v2085
        %v2087 = vpop.f32.mrb[0].mxu0
        %v2088 = vpop.f32.mrb[0].mxu0
        %v2089 = vadd.f32 %v1982, %v2088
        %v2090 = vpop.f32.mrb[0].mxu0
        %2091 = vdwg.mxu0
        %2096 = vrot.lane.b32.xlu0 %v777, 96
        %v2097 = vpop.permute.xlu0 %2096
        %2098 = vrot.lane.b32.xlu0 %v778, 96
        %v2099 = vpop.permute.xlu0 %2098
        %2100 = vrot.lane.b32.xlu0 %v779, 96
        %v2101 = vpop.permute.xlu0 %2100
        %2102 = vrot.lane.b32.xlu0 %v780, 96
        %v2103 = vpop.permute.xlu0 %2102
        %2104 = vrot.lane.b32.xlu0 %v793, 32
        %v2105 = vpop.permute.xlu0 %2104
        %2106 = vrot.lane.b32.xlu0 %v794, 32
        %v2107 = vpop.permute.xlu0 %2106
        %2108 = vrot.lane.b32.xlu0 %v795, 32
        %v2109 = vpop.permute.xlu0 %2108
        %2110 = vrot.lane.b32.xlu0 %v796, 32
        %v2111 = vpop.permute.xlu0 %2110
        %v2113 = vsel %vm841, %v2097, 0
        %v2116 = vsel %vm841, %v2099, 0
        %v2119 = vsel %vm841, %v2101, 0
        %v2122 = vsel %vm841, %v2103, 0
        %v2125 = vsel %vm841, %v2105, 0
        %v2128 = vsel %vm841, %v2107, 0
        %v2131 = vsel %vm841, %v2109, 0
        %v2134 = vsel %vm841, %v2111, 0
        %2136 = vmatprep.subr.bf16.mxu0 0
        %2137 = vmatpush1.bf16.xpose.msra.mxu0 %v2125
        %2138 = vmatprep.subr.bf16.mxu0 0
        %2139 = vmatpush1.bf16.xpose.msra.mxu0 %v2128
        %2140 = vmatprep.subr.bf16.mxu0 0
        %2141 = vmatpush1.bf16.xpose.msra.mxu0 %v2131
        %2142 = vmatprep.subr.bf16.mxu0 0
        %2143 = vmatpush1.bf16.xpose.msra.mxu0 %v2134
        %2144 = vmatprep.subr.bf16.mxu0 0
        %2145 = vmatpush1.bf16.xpose.msra.mxu0 0
        %2146 = vmatprep.subr.bf16.mxu0 0
        %2147 = vmatpush1.bf16.xpose.msra.mxu0 0
        %2148 = vmatprep.subr.bf16.mxu0 0
        %2149 = vmatpush1.bf16.xpose.msra.mxu0 0
        %2150 = vmatprep.subr.bf16.mxu0 0
        %2151 = vmatpush1.bf16.xpose.msra.mxu0 0
        %2152 = vmatprep.subr.bf16.mxu0 0
        %2153 = vmatpush1.bf16.xpose.msra.mxu0 0
        %2154 = vmatprep.subr.bf16.mxu0 0
        %2155 = vmatpush1.bf16.xpose.msra.mxu0 0
        %2156 = vmatprep.subr.bf16.mxu0 0
        %2157 = vmatpush1.bf16.xpose.msra.mxu0 0
        %2158 = vmatprep.subr.bf16.mxu0 0
        %2159 = vmatpush1.bf16.xpose.msra.mxu0 0
        %2160 = vmatprep.subr.bf16.mxu0 0
        %2161 = vmatpush1.bf16.xpose.msra.mxu0 0
        %2162 = vmatprep.subr.bf16.mxu0 0
        %2163 = vmatpush1.bf16.xpose.msra.mxu0 0
        %2164 = vmatprep.subr.bf16.mxu0 0
        %2165 = vmatpush1.bf16.xpose.msra.mxu0 0
        %2166 = vmatprep.subr.bf16.mxu0 0
        %2167 = vmatpush1.bf16.xpose.msra.mxu0 0
        %2168 = vmatprep.mubr.bf16.mxu0 0
        %2169 = vmatmul.mubr.bf16.gmra.mrb[0].mxu0 %v2113
        %v2170 = vpop.f32.mrb[0].mxu0
        %v2171 = vadd.f32 %v1975, %v2170
        %v2172 = vpop.f32.mrb[0].mxu0
        %v2173 = vpop.f32.mrb[0].mxu0
        %v2174 = vadd.f32 %v1976, %v2173
        %v2175 = vpop.f32.mrb[0].mxu0
        %2176 = vmatprep.mubr.bf16.mxu0 0
        %2177 = vmatmul.mubr.bf16.gmra.mrb[0].mxu0 %v2116
        %v2178 = vpop.f32.mrb[0].mxu0
        %v2179 = vadd.f32 %v1977, %v2178
        %v2180 = vpop.f32.mrb[0].mxu0
        %v2181 = vpop.f32.mrb[0].mxu0
        %v2182 = vadd.f32 %v1978, %v2181
        %v2183 = vpop.f32.mrb[0].mxu0
        %2184 = vmatprep.mubr.bf16.mxu0 0
        %2185 = vmatmul.mubr.bf16.gmra.mrb[0].mxu0 %v2119
        %v2186 = vpop.f32.mrb[0].mxu0
        %v2187 = vadd.f32 %v1979, %v2186
        %v2188 = vpop.f32.mrb[0].mxu0
        %v2189 = vpop.f32.mrb[0].mxu0
        %v2190 = vadd.f32 %v1980, %v2189
        %v2191 = vpop.f32.mrb[0].mxu0
        %2192 = vmatprep.mubr.bf16.mxu0 0
        %2193 = vmatmul.mubr.bf16.gmra.mrb[0].mxu0 %v2122
        %v2194 = vpop.f32.mrb[0].mxu0
        %v2195 = vadd.f32 %v1981, %v2194
        %v2196 = vpop.f32.mrb[0].mxu0
        %v2197 = vpop.f32.mrb[0].mxu0
        %v2198 = vadd.f32 %v1982, %v2197
        %v2199 = vpop.f32.mrb[0].mxu0
        %2200 = vdwg.mxu0
        %2205 = vrot.lane.b32.xlu0 %v781, 96
        %v2206 = vpop.permute.xlu0 %2205
        %2207 = vrot.lane.b32.xlu0 %v782, 96
        %v2208 = vpop.permute.xlu0 %2207
        %2209 = vrot.lane.b32.xlu0 %v783, 96
        %v2210 = vpop.permute.xlu0 %2209
        %2211 = vrot.lane.b32.xlu0 %v784, 96
        %v2212 = vpop.permute.xlu0 %2211
        %2213 = vrot.lane.b32.xlu0 %v797, 32
        %v2214 = vpop.permute.xlu0 %2213
        %2215 = vrot.lane.b32.xlu0 %v798, 32
        %v2216 = vpop.permute.xlu0 %2215
        %2217 = vrot.lane.b32.xlu0 %v799, 32
        %v2218 = vpop.permute.xlu0 %2217
        %2219 = vrot.lane.b32.xlu0 %v800, 32
        %v2220 = vpop.permute.xlu0 %2219
        %v2222 = vsel %vm841, %v2206, 0
        %v2225 = vsel %vm841, %v2208, 0
        %v2228 = vsel %vm841, %v2210, 0
        %v2231 = vsel %vm841, %v2212, 0
        %v2234 = vsel %vm841, %v2214, 0
        %v2237 = vsel %vm841, %v2216, 0
        %v2240 = vsel %vm841, %v2218, 0
        %v2243 = vsel %vm841, %v2220, 0
        %2245 = vmatprep.subr.bf16.mxu0 0
        %2246 = vmatpush1.bf16.xpose.msra.mxu0 %v2234
        %2247 = vmatprep.subr.bf16.mxu0 0
        %2248 = vmatpush1.bf16.xpose.msra.mxu0 %v2237
        %2249 = vmatprep.subr.bf16.mxu0 0
        %2250 = vmatpush1.bf16.xpose.msra.mxu0 %v2240
        %2251 = vmatprep.subr.bf16.mxu0 0
        %2252 = vmatpush1.bf16.xpose.msra.mxu0 %v2243
        %2253 = vmatprep.subr.bf16.mxu0 0
        %2254 = vmatpush1.bf16.xpose.msra.mxu0 0
        %2255 = vmatprep.subr.bf16.mxu0 0
        %2256 = vmatpush1.bf16.xpose.msra.mxu0 0
        %2257 = vmatprep.subr.bf16.mxu0 0
        %2258 = vmatpush1.bf16.xpose.msra.mxu0 0
        %2259 = vmatprep.subr.bf16.mxu0 0
        %2260 = vmatpush1.bf16.xpose.msra.mxu0 0
        %2261 = vmatprep.subr.bf16.mxu0 0
        %2262 = vmatpush1.bf16.xpose.msra.mxu0 0
        %2263 = vmatprep.subr.bf16.mxu0 0
        %2264 = vmatpush1.bf16.xpose.msra.mxu0 0
        %2265 = vmatprep.subr.bf16.mxu0 0
        %2266 = vmatpush1.bf16.xpose.msra.mxu0 0
        %2267 = vmatprep.subr.bf16.mxu0 0
        %2268 = vmatpush1.bf16.xpose.msra.mxu0 0
        %2269 = vmatprep.subr.bf16.mxu0 0
        %2270 = vmatpush1.bf16.xpose.msra.mxu0 0
        %2271 = vmatprep.subr.bf16.mxu0 0
        %2272 = vmatpush1.bf16.xpose.msra.mxu0 0
        %2273 = vmatprep.subr.bf16.mxu0 0
        %2274 = vmatpush1.bf16.xpose.msra.mxu0 0
        %2275 = vmatprep.subr.bf16.mxu0 0
        %2276 = vmatpush1.bf16.xpose.msra.mxu0 0
        %2277 = vmatprep.mubr.bf16.mxu0 0
        %2278 = vmatmul.mubr.bf16.gmra.mrb[0].mxu0 %v2222
        %v2279 = vpop.f32.mrb[0].mxu0
        %v2280 = vadd.f32 %v1975, %v2279
        %v2281 = vpop.f32.mrb[0].mxu0
        %v2282 = vpop.f32.mrb[0].mxu0
        %v2283 = vadd.f32 %v1976, %v2282
        %v2284 = vpop.f32.mrb[0].mxu0
        %2285 = vmatprep.mubr.bf16.mxu0 0
        %2286 = vmatmul.mubr.bf16.gmra.mrb[0].mxu0 %v2225
        %v2287 = vpop.f32.mrb[0].mxu0
        %v2288 = vadd.f32 %v1977, %v2287
        %v2289 = vpop.f32.mrb[0].mxu0
        %v2290 = vpop.f32.mrb[0].mxu0
        %v2291 = vadd.f32 %v1978, %v2290
        %v2292 = vpop.f32.mrb[0].mxu0
        %2293 = vmatprep.mubr.bf16.mxu0 0
        %2294 = vmatmul.mubr.bf16.gmra.mrb[0].mxu0 %v2228
        %v2295 = vpop.f32.mrb[0].mxu0
        %v2296 = vadd.f32 %v1979, %v2295
        %v2297 = vpop.f32.mrb[0].mxu0
        %v2298 = vpop.f32.mrb[0].mxu0
        %v2299 = vadd.f32 %v1980, %v2298
        %v2300 = vpop.f32.mrb[0].mxu0
        %2301 = vmatprep.mubr.bf16.mxu0 0
        %2302 = vmatmul.mubr.bf16.gmra.mrb[0].mxu0 %v2231
        %v2303 = vpop.f32.mrb[0].mxu0
        %v2304 = vadd.f32 %v1981, %v2303
        %v2305 = vpop.f32.mrb[0].mxu0
        %v2306 = vpop.f32.mrb[0].mxu0
        %v2307 = vadd.f32 %v1982, %v2306
        %v2308 = vpop.f32.mrb[0].mxu0
        %2309 = vdwg.mxu0
        %2314 = vrot.lane.b32.xlu0 %v785, 96
        %v2315 = vpop.permute.xlu0 %2314
        %2316 = vrot.lane.b32.xlu0 %v786, 96
        %v2317 = vpop.permute.xlu0 %2316
        %2318 = vrot.lane.b32.xlu0 %v787, 96
        %v2319 = vpop.permute.xlu0 %2318
        %2320 = vrot.lane.b32.xlu0 %v788, 96
        %v2321 = vpop.permute.xlu0 %2320
        %2322 = vrot.lane.b32.xlu0 %v801, 32
        %v2323 = vpop.permute.xlu0 %2322
        %2324 = vrot.lane.b32.xlu0 %v802, 32
        %v2325 = vpop.permute.xlu0 %2324
        %2326 = vrot.lane.b32.xlu0 %v803, 32
        %v2327 = vpop.permute.xlu0 %2326
        %2328 = vrot.lane.b32.xlu0 %v804, 32
        %v2329 = vpop.permute.xlu0 %2328
        %v2331 = vsel %vm841, %v2315, 0
        %v2334 = vsel %vm841, %v2317, 0
        %v2337 = vsel %vm841, %v2319, 0
        %v2340 = vsel %vm841, %v2321, 0
        %v2343 = vsel %vm841, %v2323, 0
        %v2346 = vsel %vm841, %v2325, 0
        %v2349 = vsel %vm841, %v2327, 0
        %v2352 = vsel %vm841, %v2329, 0
        %2354 = vmatprep.subr.bf16.mxu0 0
        %2355 = vmatpush1.bf16.xpose.msra.mxu0 %v2343
        %2356 = vmatprep.subr.bf16.mxu0 0
        %2357 = vmatpush1.bf16.xpose.msra.mxu0 %v2346
        %2358 = vmatprep.subr.bf16.mxu0 0
        %2359 = vmatpush1.bf16.xpose.msra.mxu0 %v2349
        %2360 = vmatprep.subr.bf16.mxu0 0
        %2361 = vmatpush1.bf16.xpose.msra.mxu0 %v2352
        %2362 = vmatprep.subr.bf16.mxu0 0
        %2363 = vmatpush1.bf16.xpose.msra.mxu0 0
        %2364 = vmatprep.subr.bf16.mxu0 0
        %2365 = vmatpush1.bf16.xpose.msra.mxu0 0
        %2366 = vmatprep.subr.bf16.mxu0 0
        %2367 = vmatpush1.bf16.xpose.msra.mxu0 0
        %2368 = vmatprep.subr.bf16.mxu0 0
        %2369 = vmatpush1.bf16.xpose.msra.mxu0 0
        %2370 = vmatprep.subr.bf16.mxu0 0
        %2371 = vmatpush1.bf16.xpose.msra.mxu0 0
        %2372 = vmatprep.subr.bf16.mxu0 0
        %2373 = vmatpush1.bf16.xpose.msra.mxu0 0
        %2374 = vmatprep.subr.bf16.mxu0 0
        %2375 = vmatpush1.bf16.xpose.msra.mxu0 0
        %2376 = vmatprep.subr.bf16.mxu0 0
        %2377 = vmatpush1.bf16.xpose.msra.mxu0 0
        %2378 = vmatprep.subr.bf16.mxu0 0
        %2379 = vmatpush1.bf16.xpose.msra.mxu0 0
        %2380 = vmatprep.subr.bf16.mxu0 0
        %2381 = vmatpush1.bf16.xpose.msra.mxu0 0
        %2382 = vmatprep.subr.bf16.mxu0 0
        %2383 = vmatpush1.bf16.xpose.msra.mxu0 0
        %2384 = vmatprep.subr.bf16.mxu0 0
        %2385 = vmatpush1.bf16.xpose.msra.mxu0 0
        %2386 = vmatprep.mubr.bf16.mxu0 0
        %2387 = vmatmul.mubr.bf16.gmra.mrb[0].mxu0 %v2331
        %v2388 = vpop.f32.mrb[0].mxu0
        %v2389 = vadd.f32 %v1975, %v2388
        %v2390 = vpop.f32.mrb[0].mxu0
        %v2391 = vpop.f32.mrb[0].mxu0
        %v2392 = vadd.f32 %v1976, %v2391
        %v2393 = vpop.f32.mrb[0].mxu0
        %2394 = vmatprep.mubr.bf16.mxu0 0
        %2395 = vmatmul.mubr.bf16.gmra.mrb[0].mxu0 %v2334
        %v2396 = vpop.f32.mrb[0].mxu0
        %v2397 = vadd.f32 %v1977, %v2396
        %v2398 = vpop.f32.mrb[0].mxu0
        %v2399 = vpop.f32.mrb[0].mxu0
        %v2400 = vadd.f32 %v1978, %v2399
        %v2401 = vpop.f32.mrb[0].mxu0
        %2402 = vmatprep.mubr.bf16.mxu0 0
        %2403 = vmatmul.mubr.bf16.gmra.mrb[0].mxu0 %v2337
        %v2404 = vpop.f32.mrb[0].mxu0
        %v2405 = vadd.f32 %v1979, %v2404
        %v2406 = vpop.f32.mrb[0].mxu0
        %v2407 = vpop.f32.mrb[0].mxu0
        %v2408 = vadd.f32 %v1980, %v2407
        %v2409 = vpop.f32.mrb[0].mxu0
        %2410 = vmatprep.mubr.bf16.mxu0 0
        %2411 = vmatmul.mubr.bf16.gmra.mrb[0].mxu0 %v2340
        %v2412 = vpop.f32.mrb[0].mxu0
        %v2413 = vadd.f32 %v1981, %v2412
        %v2414 = vpop.f32.mrb[0].mxu0
        %v2415 = vpop.f32.mrb[0].mxu0
        %v2416 = vadd.f32 %v1982, %v2415
        %v2417 = vpop.f32.mrb[0].mxu0
        %2418 = vdwg.mxu0
        %v2419 = vadd.f32 %v2062, %v709
        %v2420 = vadd.f32 %v2065, %v710
        %v2421 = vadd.f32 %v2070, %v711
        %v2422 = vadd.f32 %v2073, %v712
        %v2423 = vadd.f32 %v2078, %v713
        %v2424 = vadd.f32 %v2081, %v714
        %v2425 = vadd.f32 %v2086, %v715
        %v2426 = vadd.f32 %v2089, %v716
        %v2427 = vadd.f32 %v2171, %v717
        %v2428 = vadd.f32 %v2174, %v718
        %v2429 = vadd.f32 %v2179, %v719
        %v2430 = vadd.f32 %v2182, %v720
        %v2431 = vadd.f32 %v2187, %v721
        %v2432 = vadd.f32 %v2190, %v722
        %v2433 = vadd.f32 %v2195, %v723
        %v2434 = vadd.f32 %v2198, %v724
        %v2435 = vadd.f32 %v2280, %v725
        %v2436 = vadd.f32 %v2283, %v726
        %v2437 = vadd.f32 %v2288, %v727
        %v2438 = vadd.f32 %v2291, %v728
        %v2439 = vadd.f32 %v2296, %v729
        %v2440 = vadd.f32 %v2299, %v730
        %v2441 = vadd.f32 %v2304, %v731
        %v2442 = vadd.f32 %v2307, %v732
        %v2443 = vadd.f32 %v2389, %v733
        %v2444 = vadd.f32 %v2392, %v734
        %v2445 = vadd.f32 %v2397, %v735
        %v2446 = vadd.f32 %v2400, %v736
        %v2447 = vadd.f32 %v2405, %v737
        %v2448 = vadd.f32 %v2408, %v738
        %v2449 = vadd.f32 %v2413, %v739
        %v2450 = vadd.f32 %v2416, %v740
        %v2451 = vsel %vm467, %v2419, -inf
        %2452 = vmax.xlane.f32.xlu0 %v2451
        %v2453 = vpop.xlane.xlu0 %2452
        %v2454 = vsel %vm467, %v2420, -inf
        %2455 = vmax.xlane.f32.xlu0 %v2454
        %v2456 = vpop.xlane.xlu0 %2455
        %v2457 = vsel %vm467, %v2421, -inf
        %2458 = vmax.xlane.f32.xlu0 %v2457
        %v2459 = vpop.xlane.xlu0 %2458
        %v2460 = vsel %vm467, %v2422, -inf
        %2461 = vmax.xlane.f32.xlu0 %v2460
        %v2462 = vpop.xlane.xlu0 %2461
        %v2463 = vsel %vm467, %v2423, -inf
        %2464 = vmax.xlane.f32.xlu0 %v2463
        %v2465 = vpop.xlane.xlu0 %2464
        %v2466 = vsel %vm467, %v2424, -inf
        %2467 = vmax.xlane.f32.xlu0 %v2466
        %v2468 = vpop.xlane.xlu0 %2467
        %v2469 = vsel %vm467, %v2425, -inf
        %2470 = vmax.xlane.f32.xlu0 %v2469
        %v2471 = vpop.xlane.xlu0 %2470
        %v2472 = vsel %vm467, %v2426, -inf
        %2473 = vmax.xlane.f32.xlu0 %v2472
        %v2474 = vpop.xlane.xlu0 %2473
        %v2475 = vsel %vm467, %v2427, -inf
        %2476 = vmax.xlane.f32.xlu0 %v2475
        %v2477 = vpop.xlane.xlu0 %2476
        %v2478 = vsel %vm467, %v2428, -inf
        %2479 = vmax.xlane.f32.xlu0 %v2478
        %v2480 = vpop.xlane.xlu0 %2479
        %v2481 = vsel %vm467, %v2429, -inf
        %2482 = vmax.xlane.f32.xlu0 %v2481
        %v2483 = vpop.xlane.xlu0 %2482
        %v2484 = vsel %vm467, %v2430, -inf
        %2485 = vmax.xlane.f32.xlu0 %v2484
        %v2486 = vpop.xlane.xlu0 %2485
        %v2487 = vsel %vm467, %v2431, -inf
        %2488 = vmax.xlane.f32.xlu0 %v2487
        %v2489 = vpop.xlane.xlu0 %2488
        %v2490 = vsel %vm467, %v2432, -inf
        %2491 = vmax.xlane.f32.xlu0 %v2490
        %v2492 = vpop.xlane.xlu0 %2491
        %v2493 = vsel %vm467, %v2433, -inf
        %2494 = vmax.xlane.f32.xlu0 %v2493
        %v2495 = vpop.xlane.xlu0 %2494
        %v2496 = vsel %vm467, %v2434, -inf
        %2497 = vmax.xlane.f32.xlu0 %v2496
        %v2498 = vpop.xlane.xlu0 %2497
        %v2499 = vsel %vm467, %v2435, -inf
        %2500 = vmax.xlane.f32.xlu0 %v2499
        %v2501 = vpop.xlane.xlu0 %2500
        %v2502 = vsel %vm467, %v2436, -inf
        %2503 = vmax.xlane.f32.xlu0 %v2502
        %v2504 = vpop.xlane.xlu0 %2503
        %v2505 = vsel %vm467, %v2437, -inf
        %2506 = vmax.xlane.f32.xlu0 %v2505
        %v2507 = vpop.xlane.xlu0 %2506
        %v2508 = vsel %vm467, %v2438, -inf
        %2509 = vmax.xlane.f32.xlu0 %v2508
        %v2510 = vpop.xlane.xlu0 %2509
        %v2511 = vsel %vm467, %v2439, -inf
        %2512 = vmax.xlane.f32.xlu0 %v2511
        %v2513 = vpop.xlane.xlu0 %2512
        %v2514 = vsel %vm467, %v2440, -inf
        %2515 = vmax.xlane.f32.xlu0 %v2514
        %v2516 = vpop.xlane.xlu0 %2515
        %v2517 = vsel %vm467, %v2441, -inf
        %2518 = vmax.xlane.f32.xlu0 %v2517
        %v2519 = vpop.xlane.xlu0 %2518
        %v2520 = vsel %vm467, %v2442, -inf
        %2521 = vmax.xlane.f32.xlu0 %v2520
        %v2522 = vpop.xlane.xlu0 %2521
        %v2523 = vsel %vm467, %v2443, -inf
        %2524 = vmax.xlane.f32.xlu0 %v2523
        %v2525 = vpop.xlane.xlu0 %2524
        %v2526 = vsel %vm467, %v2444, -inf
        %2527 = vmax.xlane.f32.xlu0 %v2526
        %v2528 = vpop.xlane.xlu0 %2527
        %v2529 = vsel %vm467, %v2445, -inf
        %2530 = vmax.xlane.f32.xlu0 %v2529
        %v2531 = vpop.xlane.xlu0 %2530
        %v2532 = vsel %vm467, %v2446, -inf
        %2533 = vmax.xlane.f32.xlu0 %v2532
        %v2534 = vpop.xlane.xlu0 %2533
        %v2535 = vsel %vm467, %v2447, -inf
        %2536 = vmax.xlane.f32.xlu0 %v2535
        %v2537 = vpop.xlane.xlu0 %2536
        %v2538 = vsel %vm467, %v2448, -inf
        %2539 = vmax.xlane.f32.xlu0 %v2538
        %v2540 = vpop.xlane.xlu0 %2539
        %v2541 = vsel %vm467, %v2449, -inf
        %2542 = vmax.xlane.f32.xlu0 %v2541
        %v2543 = vpop.xlane.xlu0 %2542
        %v2544 = vsel %vm467, %v2450, -inf
        %2545 = vmax.xlane.f32.xlu0 %v2544
        %v2546 = vpop.xlane.xlu0 %2545
        %v2547 = vsub.f32 %v2419, %v2453
        %v2548 = vsub.f32 %v2420, %v2456
        %v2549 = vsub.f32 %v2421, %v2459
        %v2550 = vsub.f32 %v2422, %v2462
        %v2551 = vsub.f32 %v2423, %v2465
        %v2552 = vsub.f32 %v2424, %v2468
        %v2553 = vsub.f32 %v2425, %v2471
        %v2554 = vsub.f32 %v2426, %v2474
        %v2555 = vsub.f32 %v2427, %v2477
        %v2556 = vsub.f32 %v2428, %v2480
        %v2557 = vsub.f32 %v2429, %v2483
        %v2558 = vsub.f32 %v2430, %v2486
        %v2559 = vsub.f32 %v2431, %v2489
        %v2560 = vsub.f32 %v2432, %v2492
        %v2561 = vsub.f32 %v2433, %v2495
        %v2562 = vsub.f32 %v2434, %v2498
        %v2563 = vsub.f32 %v2435, %v2501
        %v2564 = vsub.f32 %v2436, %v2504
        %v2565 = vsub.f32 %v2437, %v2507
        %v2566 = vsub.f32 %v2438, %v2510
        %v2567 = vsub.f32 %v2439, %v2513
        %v2568 = vsub.f32 %v2440, %v2516
        %v2569 = vsub.f32 %v2441, %v2519
        %v2570 = vsub.f32 %v2442, %v2522
        %v2571 = vsub.f32 %v2443, %v2525
        %v2572 = vsub.f32 %v2444, %v2528
        %v2573 = vsub.f32 %v2445, %v2531
        %v2574 = vsub.f32 %v2446, %v2534
        %v2575 = vsub.f32 %v2447, %v2537
        %v2576 = vsub.f32 %v2448, %v2540
        %v2577 = vsub.f32 %v2449, %v2543
        %v2578 = vsub.f32 %v2450, %v2546
        %v2579 = vmul.f32 %v2547, 1.442695
        %v2580 = vpow.pop %v2579
        %v2581 = vmul.f32 %v2548, 1.442695
        %v2582 = vpow.pop %v2581
        %v2583 = vmul.f32 %v2549, 1.442695
        %v2584 = vpow.pop %v2583
        %v2585 = vmul.f32 %v2550, 1.442695
        %v2586 = vpow.pop %v2585
        %v2587 = vmul.f32 %v2551, 1.442695
        %v2588 = vpow.pop %v2587
        %v2589 = vmul.f32 %v2552, 1.442695
        %v2590 = vpow.pop %v2589
        %v2591 = vmul.f32 %v2553, 1.442695
        %v2592 = vpow.pop %v2591
        %v2593 = vmul.f32 %v2554, 1.442695
        %v2594 = vpow.pop %v2593
        %v2595 = vmul.f32 %v2555, 1.442695
        %v2596 = vpow.pop %v2595
        %v2597 = vmul.f32 %v2556, 1.442695
        %v2598 = vpow.pop %v2597
        %v2599 = vmul.f32 %v2557, 1.442695
        %v2600 = vpow.pop %v2599
        %v2601 = vmul.f32 %v2558, 1.442695
        %v2602 = vpow.pop %v2601
        %v2603 = vmul.f32 %v2559, 1.442695
        %v2604 = vpow.pop %v2603
        %v2605 = vmul.f32 %v2560, 1.442695
        %v2606 = vpow.pop %v2605
        %v2607 = vmul.f32 %v2561, 1.442695
        %v2608 = vpow.pop %v2607
        %v2609 = vmul.f32 %v2562, 1.442695
        %v2610 = vpow.pop %v2609
        %v2611 = vmul.f32 %v2563, 1.442695
        %v2612 = vpow.pop %v2611
        %v2613 = vmul.f32 %v2564, 1.442695
        %v2614 = vpow.pop %v2613
        %v2615 = vmul.f32 %v2565, 1.442695
        %v2616 = vpow.pop %v2615
        %v2617 = vmul.f32 %v2566, 1.442695
        %v2618 = vpow.pop %v2617
        %v2619 = vmul.f32 %v2567, 1.442695
        %v2620 = vpow.pop %v2619
        %v2621 = vmul.f32 %v2568, 1.442695
        %v2622 = vpow.pop %v2621
        %v2623 = vmul.f32 %v2569, 1.442695
        %v2624 = vpow.pop %v2623
        %v2625 = vmul.f32 %v2570, 1.442695
        %v2626 = vpow.pop %v2625
        %v2627 = vmul.f32 %v2571, 1.442695
        %v2628 = vpow.pop %v2627
        %v2629 = vmul.f32 %v2572, 1.442695
        %v2630 = vpow.pop %v2629
        %v2631 = vmul.f32 %v2573, 1.442695
        %v2632 = vpow.pop %v2631
        %v2633 = vmul.f32 %v2574, 1.442695
        %v2634 = vpow.pop %v2633
        %v2635 = vmul.f32 %v2575, 1.442695
        %v2636 = vpow.pop %v2635
        %v2637 = vmul.f32 %v2576, 1.442695
        %v2638 = vpow.pop %v2637
        %v2639 = vmul.f32 %v2577, 1.442695
        %v2640 = vpow.pop %v2639
        %v2641 = vmul.f32 %v2578, 1.442695
        %v2642 = vpow.pop %v2641
        %v2643 = vsel %vm467, %v2580, 0.0
        %2644 = vadd.xlane.f32.xlu0 %v2643
        %v2645 = vpop.xlane.xlu0 %2644
        %v2646 = vsel %vm467, %v2582, 0.0
        %2647 = vadd.xlane.f32.xlu0 %v2646
        %v2648 = vpop.xlane.xlu0 %2647
        %v2649 = vsel %vm467, %v2584, 0.0
        %2650 = vadd.xlane.f32.xlu0 %v2649
        %v2651 = vpop.xlane.xlu0 %2650
        %v2652 = vsel %vm467, %v2586, 0.0
        %2653 = vadd.xlane.f32.xlu0 %v2652
        %v2654 = vpop.xlane.xlu0 %2653
        %v2655 = vsel %vm467, %v2588, 0.0
        %2656 = vadd.xlane.f32.xlu0 %v2655
        %v2657 = vpop.xlane.xlu0 %2656
        %v2658 = vsel %vm467, %v2590, 0.0
        %2659 = vadd.xlane.f32.xlu0 %v2658
        %v2660 = vpop.xlane.xlu0 %2659
        %v2661 = vsel %vm467, %v2592, 0.0
        %2662 = vadd.xlane.f32.xlu0 %v2661
        %v2663 = vpop.xlane.xlu0 %2662
        %v2664 = vsel %vm467, %v2594, 0.0
        %2665 = vadd.xlane.f32.xlu0 %v2664
        %v2666 = vpop.xlane.xlu0 %2665
        %v2667 = vsel %vm467, %v2596, 0.0
        %2668 = vadd.xlane.f32.xlu0 %v2667
        %v2669 = vpop.xlane.xlu0 %2668
        %v2670 = vsel %vm467, %v2598, 0.0
        %2671 = vadd.xlane.f32.xlu0 %v2670
        %v2672 = vpop.xlane.xlu0 %2671
        %v2673 = vsel %vm467, %v2600, 0.0
        %2674 = vadd.xlane.f32.xlu0 %v2673
        %v2675 = vpop.xlane.xlu0 %2674
        %v2676 = vsel %vm467, %v2602, 0.0
        %2677 = vadd.xlane.f32.xlu0 %v2676
        %v2678 = vpop.xlane.xlu0 %2677
        %v2679 = vsel %vm467, %v2604, 0.0
        %2680 = vadd.xlane.f32.xlu0 %v2679
        %v2681 = vpop.xlane.xlu0 %2680
        %v2682 = vsel %vm467, %v2606, 0.0
        %2683 = vadd.xlane.f32.xlu0 %v2682
        %v2684 = vpop.xlane.xlu0 %2683
        %v2685 = vsel %vm467, %v2608, 0.0
        %2686 = vadd.xlane.f32.xlu0 %v2685
        %v2687 = vpop.xlane.xlu0 %2686
        %v2688 = vsel %vm467, %v2610, 0.0
        %2689 = vadd.xlane.f32.xlu0 %v2688
        %v2690 = vpop.xlane.xlu0 %2689
        %v2691 = vsel %vm467, %v2612, 0.0
        %2692 = vadd.xlane.f32.xlu0 %v2691
        %v2693 = vpop.xlane.xlu0 %2692
        %v2694 = vsel %vm467, %v2614, 0.0
        %2695 = vadd.xlane.f32.xlu0 %v2694
        %v2696 = vpop.xlane.xlu0 %2695
        %v2697 = vsel %vm467, %v2616, 0.0
        %2698 = vadd.xlane.f32.xlu0 %v2697
        %v2699 = vpop.xlane.xlu0 %2698
        %v2700 = vsel %vm467, %v2618, 0.0
        %2701 = vadd.xlane.f32.xlu0 %v2700
        %v2702 = vpop.xlane.xlu0 %2701
        %v2703 = vsel %vm467, %v2620, 0.0
        %2704 = vadd.xlane.f32.xlu0 %v2703
        %v2705 = vpop.xlane.xlu0 %2704
        %v2706 = vsel %vm467, %v2622, 0.0
        %2707 = vadd.xlane.f32.xlu0 %v2706
        %v2708 = vpop.xlane.xlu0 %2707
        %v2709 = vsel %vm467, %v2624, 0.0
        %2710 = vadd.xlane.f32.xlu0 %v2709
        %v2711 = vpop.xlane.xlu0 %2710
        %v2712 = vsel %vm467, %v2626, 0.0
        %2713 = vadd.xlane.f32.xlu0 %v2712
        %v2714 = vpop.xlane.xlu0 %2713
        %v2715 = vsel %vm467, %v2628, 0.0
        %2716 = vadd.xlane.f32.xlu0 %v2715
        %v2717 = vpop.xlane.xlu0 %2716
        %v2718 = vsel %vm467, %v2630, 0.0
        %2719 = vadd.xlane.f32.xlu0 %v2718
        %v2720 = vpop.xlane.xlu0 %2719
        %v2721 = vsel %vm467, %v2632, 0.0
        %2722 = vadd.xlane.f32.xlu0 %v2721
        %v2723 = vpop.xlane.xlu0 %2722
        %v2724 = vsel %vm467, %v2634, 0.0
        %2725 = vadd.xlane.f32.xlu0 %v2724
        %v2726 = vpop.xlane.xlu0 %2725
        %v2727 = vsel %vm467, %v2636, 0.0
        %2728 = vadd.xlane.f32.xlu0 %v2727
        %v2729 = vpop.xlane.xlu0 %2728
        %v2730 = vsel %vm467, %v2638, 0.0
        %2731 = vadd.xlane.f32.xlu0 %v2730
        %v2732 = vpop.xlane.xlu0 %2731
        %v2733 = vsel %vm467, %v2640, 0.0
        %2734 = vadd.xlane.f32.xlu0 %v2733
        %v2735 = vpop.xlane.xlu0 %2734
        %v2736 = vsel %vm467, %v2642, 0.0
        %2737 = vadd.xlane.f32.xlu0 %v2736
        %v2738 = vpop.xlane.xlu0 %2737
        %v2739 = vpack.c.bf16 %v2582, %v2580
        %v2740 = vpack.c.bf16 %v2586, %v2584
        %v2741 = vpack.c.bf16 %v2590, %v2588
        %v2742 = vpack.c.bf16 %v2594, %v2592
        %v2743 = vpack.c.bf16 %v2598, %v2596
        %v2744 = vpack.c.bf16 %v2602, %v2600
        %v2745 = vpack.c.bf16 %v2606, %v2604
        %v2746 = vpack.c.bf16 %v2610, %v2608
        %v2747 = vpack.c.bf16 %v2614, %v2612
        %v2748 = vpack.c.bf16 %v2618, %v2616
        %v2749 = vpack.c.bf16 %v2622, %v2620
        %v2750 = vpack.c.bf16 %v2626, %v2624
        %v2751 = vpack.c.bf16 %v2630, %v2628
        %v2752 = vpack.c.bf16 %v2634, %v2632
        %v2753 = vpack.c.bf16 %v2638, %v2636
        %v2754 = vpack.c.bf16 %v2642, %v2640
        %2759 = vrot.lane.b32.xlu0 %v805, 96
        %v2760 = vpop.permute.xlu0 %2759
        %2761 = vrot.lane.b32.xlu0 %v806, 96
        %v2762 = vpop.permute.xlu0 %2761
        %2763 = vrot.lane.b32.xlu0 %v807, 96
        %v2764 = vpop.permute.xlu0 %2763
        %2765 = vrot.lane.b32.xlu0 %v808, 96
        %v2766 = vpop.permute.xlu0 %2765
        %v2772 = vsel %vm467, %v2739, 0
        %v2775 = vsel %vm467, %v2740, 0
        %v2778 = vsel %vm467, %v2741, 0
        %v2781 = vsel %vm467, %v2742, 0
        %2783 = vmatprep.subr.bf16.mxu0 0
        %2784 = vmatpush1.bf16.msra.mxu0 %v2760
        %2785 = vmatprep.subr.bf16.mxu0 0
        %2786 = vmatpush1.bf16.msra.mxu0 %v2762
        %2787 = vmatprep.subr.bf16.mxu0 0
        %2788 = vmatpush1.bf16.msra.mxu0 %v2764
        %2789 = vmatprep.subr.bf16.mxu0 0
        %2790 = vmatpush1.bf16.msra.mxu0 %v2766
        %2791 = vmatprep.subr.bf16.mxu0 0
        %2792 = vmatpush1.bf16.msra.mxu0 0
        %2793 = vmatprep.subr.bf16.mxu0 0
        %2794 = vmatpush1.bf16.msra.mxu0 0
        %2795 = vmatprep.subr.bf16.mxu0 0
        %2796 = vmatpush1.bf16.msra.mxu0 0
        %2797 = vmatprep.subr.bf16.mxu0 0
        %2798 = vmatpush1.bf16.msra.mxu0 0
        %2799 = vmatprep.subr.bf16.mxu0 0
        %2800 = vmatpush1.bf16.msra.mxu0 0
        %2801 = vmatprep.subr.bf16.mxu0 0
        %2802 = vmatpush1.bf16.msra.mxu0 0
        %2803 = vmatprep.subr.bf16.mxu0 0
        %2804 = vmatpush1.bf16.msra.mxu0 0
        %2805 = vmatprep.subr.bf16.mxu0 0
        %2806 = vmatpush1.bf16.msra.mxu0 0
        %2807 = vmatprep.subr.bf16.mxu0 0
        %2808 = vmatpush1.bf16.msra.mxu0 0
        %2809 = vmatprep.subr.bf16.mxu0 0
        %2810 = vmatpush1.bf16.msra.mxu0 0
        %2811 = vmatprep.subr.bf16.mxu0 0
        %2812 = vmatpush1.bf16.msra.mxu0 0
        %2813 = vmatprep.subr.bf16.mxu0 0
        %2814 = vmatpush1.bf16.msra.mxu0 0
        %2815 = vmatprep.mubr.bf16.mxu0 0
        %2816 = vmatmul.mubr.bf16.gmra.mrb[0].mxu0 %v2772
        %v2817 = vpop.f32.mrb[0].mxu0
        %v2818 = vadd.f32 0.0, %v2817
        %v2819 = vpop.f32.mrb[0].mxu0
        %v2820 = vpop.f32.mrb[0].mxu0
        %v2821 = vadd.f32 0.0, %v2820
        %v2822 = vpop.f32.mrb[0].mxu0
        %2823 = vmatprep.mubr.bf16.mxu0 0
        %2824 = vmatmul.mubr.bf16.gmra.mrb[0].mxu0 %v2775
        %v2825 = vpop.f32.mrb[0].mxu0
        %v2826 = vadd.f32 0.0, %v2825
        %v2827 = vpop.f32.mrb[0].mxu0
        %v2828 = vpop.f32.mrb[0].mxu0
        %v2829 = vadd.f32 0.0, %v2828
        %v2830 = vpop.f32.mrb[0].mxu0
        %2831 = vmatprep.mubr.bf16.mxu0 0
        %2832 = vmatmul.mubr.bf16.gmra.mrb[0].mxu0 %v2778
        %v2833 = vpop.f32.mrb[0].mxu0
        %v2834 = vadd.f32 0.0, %v2833
        %v2835 = vpop.f32.mrb[0].mxu0
        %v2836 = vpop.f32.mrb[0].mxu0
        %v2837 = vadd.f32 0.0, %v2836
        %v2838 = vpop.f32.mrb[0].mxu0
        %2839 = vmatprep.mubr.bf16.mxu0 0
        %2840 = vmatmul.mubr.bf16.gmra.mrb[0].mxu0 %v2781
        %v2841 = vpop.f32.mrb[0].mxu0
        %v2842 = vadd.f32 0.0, %v2841
        %v2843 = vpop.f32.mrb[0].mxu0
        %v2844 = vpop.f32.mrb[0].mxu0
        %v2845 = vadd.f32 0.0, %v2844
        %v2846 = vpop.f32.mrb[0].mxu0
        %2847 = vdwg.mxu0
        %2852 = vrot.lane.b32.xlu0 %v809, 96
        %v2853 = vpop.permute.xlu0 %2852
        %2854 = vrot.lane.b32.xlu0 %v810, 96
        %v2855 = vpop.permute.xlu0 %2854
        %2856 = vrot.lane.b32.xlu0 %v811, 96
        %v2857 = vpop.permute.xlu0 %2856
        %2858 = vrot.lane.b32.xlu0 %v812, 96
        %v2859 = vpop.permute.xlu0 %2858
        %v2865 = vsel %vm467, %v2743, 0
        %v2868 = vsel %vm467, %v2744, 0
        %v2871 = vsel %vm467, %v2745, 0
        %v2874 = vsel %vm467, %v2746, 0
        %2876 = vmatprep.subr.bf16.mxu0 0
        %2877 = vmatpush1.bf16.msra.mxu0 %v2853
        %2878 = vmatprep.subr.bf16.mxu0 0
        %2879 = vmatpush1.bf16.msra.mxu0 %v2855
        %2880 = vmatprep.subr.bf16.mxu0 0
        %2881 = vmatpush1.bf16.msra.mxu0 %v2857
        %2882 = vmatprep.subr.bf16.mxu0 0
        %2883 = vmatpush1.bf16.msra.mxu0 %v2859
        %2884 = vmatprep.subr.bf16.mxu0 0
        %2885 = vmatpush1.bf16.msra.mxu0 0
        %2886 = vmatprep.subr.bf16.mxu0 0
        %2887 = vmatpush1.bf16.msra.mxu0 0
        %2888 = vmatprep.subr.bf16.mxu0 0
        %2889 = vmatpush1.bf16.msra.mxu0 0
        %2890 = vmatprep.subr.bf16.mxu0 0
        %2891 = vmatpush1.bf16.msra.mxu0 0
        %2892 = vmatprep.subr.bf16.mxu0 0
        %2893 = vmatpush1.bf16.msra.mxu0 0
        %2894 = vmatprep.subr.bf16.mxu0 0
        %2895 = vmatpush1.bf16.msra.mxu0 0
        %2896 = vmatprep.subr.bf16.mxu0 0
        %2897 = vmatpush1.bf16.msra.mxu0 0
        %2898 = vmatprep.subr.bf16.mxu0 0
        %2899 = vmatpush1.bf16.msra.mxu0 0
        %2900 = vmatprep.subr.bf16.mxu0 0
        %2901 = vmatpush1.bf16.msra.mxu0 0
        %2902 = vmatprep.subr.bf16.mxu0 0
        %2903 = vmatpush1.bf16.msra.mxu0 0
        %2904 = vmatprep.subr.bf16.mxu0 0
        %2905 = vmatpush1.bf16.msra.mxu0 0
        %2906 = vmatprep.subr.bf16.mxu0 0
        %2907 = vmatpush1.bf16.msra.mxu0 0
        %2908 = vmatprep.mubr.bf16.mxu0 0
        %2909 = vmatmul.mubr.bf16.gmra.mrb[0].mxu0 %v2865
        %v2910 = vpop.f32.mrb[0].mxu0
        %v2911 = vadd.f32 0.0, %v2910
        %v2912 = vpop.f32.mrb[0].mxu0
        %v2913 = vpop.f32.mrb[0].mxu0
        %v2914 = vadd.f32 0.0, %v2913
        %v2915 = vpop.f32.mrb[0].mxu0
        %2916 = vmatprep.mubr.bf16.mxu0 0
        %2917 = vmatmul.mubr.bf16.gmra.mrb[0].mxu0 %v2868
        %v2918 = vpop.f32.mrb[0].mxu0
        %v2919 = vadd.f32 0.0, %v2918
        %v2920 = vpop.f32.mrb[0].mxu0
        %v2921 = vpop.f32.mrb[0].mxu0
        %v2922 = vadd.f32 0.0, %v2921
        %v2923 = vpop.f32.mrb[0].mxu0
        %2924 = vmatprep.mubr.bf16.mxu0 0
        %2925 = vmatmul.mubr.bf16.gmra.mrb[0].mxu0 %v2871
        %v2926 = vpop.f32.mrb[0].mxu0
        %v2927 = vadd.f32 0.0, %v2926
        %v2928 = vpop.f32.mrb[0].mxu0
        %v2929 = vpop.f32.mrb[0].mxu0
        %v2930 = vadd.f32 0.0, %v2929
        %v2931 = vpop.f32.mrb[0].mxu0
        %2932 = vmatprep.mubr.bf16.mxu0 0
        %2933 = vmatmul.mubr.bf16.gmra.mrb[0].mxu0 %v2874
        %v2934 = vpop.f32.mrb[0].mxu0
        %v2935 = vadd.f32 0.0, %v2934
        %v2936 = vpop.f32.mrb[0].mxu0
        %v2937 = vpop.f32.mrb[0].mxu0
        %v2938 = vadd.f32 0.0, %v2937
        %v2939 = vpop.f32.mrb[0].mxu0
        %2940 = vdwg.mxu0
        %2945 = vrot.lane.b32.xlu0 %v813, 96
        %v2946 = vpop.permute.xlu0 %2945
        %2947 = vrot.lane.b32.xlu0 %v814, 96
        %v2948 = vpop.permute.xlu0 %2947
        %2949 = vrot.lane.b32.xlu0 %v815, 96
        %v2950 = vpop.permute.xlu0 %2949
        %2951 = vrot.lane.b32.xlu0 %v816, 96
        %v2952 = vpop.permute.xlu0 %2951
        %v2958 = vsel %vm467, %v2747, 0
        %v2961 = vsel %vm467, %v2748, 0
        %v2964 = vsel %vm467, %v2749, 0
        %v2967 = vsel %vm467, %v2750, 0
        %2969 = vmatprep.subr.bf16.mxu0 0
        %2970 = vmatpush1.bf16.msra.mxu0 %v2946
        %2971 = vmatprep.subr.bf16.mxu0 0
        %2972 = vmatpush1.bf16.msra.mxu0 %v2948
        %2973 = vmatprep.subr.bf16.mxu0 0
        %2974 = vmatpush1.bf16.msra.mxu0 %v2950
        %2975 = vmatprep.subr.bf16.mxu0 0
        %2976 = vmatpush1.bf16.msra.mxu0 %v2952
        %2977 = vmatprep.subr.bf16.mxu0 0
        %2978 = vmatpush1.bf16.msra.mxu0 0
        %2979 = vmatprep.subr.bf16.mxu0 0
        %2980 = vmatpush1.bf16.msra.mxu0 0
        %2981 = vmatprep.subr.bf16.mxu0 0
        %2982 = vmatpush1.bf16.msra.mxu0 0
        %2983 = vmatprep.subr.bf16.mxu0 0
        %2984 = vmatpush1.bf16.msra.mxu0 0
        %2985 = vmatprep.subr.bf16.mxu0 0
        %2986 = vmatpush1.bf16.msra.mxu0 0
        %2987 = vmatprep.subr.bf16.mxu0 0
        %2988 = vmatpush1.bf16.msra.mxu0 0
        %2989 = vmatprep.subr.bf16.mxu0 0
        %2990 = vmatpush1.bf16.msra.mxu0 0
        %2991 = vmatprep.subr.bf16.mxu0 0
        %2992 = vmatpush1.bf16.msra.mxu0 0
        %2993 = vmatprep.subr.bf16.mxu0 0
        %2994 = vmatpush1.bf16.msra.mxu0 0
        %2995 = vmatprep.subr.bf16.mxu0 0
        %2996 = vmatpush1.bf16.msra.mxu0 0
        %2997 = vmatprep.subr.bf16.mxu0 0
        %2998 = vmatpush1.bf16.msra.mxu0 0
        %2999 = vmatprep.subr.bf16.mxu0 0
        %3000 = vmatpush1.bf16.msra.mxu0 0
        %3001 = vmatprep.mubr.bf16.mxu0 0
        %3002 = vmatmul.mubr.bf16.gmra.mrb[0].mxu0 %v2958
        %v3003 = vpop.f32.mrb[0].mxu0
        %v3004 = vadd.f32 0.0, %v3003
        %v3005 = vpop.f32.mrb[0].mxu0
        %v3006 = vpop.f32.mrb[0].mxu0
        %v3007 = vadd.f32 0.0, %v3006
        %v3008 = vpop.f32.mrb[0].mxu0
        %3009 = vmatprep.mubr.bf16.mxu0 0
        %3010 = vmatmul.mubr.bf16.gmra.mrb[0].mxu0 %v2961
        %v3011 = vpop.f32.mrb[0].mxu0
        %v3012 = vadd.f32 0.0, %v3011
        %v3013 = vpop.f32.mrb[0].mxu0
        %v3014 = vpop.f32.mrb[0].mxu0
        %v3015 = vadd.f32 0.0, %v3014
        %v3016 = vpop.f32.mrb[0].mxu0
        %3017 = vmatprep.mubr.bf16.mxu0 0
        %3018 = vmatmul.mubr.bf16.gmra.mrb[0].mxu0 %v2964
        %v3019 = vpop.f32.mrb[0].mxu0
        %v3020 = vadd.f32 0.0, %v3019
        %v3021 = vpop.f32.mrb[0].mxu0
        %v3022 = vpop.f32.mrb[0].mxu0
        %v3023 = vadd.f32 0.0, %v3022
        %v3024 = vpop.f32.mrb[0].mxu0
        %3025 = vmatprep.mubr.bf16.mxu0 0
        %3026 = vmatmul.mubr.bf16.gmra.mrb[0].mxu0 %v2967
        %v3027 = vpop.f32.mrb[0].mxu0
        %v3028 = vadd.f32 0.0, %v3027
        %v3029 = vpop.f32.mrb[0].mxu0
        %v3030 = vpop.f32.mrb[0].mxu0
        %v3031 = vadd.f32 0.0, %v3030
        %v3032 = vpop.f32.mrb[0].mxu0
        %3033 = vdwg.mxu0
        %3038 = vrot.lane.b32.xlu0 %v817, 96
        %v3039 = vpop.permute.xlu0 %3038
        %3040 = vrot.lane.b32.xlu0 %v818, 96
        %v3041 = vpop.permute.xlu0 %3040
        %3042 = vrot.lane.b32.xlu0 %v819, 96
        %v3043 = vpop.permute.xlu0 %3042
        %3044 = vrot.lane.b32.xlu0 %v820, 96
        %v3045 = vpop.permute.xlu0 %3044
        %v3051 = vsel %vm467, %v2751, 0
        %v3054 = vsel %vm467, %v2752, 0
        %v3057 = vsel %vm467, %v2753, 0
        %v3060 = vsel %vm467, %v2754, 0
        %3062 = vmatprep.subr.bf16.mxu0 0
        %3063 = vmatpush1.bf16.msra.mxu0 %v3039
        %3064 = vmatprep.subr.bf16.mxu0 0
        %3065 = vmatpush1.bf16.msra.mxu0 %v3041
        %3066 = vmatprep.subr.bf16.mxu0 0
        %3067 = vmatpush1.bf16.msra.mxu0 %v3043
        %3068 = vmatprep.subr.bf16.mxu0 0
        %3069 = vmatpush1.bf16.msra.mxu0 %v3045
        %3070 = vmatprep.subr.bf16.mxu0 0
        %3071 = vmatpush1.bf16.msra.mxu0 0
        %3072 = vmatprep.subr.bf16.mxu0 0
        %3073 = vmatpush1.bf16.msra.mxu0 0
        %3074 = vmatprep.subr.bf16.mxu0 0
        %3075 = vmatpush1.bf16.msra.mxu0 0
        %3076 = vmatprep.subr.bf16.mxu0 0
        %3077 = vmatpush1.bf16.msra.mxu0 0
        %3078 = vmatprep.subr.bf16.mxu0 0
        %3079 = vmatpush1.bf16.msra.mxu0 0
        %3080 = vmatprep.subr.bf16.mxu0 0
        %3081 = vmatpush1.bf16.msra.mxu0 0
        %3082 = vmatprep.subr.bf16.mxu0 0
        %3083 = vmatpush1.bf16.msra.mxu0 0
        %3084 = vmatprep.subr.bf16.mxu0 0
        %3085 = vmatpush1.bf16.msra.mxu0 0
        %3086 = vmatprep.subr.bf16.mxu0 0
        %3087 = vmatpush1.bf16.msra.mxu0 0
        %3088 = vmatprep.subr.bf16.mxu0 0
        %3089 = vmatpush1.bf16.msra.mxu0 0
        %3090 = vmatprep.subr.bf16.mxu0 0
        %3091 = vmatpush1.bf16.msra.mxu0 0
        %3092 = vmatprep.subr.bf16.mxu0 0
        %3093 = vmatpush1.bf16.msra.mxu0 0
        %3094 = vmatprep.mubr.bf16.mxu0 0
        %3095 = vmatmul.mubr.bf16.gmra.mrb[0].mxu0 %v3051
        %v3096 = vpop.f32.mrb[0].mxu0
        %v3097 = vadd.f32 0.0, %v3096
        %v3098 = vpop.f32.mrb[0].mxu0
        %v3099 = vpop.f32.mrb[0].mxu0
        %v3100 = vadd.f32 0.0, %v3099
        %v3101 = vpop.f32.mrb[0].mxu0
        %3102 = vmatprep.mubr.bf16.mxu0 0
        %3103 = vmatmul.mubr.bf16.gmra.mrb[0].mxu0 %v3054
        %v3104 = vpop.f32.mrb[0].mxu0
        %v3105 = vadd.f32 0.0, %v3104
        %v3106 = vpop.f32.mrb[0].mxu0
        %v3107 = vpop.f32.mrb[0].mxu0
        %v3108 = vadd.f32 0.0, %v3107
        %v3109 = vpop.f32.mrb[0].mxu0
        %3110 = vmatprep.mubr.bf16.mxu0 0
        %3111 = vmatmul.mubr.bf16.gmra.mrb[0].mxu0 %v3057
        %v3112 = vpop.f32.mrb[0].mxu0
        %v3113 = vadd.f32 0.0, %v3112
        %v3114 = vpop.f32.mrb[0].mxu0
        %v3115 = vpop.f32.mrb[0].mxu0
        %v3116 = vadd.f32 0.0, %v3115
        %v3117 = vpop.f32.mrb[0].mxu0
        %3118 = vmatprep.mubr.bf16.mxu0 0
        %3119 = vmatmul.mubr.bf16.gmra.mrb[0].mxu0 %v3060
        %v3120 = vpop.f32.mrb[0].mxu0
        %v3121 = vadd.f32 0.0, %v3120
        %v3122 = vpop.f32.mrb[0].mxu0
        %v3123 = vpop.f32.mrb[0].mxu0
        %v3124 = vadd.f32 0.0, %v3123
        %v3125 = vpop.f32.mrb[0].mxu0
        %3126 = vdwg.mxu0
        %v3127 = vrcp.pop %v2645
        %v3128 = vrcp.pop %v2648
        %v3129 = vrcp.pop %v2651
        %v3130 = vrcp.pop %v2654
        %v3131 = vrcp.pop %v2657
        %v3132 = vrcp.pop %v2660
        %v3133 = vrcp.pop %v2663
        %v3134 = vrcp.pop %v2666
        %v3135 = vrcp.pop %v2669
        %v3136 = vrcp.pop %v2672
        %v3137 = vrcp.pop %v2675
        %v3138 = vrcp.pop %v2678
        %v3139 = vrcp.pop %v2681
        %v3140 = vrcp.pop %v2684
        %v3141 = vrcp.pop %v2687
        %v3142 = vrcp.pop %v2690
        %v3143 = vrcp.pop %v2693
        %v3144 = vrcp.pop %v2696
        %v3145 = vrcp.pop %v2699
        %v3146 = vrcp.pop %v2702
        %v3147 = vrcp.pop %v2705
        %v3148 = vrcp.pop %v2708
        %v3149 = vrcp.pop %v2711
        %v3150 = vrcp.pop %v2714
        %v3151 = vrcp.pop %v2717
        %v3152 = vrcp.pop %v2720
        %v3153 = vrcp.pop %v2723
        %v3154 = vrcp.pop %v2726
        %v3155 = vrcp.pop %v2729
        %v3156 = vrcp.pop %v2732
        %v3157 = vrcp.pop %v2735
        %v3158 = vrcp.pop %v2738
        %v3159 = vmul.f32 %v2818, %v3127
        %v3160 = vmul.f32 %v2821, %v3128
        %v3161 = vmul.f32 %v2826, %v3129
        %v3162 = vmul.f32 %v2829, %v3130
        %v3163 = vmul.f32 %v2834, %v3131
        %v3164 = vmul.f32 %v2837, %v3132
        %v3165 = vmul.f32 %v2842, %v3133
        %v3166 = vmul.f32 %v2845, %v3134
        %v3167 = vmul.f32 %v2911, %v3135
        %v3168 = vmul.f32 %v2914, %v3136
        %v3169 = vmul.f32 %v2919, %v3137
        %v3170 = vmul.f32 %v2922, %v3138
        %v3171 = vmul.f32 %v2927, %v3139
        %v3172 = vmul.f32 %v2930, %v3140
        %v3173 = vmul.f32 %v2935, %v3141
        %v3174 = vmul.f32 %v2938, %v3142
        %v3175 = vmul.f32 %v3004, %v3143
        %v3176 = vmul.f32 %v3007, %v3144
        %v3177 = vmul.f32 %v3012, %v3145
        %v3178 = vmul.f32 %v3015, %v3146
        %v3179 = vmul.f32 %v3020, %v3147
        %v3180 = vmul.f32 %v3023, %v3148
        %v3181 = vmul.f32 %v3028, %v3149
        %v3182 = vmul.f32 %v3031, %v3150
        %v3183 = vmul.f32 %v3097, %v3151
        %v3184 = vmul.f32 %v3100, %v3152
        %v3185 = vmul.f32 %v3105, %v3153
        %v3186 = vmul.f32 %v3108, %v3154
        %v3187 = vmul.f32 %v3113, %v3155
        %v3188 = vmul.f32 %v3116, %v3156
        %v3189 = vmul.f32 %v3121, %v3157
        %v3190 = vmul.f32 %v3124, %v3158
        %3223 = vrot.lane.b32.xlu0 %v3159, 32
        %v3224 = vpop.permute.xlu0 %3223
        %3225 = vrot.lane.b32.xlu0 %v3160, 32
        %v3226 = vpop.permute.xlu0 %3225
        %3227 = vrot.lane.b32.xlu0 %v3161, 32
        %v3228 = vpop.permute.xlu0 %3227
        %3229 = vrot.lane.b32.xlu0 %v3162, 32
        %v3230 = vpop.permute.xlu0 %3229
        %3231 = vrot.lane.b32.xlu0 %v3163, 32
        %v3232 = vpop.permute.xlu0 %3231
        %3233 = vrot.lane.b32.xlu0 %v3164, 32
        %v3234 = vpop.permute.xlu0 %3233
        %3235 = vrot.lane.b32.xlu0 %v3165, 32
        %v3236 = vpop.permute.xlu0 %3235
        %3237 = vrot.lane.b32.xlu0 %v3166, 32
        %v3238 = vpop.permute.xlu0 %3237
        %3239 = vrot.lane.b32.xlu0 %v3167, 32
        %v3240 = vpop.permute.xlu0 %3239
        %3241 = vrot.lane.b32.xlu0 %v3168, 32
        %v3242 = vpop.permute.xlu0 %3241
        %3243 = vrot.lane.b32.xlu0 %v3169, 32
        %v3244 = vpop.permute.xlu0 %3243
        %3245 = vrot.lane.b32.xlu0 %v3170, 32
        %v3246 = vpop.permute.xlu0 %3245
        %3247 = vrot.lane.b32.xlu0 %v3171, 32
        %v3248 = vpop.permute.xlu0 %3247
        %3249 = vrot.lane.b32.xlu0 %v3172, 32
        %v3250 = vpop.permute.xlu0 %3249
        %3251 = vrot.lane.b32.xlu0 %v3173, 32
        %v3252 = vpop.permute.xlu0 %3251
        %3253 = vrot.lane.b32.xlu0 %v3174, 32
        %v3254 = vpop.permute.xlu0 %3253
        %3255 = vrot.lane.b32.xlu0 %v3175, 32
        %v3256 = vpop.permute.xlu0 %3255
        %3257 = vrot.lane.b32.xlu0 %v3176, 32
        %v3258 = vpop.permute.xlu0 %3257
        %3259 = vrot.lane.b32.xlu0 %v3177, 32
        %v3260 = vpop.permute.xlu0 %3259
        %3261 = vrot.lane.b32.xlu0 %v3178, 32
        %v3262 = vpop.permute.xlu0 %3261
        %3263 = vrot.lane.b32.xlu0 %v3179, 32
        %v3264 = vpop.permute.xlu0 %3263
        %3265 = vrot.lane.b32.xlu0 %v3180, 32
        %v3266 = vpop.permute.xlu0 %3265
        %3267 = vrot.lane.b32.xlu0 %v3181, 32
        %v3268 = vpop.permute.xlu0 %3267
        %3269 = vrot.lane.b32.xlu0 %v3182, 32
        %v3270 = vpop.permute.xlu0 %3269
        %3271 = vrot.lane.b32.xlu0 %v3183, 32
        %v3272 = vpop.permute.xlu0 %3271
        %3273 = vrot.lane.b32.xlu0 %v3184, 32
        %v3274 = vpop.permute.xlu0 %3273
        %3275 = vrot.lane.b32.xlu0 %v3185, 32
        %v3276 = vpop.permute.xlu0 %3275
        %3277 = vrot.lane.b32.xlu0 %v3186, 32
        %v3278 = vpop.permute.xlu0 %3277
        %3279 = vrot.lane.b32.xlu0 %v3187, 32
        %v3280 = vpop.permute.xlu0 %3279
        %3281 = vrot.lane.b32.xlu0 %v3188, 32
        %v3282 = vpop.permute.xlu0 %3281
        %3283 = vrot.lane.b32.xlu0 %v3189, 32
        %v3284 = vpop.permute.xlu0 %3283
        %3285 = vrot.lane.b32.xlu0 %v3190, 32
        %v3286 = vpop.permute.xlu0 %3285
        %vm3319 = vcmask 523520
        %3320 = vst.msk [vmem:[#allocation2] sm:$0xff] %vm3319, %v3224
        %3321 = vst.msk [vmem:[#allocation2 + $0x8] sm:$0xff] %vm3319, %v3226
        %3322 = vst.msk [vmem:[#allocation2 + $0x10] sm:$0xff] %vm3319, %v3228
        %3323 = vst.msk [vmem:[#allocation2 + $0x18] sm:$0xff] %vm3319, %v3230
        %3324 = vst.msk [vmem:[#allocation2 + $0x20] sm:$0xff] %vm3319, %v3232
        %3325 = vst.msk [vmem:[#allocation2 + $0x28] sm:$0xff] %vm3319, %v3234
        %3326 = vst.msk [vmem:[#allocation2 + $0x30] sm:$0xff] %vm3319, %v3236
        %3327 = vst.msk [vmem:[#allocation2 + $0x38] sm:$0xff] %vm3319, %v3238
        %3328 = vst.msk [vmem:[#allocation2 + $0x40] sm:$0xff] %vm3319, %v3240
        %3329 = vst.msk [vmem:[#allocation2 + $0x48] sm:$0xff] %vm3319, %v3242
        %3330 = vst.msk [vmem:[#allocation2 + $0x50] sm:$0xff] %vm3319, %v3244
        %3331 = vst.msk [vmem:[#allocation2 + $0x58] sm:$0xff] %vm3319, %v3246
        %3332 = vst.msk [vmem:[#allocation2 + $0x60] sm:$0xff] %vm3319, %v3248
        %3333 = vst.msk [vmem:[#allocation2 + $0x68] sm:$0xff] %vm3319, %v3250
        %3334 = vst.msk [vmem:[#allocation2 + $0x70] sm:$0xff] %vm3319, %v3252
        %3335 = vst.msk [vmem:[#allocation2 + $0x78] sm:$0xff] %vm3319, %v3254
        %3336 = vst.msk [vmem:[#allocation2 + $0x80] sm:$0xff] %vm3319, %v3256
        %3337 = vst.msk [vmem:[#allocation2 + $0x88] sm:$0xff] %vm3319, %v3258
        %3338 = vst.msk [vmem:[#allocation2 + $0x90] sm:$0xff] %vm3319, %v3260
        %3339 = vst.msk [vmem:[#allocation2 + $0x98] sm:$0xff] %vm3319, %v3262
        %3340 = vst.msk [vmem:[#allocation2 + $0xa0] sm:$0xff] %vm3319, %v3264
        %3341 = vst.msk [vmem:[#allocation2 + $0xa8] sm:$0xff] %vm3319, %v3266
        %3342 = vst.msk [vmem:[#allocation2 + $0xb0] sm:$0xff] %vm3319, %v3268
        %3343 = vst.msk [vmem:[#allocation2 + $0xb8] sm:$0xff] %vm3319, %v3270
        %3344 = vst.msk [vmem:[#allocation2 + $0xc0] sm:$0xff] %vm3319, %v3272
        %3345 = vst.msk [vmem:[#allocation2 + $0xc8] sm:$0xff] %vm3319, %v3274
        %3346 = vst.msk [vmem:[#allocation2 + $0xd0] sm:$0xff] %vm3319, %v3276
        %3347 = vst.msk [vmem:[#allocation2 + $0xd8] sm:$0xff] %vm3319, %v3278
        %3348 = vst.msk [vmem:[#allocation2 + $0xe0] sm:$0xff] %vm3319, %v3280
        %3349 = vst.msk [vmem:[#allocation2 + $0xe8] sm:$0xff] %vm3319, %v3282
        %3350 = vst.msk [vmem:[#allocation2 + $0xf0] sm:$0xff] %vm3319, %v3284
        %3351 = vst.msk [vmem:[#allocation2 + $0xf8] sm:$0xff] %vm3319, %v3286
        %v3352 = vld [vmem:[#allocation2] sm:$0xff]
        %v3353 = vld [vmem:[#allocation2 + $0x8] sm:$0xff]
        %v3354 = vld [vmem:[#allocation2 + $0x10] sm:$0xff]
        %v3355 = vld [vmem:[#allocation2 + $0x18] sm:$0xff]
        %v3356 = vld [vmem:[#allocation2 + $0x20] sm:$0xff]
        %v3357 = vld [vmem:[#allocation2 + $0x28] sm:$0xff]
        %v3358 = vld [vmem:[#allocation2 + $0x30] sm:$0xff]
        %v3359 = vld [vmem:[#allocation2 + $0x38] sm:$0xff]
        %v3360 = vld [vmem:[#allocation2 + $0x40] sm:$0xff]
        %v3361 = vld [vmem:[#allocation2 + $0x48] sm:$0xff]
        %v3362 = vld [vmem:[#allocation2 + $0x50] sm:$0xff]
        %v3363 = vld [vmem:[#allocation2 + $0x58] sm:$0xff]
        %v3364 = vld [vmem:[#allocation2 + $0x60] sm:$0xff]
        %v3365 = vld [vmem:[#allocation2 + $0x68] sm:$0xff]
        %v3366 = vld [vmem:[#allocation2 + $0x70] sm:$0xff]
        %v3367 = vld [vmem:[#allocation2 + $0x78] sm:$0xff]
        %v3368 = vld [vmem:[#allocation2 + $0x80] sm:$0xff]
        %v3369 = vld [vmem:[#allocation2 + $0x88] sm:$0xff]
        %v3370 = vld [vmem:[#allocation2 + $0x90] sm:$0xff]
        %v3371 = vld [vmem:[#allocation2 + $0x98] sm:$0xff]
        %v3372 = vld [vmem:[#allocation2 + $0xa0] sm:$0xff]
        %v3373 = vld [vmem:[#allocation2 + $0xa8] sm:$0xff]
        %v3374 = vld [vmem:[#allocation2 + $0xb0] sm:$0xff]
        %v3375 = vld [vmem:[#allocation2 + $0xb8] sm:$0xff]
        %v3376 = vld [vmem:[#allocation2 + $0xc0] sm:$0xff]
        %v3377 = vld [vmem:[#allocation2 + $0xc8] sm:$0xff]
        %v3378 = vld [vmem:[#allocation2 + $0xd0] sm:$0xff]
        %v3379 = vld [vmem:[#allocation2 + $0xd8] sm:$0xff]
        %v3380 = vld [vmem:[#allocation2 + $0xe0] sm:$0xff]
        %v3381 = vld [vmem:[#allocation2 + $0xe8] sm:$0xff]
        %v3382 = vld [vmem:[#allocation2 + $0xf0] sm:$0xff]
        %v3383 = vld [vmem:[#allocation2 + $0xf8] sm:$0xff]
        %v3384 = vpack.c.bf16 %v3353, %v3352
        %v3385 = vpack.c.bf16 %v3355, %v3354
        %v3386 = vpack.c.bf16 %v3357, %v3356
        %v3387 = vpack.c.bf16 %v3359, %v3358
        %v3388 = vpack.c.bf16 %v3361, %v3360
        %v3389 = vpack.c.bf16 %v3363, %v3362
        %v3390 = vpack.c.bf16 %v3365, %v3364
        %v3391 = vpack.c.bf16 %v3367, %v3366
        %v3392 = vpack.c.bf16 %v3369, %v3368
        %v3393 = vpack.c.bf16 %v3371, %v3370
        %v3394 = vpack.c.bf16 %v3373, %v3372
        %v3395 = vpack.c.bf16 %v3375, %v3374
        %v3396 = vpack.c.bf16 %v3377, %v3376
        %v3397 = vpack.c.bf16 %v3379, %v3378
        %v3398 = vpack.c.bf16 %v3381, %v3380
        %v3399 = vpack.c.bf16 %v3383, %v3382
        %v3400 = vld [vmem:[#allocation8] sm:$0xf]
        %v3401 = vld [vmem:[#allocation8 + $0x4] sm:$0xf]
        %v3402 = vld [vmem:[#allocation8 + $0x8] sm:$0xf]
        %v3403 = vld [vmem:[#allocation8 + $0xc] sm:$0xf]
        %v3404 = vld [vmem:[#allocation8 + $0x10] sm:$0xf]
        %v3405 = vld [vmem:[#allocation8 + $0x14] sm:$0xf]
        %v3406 = vld [vmem:[#allocation8 + $0x18] sm:$0xf]
        %v3407 = vld [vmem:[#allocation8 + $0x1c] sm:$0xf]
        %v3408 = vld [vmem:[%s4] sm:$0x1]
        %v3410 = vlaneseq
        %v3411 = vshrl.u32 %v3410, 7
        %v3412 = vsub.s32 0, %v3411
        %v3413 = vrot.slane %v3408, %v3412
        %v3423 = vunpack.c.l.b16 %v3400
        %v3424 = vunpack.c.l.b16 %v3401
        %v3425 = vunpack.c.l.b16 %v3402
        %v3426 = vunpack.c.l.b16 %v3403
        %v3427 = vunpack.c.l.b16 %v3404
        %v3428 = vunpack.c.l.b16 %v3405
        %v3429 = vunpack.c.l.b16 %v3406
        %v3430 = vunpack.c.l.b16 %v3407
        %v3431 = vpack.c.b16 %v3424, %v3423
        %v3432 = vpack.c.b16 %v3426, %v3425
        %v3433 = vpack.c.b16 %v3428, %v3427
        %v3434 = vpack.c.b16 %v3430, %v3429
        %v3440 = vsel %vm467, %v3384, 0
        %v3443 = vsel %vm467, %v3385, 0
        %v3446 = vsel %vm467, %v3386, 0
        %v3449 = vsel %vm467, %v3387, 0
        %v3452 = vsel %vm467, %v3388, 0
        %v3455 = vsel %vm467, %v3389, 0
        %v3458 = vsel %vm467, %v3390, 0
        %v3461 = vsel %vm467, %v3391, 0
        %v3464 = vsel %vm467, %v3392, 0
        %v3467 = vsel %vm467, %v3393, 0
        %v3470 = vsel %vm467, %v3394, 0
        %v3473 = vsel %vm467, %v3395, 0
        %v3476 = vsel %vm467, %v3396, 0
        %v3479 = vsel %vm467, %v3397, 0
        %v3482 = vsel %vm467, %v3398, 0
        %v3485 = vsel %vm467, %v3399, 0
        %3487 = vmatprep.subr.bf16.mxu0 0
        %3488 = vmatpush1.bf16.msra.mxu0 %v3431
        %3489 = vmatprep.subr.bf16.mxu0 0
        %3490 = vmatpush1.bf16.msra.mxu0 %v3432
        %3491 = vmatprep.subr.bf16.mxu0 0
        %3492 = vmatpush1.bf16.msra.mxu0 %v3433
        %3493 = vmatprep.subr.bf16.mxu0 0
        %3494 = vmatpush1.bf16.msra.mxu0 %v3434
        %3495 = vmatprep.subr.bf16.mxu0 0
        %3496 = vmatpush1.bf16.msra.mxu0 0
        %3497 = vmatprep.subr.bf16.mxu0 0
        %3498 = vmatpush1.bf16.msra.mxu0 0
        %3499 = vmatprep.subr.bf16.mxu0 0
        %3500 = vmatpush1.bf16.msra.mxu0 0
        %3501 = vmatprep.subr.bf16.mxu0 0
        %3502 = vmatpush1.bf16.msra.mxu0 0
        %3503 = vmatprep.subr.bf16.mxu0 0
        %3504 = vmatpush1.bf16.msra.mxu0 0
        %3505 = vmatprep.subr.bf16.mxu0 0
        %3506 = vmatpush1.bf16.msra.mxu0 0
        %3507 = vmatprep.subr.bf16.mxu0 0
        %3508 = vmatpush1.bf16.msra.mxu0 0
        %3509 = vmatprep.subr.bf16.mxu0 0
        %3510 = vmatpush1.bf16.msra.mxu0 0
        %3511 = vmatprep.subr.bf16.mxu0 0
        %3512 = vmatpush1.bf16.msra.mxu0 0
        %3513 = vmatprep.subr.bf16.mxu0 0
        %3514 = vmatpush1.bf16.msra.mxu0 0
        %3515 = vmatprep.subr.bf16.mxu0 0
        %3516 = vmatpush1.bf16.msra.mxu0 0
        %3517 = vmatprep.subr.bf16.mxu0 0
        %3518 = vmatpush1.bf16.msra.mxu0 0
        %3519 = vmatprep.mubr.bf16.mxu0 0
        %3520 = vmatmul.mubr.bf16.gmra.mrb[0].mxu0 %v3440
        %v3521 = vpop.f32.mrb[0].mxu0
        %v3522 = vadd.f32 %v3413, %v3521
        %v3523 = vpop.f32.mrb[0].mxu0
        %v3524 = vpop.f32.mrb[0].mxu0
        %v3525 = vadd.f32 %v3413, %v3524
        %v3526 = vpop.f32.mrb[0].mxu0
        %3527 = vmatprep.mubr.bf16.mxu0 0
        %3528 = vmatmul.mubr.bf16.gmra.mrb[0].mxu0 %v3443
        %v3529 = vpop.f32.mrb[0].mxu0
        %v3530 = vadd.f32 %v3413, %v3529
        %v3531 = vpop.f32.mrb[0].mxu0
        %v3532 = vpop.f32.mrb[0].mxu0
        %v3533 = vadd.f32 %v3413, %v3532
        %v3534 = vpop.f32.mrb[0].mxu0
        %3535 = vmatprep.mubr.bf16.mxu0 0
        %3536 = vmatmul.mubr.bf16.gmra.mrb[0].mxu0 %v3446
        %v3537 = vpop.f32.mrb[0].mxu0
        %v3538 = vadd.f32 %v3413, %v3537
        %v3539 = vpop.f32.mrb[0].mxu0
        %v3540 = vpop.f32.mrb[0].mxu0
        %v3541 = vadd.f32 %v3413, %v3540
        %v3542 = vpop.f32.mrb[0].mxu0
        %3543 = vmatprep.mubr.bf16.mxu0 0
        %3544 = vmatmul.mubr.bf16.gmra.mrb[0].mxu0 %v3449
        %v3545 = vpop.f32.mrb[0].mxu0
        %v3546 = vadd.f32 %v3413, %v3545
        %v3547 = vpop.f32.mrb[0].mxu0
        %v3548 = vpop.f32.mrb[0].mxu0
        %v3549 = vadd.f32 %v3413, %v3548
        %v3550 = vpop.f32.mrb[0].mxu0
        %3551 = vmatprep.mubr.bf16.mxu0 0
        %3552 = vmatmul.mubr.bf16.gmra.mrb[0].mxu0 %v3452
        %v3553 = vpop.f32.mrb[0].mxu0
        %v3554 = vadd.f32 %v3413, %v3553
        %v3555 = vpop.f32.mrb[0].mxu0
        %v3556 = vpop.f32.mrb[0].mxu0
        %v3557 = vadd.f32 %v3413, %v3556
        %v3558 = vpop.f32.mrb[0].mxu0
        %3559 = vmatprep.mubr.bf16.mxu0 0
        %3560 = vmatmul.mubr.bf16.gmra.mrb[0].mxu0 %v3455
        %v3561 = vpop.f32.mrb[0].mxu0
        %v3562 = vadd.f32 %v3413, %v3561
        %v3563 = vpop.f32.mrb[0].mxu0
        %v3564 = vpop.f32.mrb[0].mxu0
        %v3565 = vadd.f32 %v3413, %v3564
        %v3566 = vpop.f32.mrb[0].mxu0
        %3567 = vmatprep.mubr.bf16.mxu0 0
        %3568 = vmatmul.mubr.bf16.gmra.mrb[0].mxu0 %v3458
        %v3569 = vpop.f32.mrb[0].mxu0
        %v3570 = vadd.f32 %v3413, %v3569
        %v3571 = vpop.f32.mrb[0].mxu0
        %v3572 = vpop.f32.mrb[0].mxu0
        %v3573 = vadd.f32 %v3413, %v3572
        %v3574 = vpop.f32.mrb[0].mxu0
        %3575 = vmatprep.mubr.bf16.mxu0 0
        %3576 = vmatmul.mubr.bf16.gmra.mrb[0].mxu0 %v3461
        %v3577 = vpop.f32.mrb[0].mxu0
        %v3578 = vadd.f32 %v3413, %v3577
        %v3579 = vpop.f32.mrb[0].mxu0
        %v3580 = vpop.f32.mrb[0].mxu0
        %v3581 = vadd.f32 %v3413, %v3580
        %v3582 = vpop.f32.mrb[0].mxu0
        %3583 = vmatprep.mubr.bf16.mxu0 0
        %3584 = vmatmul.mubr.bf16.gmra.mrb[0].mxu0 %v3464
        %v3585 = vpop.f32.mrb[0].mxu0
        %v3586 = vadd.f32 %v3413, %v3585
        %v3587 = vpop.f32.mrb[0].mxu0
        %v3588 = vpop.f32.mrb[0].mxu0
        %v3589 = vadd.f32 %v3413, %v3588
        %v3590 = vpop.f32.mrb[0].mxu0
        %3591 = vmatprep.mubr.bf16.mxu0 0
        %3592 = vmatmul.mubr.bf16.gmra.mrb[0].mxu0 %v3467
        %v3593 = vpop.f32.mrb[0].mxu0
        %v3594 = vadd.f32 %v3413, %v3593
        %v3595 = vpop.f32.mrb[0].mxu0
        %v3596 = vpop.f32.mrb[0].mxu0
        %v3597 = vadd.f32 %v3413, %v3596
        %v3598 = vpop.f32.mrb[0].mxu0
        %3599 = vmatprep.mubr.bf16.mxu0 0
        %3600 = vmatmul.mubr.bf16.gmra.mrb[0].mxu0 %v3470
        %v3601 = vpop.f32.mrb[0].mxu0
        %v3602 = vadd.f32 %v3413, %v3601
        %v3603 = vpop.f32.mrb[0].mxu0
        %v3604 = vpop.f32.mrb[0].mxu0
        %v3605 = vadd.f32 %v3413, %v3604
        %v3606 = vpop.f32.mrb[0].mxu0
        %3607 = vmatprep.mubr.bf16.mxu0 0
        %3608 = vmatmul.mubr.bf16.gmra.mrb[0].mxu0 %v3473
        %v3609 = vpop.f32.mrb[0].mxu0
        %v3610 = vadd.f32 %v3413, %v3609
        %v3611 = vpop.f32.mrb[0].mxu0
        %v3612 = vpop.f32.mrb[0].mxu0
        %v3613 = vadd.f32 %v3413, %v3612
        %v3614 = vpop.f32.mrb[0].mxu0
        %3615 = vmatprep.mubr.bf16.mxu0 0
        %3616 = vmatmul.mubr.bf16.gmra.mrb[0].mxu0 %v3476
        %v3617 = vpop.f32.mrb[0].mxu0
        %v3618 = vadd.f32 %v3413, %v3617
        %v3619 = vpop.f32.mrb[0].mxu0
        %v3620 = vpop.f32.mrb[0].mxu0
        %v3621 = vadd.f32 %v3413, %v3620
        %v3622 = vpop.f32.mrb[0].mxu0
        %3623 = vmatprep.mubr.bf16.mxu0 0
        %3624 = vmatmul.mubr.bf16.gmra.mrb[0].mxu0 %v3479
        %v3625 = vpop.f32.mrb[0].mxu0
        %v3626 = vadd.f32 %v3413, %v3625
        %v3627 = vpop.f32.mrb[0].mxu0
        %v3628 = vpop.f32.mrb[0].mxu0
        %v3629 = vadd.f32 %v3413, %v3628
        %v3630 = vpop.f32.mrb[0].mxu0
        %3631 = vmatprep.mubr.bf16.mxu0 0
        %3632 = vmatmul.mubr.bf16.gmra.mrb[0].mxu0 %v3482
        %v3633 = vpop.f32.mrb[0].mxu0
        %v3634 = vadd.f32 %v3413, %v3633
        %v3635 = vpop.f32.mrb[0].mxu0
        %v3636 = vpop.f32.mrb[0].mxu0
        %v3637 = vadd.f32 %v3413, %v3636
        %v3638 = vpop.f32.mrb[0].mxu0
        %3639 = vmatprep.mubr.bf16.mxu0 0
        %3640 = vmatmul.mubr.bf16.gmra.mrb[0].mxu0 %v3485
        %v3641 = vpop.f32.mrb[0].mxu0
        %v3642 = vadd.f32 %v3413, %v3641
        %v3643 = vpop.f32.mrb[0].mxu0
        %v3644 = vpop.f32.mrb[0].mxu0
        %v3645 = vadd.f32 %v3413, %v3644
        %v3646 = vpop.f32.mrb[0].mxu0
        %3647 = vdwg.mxu0
        %3648 = vst.msk [vmem:[%s355] sm:$0xff] %vm467, %v3522
        %3649 = vst.msk [vmem:[%s355 + $0x8] sm:$0xff] %vm467, %v3525
        %3650 = vst.msk [vmem:[%s355 + $0x10] sm:$0xff] %vm467, %v3530
        %3651 = vst.msk [vmem:[%s355 + $0x18] sm:$0xff] %vm467, %v3533
        %3652 = vst.msk [vmem:[%s355 + $0x20] sm:$0xff] %vm467, %v3538
        %3653 = vst.msk [vmem:[%s355 + $0x28] sm:$0xff] %vm467, %v3541
        %3654 = vst.msk [vmem:[%s355 + $0x30] sm:$0xff] %vm467, %v3546
        %3655 = vst.msk [vmem:[%s355 + $0x38] sm:$0xff] %vm467, %v3549
        %3656 = vst.msk [vmem:[%s355 + $0x40] sm:$0xff] %vm467, %v3554
        %3657 = vst.msk [vmem:[%s355 + $0x48] sm:$0xff] %vm467, %v3557
        %3658 = vst.msk [vmem:[%s355 + $0x50] sm:$0xff] %vm467, %v3562
        %3659 = vst.msk [vmem:[%s355 + $0x58] sm:$0xff] %vm467, %v3565
        %3660 = vst.msk [vmem:[%s355 + $0x60] sm:$0xff] %vm467, %v3570
        %3661 = vst.msk [vmem:[%s355 + $0x68] sm:$0xff] %vm467, %v3573
        %3662 = vst.msk [vmem:[%s355 + $0x70] sm:$0xff] %vm467, %v3578
        %3663 = vst.msk [vmem:[%s355 + $0x78] sm:$0xff] %vm467, %v3581
        %3664 = vst.msk [vmem:[%s355 + $0x80] sm:$0xff] %vm467, %v3586
        %3665 = vst.msk [vmem:[%s355 + $0x88] sm:$0xff] %vm467, %v3589
        %3666 = vst.msk [vmem:[%s355 + $0x90] sm:$0xff] %vm467, %v3594
        %3667 = vst.msk [vmem:[%s355 + $0x98] sm:$0xff] %vm467, %v3597
        %3668 = vst.msk [vmem:[%s355 + $0xa0] sm:$0xff] %vm467, %v3602
        %3669 = vst.msk [vmem:[%s355 + $0xa8] sm:$0xff] %vm467, %v3605
        %3670 = vst.msk [vmem:[%s355 + $0xb0] sm:$0xff] %vm467, %v3610
        %3671 = vst.msk [vmem:[%s355 + $0xb8] sm:$0xff] %vm467, %v3613
        %3672 = vst.msk [vmem:[%s355 + $0xc0] sm:$0xff] %vm467, %v3618
        %3673 = vst.msk [vmem:[%s355 + $0xc8] sm:$0xff] %vm467, %v3621
        %3674 = vst.msk [vmem:[%s355 + $0xd0] sm:$0xff] %vm467, %v3626
        %3675 = vst.msk [vmem:[%s355 + $0xd8] sm:$0xff] %vm467, %v3629
        %3676 = vst.msk [vmem:[%s355 + $0xe0] sm:$0xff] %vm467, %v3634
        %3677 = vst.msk [vmem:[%s355 + $0xe8] sm:$0xff] %vm467, %v3637
        %3678 = vst.msk [vmem:[%s355 + $0xf0] sm:$0xff] %vm467, %v3642
        %3679 = vst.msk [vmem:[%s355 + $0xf8] sm:$0xff] %vm467, %v3645
        %s3680 = sand.u32 %s186, 1
        %s3681 = scalar_lea.sflag [#allocation5], %s3680
        %s3682 = sand.u32 %s186, 1
        %s3683 = smul.addr %s3682, 256
        %s3684 = scalar_lea.vmem [#allocation12], %s3683
        // Predicated region
        $region69: #{tpu_custom_call.1} parent=47 // pred_check
          %p3685 = pneg %p196
        $region70: #{tpu_custom_call.1} parent=47 // pred_check_branch
          %3687 = sbr.rel (%p3685) target = $region72
        $region71: #{tpu_custom_call.1} parent=47 // pred_region
          %s3688 = smul.u32 4, %s26
          %s3690 = ssub.s32 4096, 4096
          %3691 = vsyncadd %s3681, %s3690
          %s3692 = smul.addr %s3688, 8
          %s3693 = smul.addr %s3692, 128
          %s3694 = scalar_lea.hbm %s7, %s3693
          %s3695 = sshll.u32 %s3684, 4
          %s3696 = int_to_ptr.vmem [resolvable:$true] %s3695
          %3701 = dma.vmem_to_hbm [thread:$0]  %s3696, 4096, %s3694, %s3681, 128, 128, 8
        $region72: #{tpu_custom_call.1} parent=47 // pred_fallthru
          _
      $region48: #{tpu_custom_call.1} parent=5 // pred_fallthru
        _
      %p3702 = scmp.le.s32.totalorder 2, %s21
      // Predicated region
      $region73: #{tpu_custom_call.1} parent=5 // pred_check
        %p3703 = pneg %p3702
      $region74: #{tpu_custom_call.1} parent=5 // pred_check_branch
        %3705 = sbr.rel (%p3703) target = $region76
      $region75: #{tpu_custom_call.1} parent=5 // pred_region
        %s3706 = ssub.s32 %s21, 2
        // Predicated region
        $region77: #{tpu_custom_call.1} parent=75 // pred_check
          %p3707 = pneg %p202
        $region78: #{tpu_custom_call.1} parent=75 // pred_check_branch
          %3709 = sbr.rel (%p3707) target = $region80
        $region79: #{tpu_custom_call.1} parent=75 // pred_region
          %s3710 = sand.u32 %s187, 1
          %s3711 = scalar_lea.sflag [#allocation5], %s3710
          %s3712 = sand.u32 %s187, 1
          %s3713 = smul.addr %s3712, 256
          %s3714 = scalar_lea.vmem [#allocation12], %s3713
          %3715 = dma.done %s3711, 4096
        $region80: #{tpu_custom_call.1} parent=75 // pred_fallthru
          _
      $region76: #{tpu_custom_call.1} parent=5 // pred_fallthru
        _
    $region6: #{tpu_custom_call.1} parent=1 // loop_footer
      %s25 = sadd.s32 1, %s21
    $region7: #{tpu_custom_call.1} parent=1 // loop_footer_branch
      %20 = sbr.rel target = $region3
    $region8: #{tpu_custom_call.1} parent=1 // loop_exit
      _
    %3716 = vsyncpa [#allocation4], 1
    %s3717 = scalar_lea.sflag [#allocation4], 1
    %3718 = vsyncpa %s3717, 1
    %3719 = vsyncpa [#allocation7], 1
    %3720 = vsyncpa [#allocation10], 1
    %3721 = vsyncpa [#allocation5], 1
    %s3722 = scalar_lea.sflag [#allocation5], 1
    %3723 = vsyncpa %s3722, 1

</llo_original>
